<compile_context>
chip_gen: v7x
topology: tpu7x:2x2x1
jax: 0.10.0
libtpu: 0.0.40
codegen_flags: <defaults>
</compile_context>

<pallas_src>
import math

import numpy as np

import jax
import jax.numpy as jnp
from jax.experimental import pallas as pl
from jax.experimental.pallas import tpu as pltpu


def _round_up(x: int, m: int) -> int:
    return ((x + m - 1) // m) * m


def _make_kernel(cutoff_lower: float, cutoff_upper: float, exp_dtype):
    # Note: the PyTorch module always builds CosineCutoff(0, cutoff_upper),
    # i.e. the cutoff uses the lower==0 branch regardless of cutoff_lower;
    # cutoff_lower only enters through alpha and the exp shift below.
    alpha = cutoff_upper / (cutoff_upper - cutoff_lower)
    omega = math.pi / cutoff_upper

    def kernel(dist_ref, means_ref, betas_ref, out_ref):
        # One body serves both layouts; broadcasting picks the orientation:
        #   channels_last=True : dist (tile, 1), means/betas (1, R), out (tile, R)
        #   channels_last=False: dist (1, tile), means/betas (R, 1), out (R, tile)
        d = dist_ref[...].astype(jnp.float32)

        # CosineCutoff(0, cutoff_upper):
        #   0.5*(cos(pi*d/cutoff_upper)+1) for d < cutoff_upper else 0
        cut = jnp.where(d < cutoff_upper,
                        0.5 * (jnp.cos(d * omega) + 1.0),
                        0.0)

        # Per-edge exponential feature exp(alpha*(-d + cutoff_lower)).
        e = jnp.exp(alpha * (cutoff_lower - d))

        means = means_ref[...].astype(jnp.float32)
        betas = betas_ref[...].astype(jnp.float32)

        diff = e - means                              # broadcast to (R,tile)/(tile,R)
        arg = -betas * diff * diff                    # f32 VPU math
        rbf = jnp.exp(arg.astype(exp_dtype))          # EUP push (bf16 if requested)

        out_ref[...] = (cut * rbf).astype(out_ref.dtype)

    return kernel


def exp_normal_smearing(dist, means, betas, *,
                        cutoff_lower=0.0, cutoff_upper=10.0,
                        tile_n=16384, out_dtype=None,
                        channels_last=True, trim_padding=True,
                        min_grid_steps=1, bf16_exp=None):
    """ExpNormalSmearing forward.

    dist: [N] float; means/betas: [num_rbf] float.

    Returns [N, num_rbf] (channels_last=True, matches the PyTorch module; the
    kernel writes this layout directly — no separate transpose pass) or
    [num_rbf, N] (channels_last=False, fully lane-dense stores, preferred when
    the consumer can take it).

    tile_n:        edge tile (rounded to 128, capped at 32768). 16384 amortizes
                   the ~0.35 us per-grid-step overhead to ~10% while staying
                   inside v5e's 16 MiB default scoped VMEM.
    min_grid_steps: set to 2 on v7x for medium N so both TensorCores get work;
                   the split is never allowed to push the tile below 4096.
                   Leave at 1 on single-TC v5e/v6e.
    trim_padding:  if False, return the tile-padded output (padded rows/cols
                   are exactly zero) and skip the materializing unpad slice.
    out_dtype:     e.g. jnp.bfloat16 to halve HBM writeback (math stays f32).
    bf16_exp:      run the Gaussian exp on the EUP in bf16. Defaults to True
                   iff out_dtype is bf16 (2x EUP throughput on v6e/v7x,
                   bf16-level accuracy; neutral on v5e).
    """
    N = int(dist.shape[0])
    num_rbf = int(means.shape[0])
    out_dtype = np.dtype(dist.dtype if out_dtype is None else out_dtype)
    itemsize = out_dtype.itemsize

    if bf16_exp is None:
        bf16_exp = out_dtype == np.dtype(jnp.bfloat16)
    exp_dtype = jnp.bfloat16 if bf16_exp else jnp.float32

    # ---- tile selection -------------------------------------------------
    tile_cap = _round_up(max(128, min(int(tile_n), 32768)), 128)
    tile = min(tile_cap, _round_up(N, 128))
    if min_grid_steps > 1:
        # Opt-in v7x 2-TC split; never shrink the per-step tile below 4096.
        split = _round_up(pl.cdiv(N, int(min_grid_steps)), 128)
        tile = min(tile, max(split, 4096))
    tile = max(tile, 128)
    n_pad = _round_up(N, tile)

    # Padded distances land past the cutoff so padded outputs are exactly 0
    # (safe to keep when trim_padding=False).
    pad_val = float(cutoff_upper) + 1.0

    # ---- layout-specific specs ------------------------------------------
    if channels_last:
        # Edges on sublanes, rbf channels on lanes -> [N, num_rbf] directly.
        dist2 = dist.reshape(N, 1)
        if n_pad != N:
            dist2 = jnp.pad(dist2, ((0, n_pad - N), (0, 0)),
                            constant_values=pad_val)
        means2 = means.reshape(1, num_rbf)
        betas2 = betas.reshape(1, num_rbf)
        out_shape = (n_pad, num_rbf)
        dist_spec = pl.BlockSpec((tile, 1), lambda i: (i, 0))
        param_spec = pl.BlockSpec((1, num_rbf), lambda i: (0, 0))
        out_spec = pl.BlockSpec((tile, num_rbf), lambda i: (i, 0))
    else:
        # Lane-dense: edges on lanes, unmasked 128-wide stores -> [num_rbf, N].
        dist2 = dist.reshape(1, N)
        if n_pad != N:
            dist2 = jnp.pad(dist2, ((0, 0), (0, n_pad - N)),
                            constant_values=pad_val)
        means2 = means.reshape(num_rbf, 1)
        betas2 = betas.reshape(num_rbf, 1)
        out_shape = (num_rbf, n_pad)
        dist_spec = pl.BlockSpec((1, tile), lambda i: (0, i))
        param_spec = pl.BlockSpec((num_rbf, 1), lambda i: (0, 0))
        out_spec = pl.BlockSpec((num_rbf, tile), lambda i: (0, i))

    # ---- compiler params / VMEM budget ----------------------------------
    out_block_bytes = tile * num_rbf * itemsize
    dist_block_bytes = tile * dist.dtype.itemsize
    working = 2 * out_block_bytes + 2 * dist_block_bytes + 4 * num_rbf * 4
    compiler_kwargs = dict(dimension_semantics=("parallel",))
    if working > 12 * (1 << 20):
        # Only needed for very large tiles (v5e default scoped VMEM is 16 MiB);
        # 64 MiB cap stays inside every generation's physical VMEM (v7x: 64 MiB).
        compiler_kwargs["vmem_limit_bytes"] = int(min(2 * working, 64 << 20))

    cost = pl.CostEstimate(
        flops=5 * N * num_rbf,
        transcendentals=N * (num_rbf + 2),
        bytes_accessed=N * int(dist.dtype.itemsize)
        + n_pad * num_rbf * itemsize
        + 2 * num_rbf * 4,
    )

    kernel = _make_kernel(float(cutoff_lower), float(cutoff_upper), exp_dtype)

    out = pl.pallas_call(
        kernel,
        out_shape=jax.ShapeDtypeStruct(out_shape, out_dtype),
        grid_spec=pltpu.PrefetchScalarGridSpec(
            num_scalar_prefetch=0,
            grid=(n_pad // tile,),
            in_specs=[dist_spec, param_spec, param_spec],
            out_specs=out_spec,
        ),
        compiler_params=pltpu.CompilerParams(**compiler_kwargs),
        cost_estimate=cost,
    )(dist2, means2, betas2)

    if trim_padding and n_pad != N:
        # Note: this slice is a separate HBM pass; perf-sensitive callers
        # should pass trim_padding=False (padded rows/cols are exact zeros).
        out = out[:N] if channels_last else out[:, :N]
    return out


def init_params(cutoff_lower=0.0, cutoff_upper=10.0, num_rbf=50):
    """Deterministic parameter init, identical to ExpNormalSmearing._initial_params."""
    start_value = math.exp(-cutoff_upper + cutoff_lower)
    means = jnp.linspace(start_value, 1.0, num_rbf, dtype=jnp.float32)
    betas = jnp.full(
        (num_rbf,), (2.0 / num_rbf * (1.0 - start_value)) ** (-2),
        dtype=jnp.float32)
    return means, betas


def reference(dist, means, betas, *, cutoff_lower=0.0, cutoff_upper=10.0):
    """Pure-JAX reference mirroring the PyTorch forward pass."""
    alpha = cutoff_upper / (cutoff_upper - cutoff_lower)
    d = dist[:, None]
    cut = 0.5 * (jnp.cos(d * math.pi / cutoff_upper) + 1.0)
    cut = cut * (d < cutoff_upper).astype(d.dtype)
    return cut * jnp.exp(-betas[None, :] *
                         (jnp.exp(alpha * (-d + cutoff_lower)) - means[None, :]) ** 2)


if __name__ == "__main__":
    cutoff_lower, cutoff_upper, num_rbf = 0.0, 10.0, 50
    N = 300  # ragged edge count: exercises padding

    key = jax.random.PRNGKey(0)
    k0, k1 = jax.random.split(key)
    # Distances in [0, cutoff_upper + 2] so some fall past the cutoff.
    dist = jax.random.uniform(k0, (N,), dtype=jnp.float32,
                              minval=0.0, maxval=cutoff_upper + 2.0)

    means, betas = init_params(cutoff_lower, cutoff_upper, num_rbf)
    ref = reference(dist, means, betas,
                    cutoff_lower=cutoff_lower, cutoff_upper=cutoff_upper)

    # 1) Default path: [N, num_rbf] written directly by the kernel (no transpose op).
    out = jax.block_until_ready(exp_normal_smearing(
        dist, means, betas,
        cutoff_lower=cutoff_lower, cutoff_upper=cutoff_upper))
    assert out.shape == (N, num_rbf)
    assert jnp.allclose(out, ref, atol=1e-5, rtol=1e-5)

    # 2) Lane-dense perf layout straight from the kernel: [num_rbf, N].
    out_t = jax.block_until_ready(exp_normal_smearing(
        dist, means, betas,
        cutoff_lower=cutoff_lower, cutoff_upper=cutoff_upper,
        channels_last=False))
    assert out_t.shape == (num_rbf, N)
    assert jnp.allclose(out_t.T, ref, atol=1e-5, rtol=1e-5)

    # 3) Padded output (skips the unpad slice); padded rows are exactly zero.
    out_pad = jax.block_until_ready(exp_normal_smearing(
        dist, means, betas,
        cutoff_lower=cutoff_lower, cutoff_upper=cutoff_upper,
        trim_padding=False))
    assert out_pad.shape[0] % 128 == 0 and out_pad.shape[1] == num_rbf
    assert jnp.allclose(out_pad[:N], ref, atol=1e-5, rtol=1e-5)
    assert bool(jnp.all(out_pad[N:] == 0))

    # 4) Multi-step grid (force a small tile) to exercise the pipelined loop
    #    and the min_grid_steps plumbing.
    dist_big = jax.random.uniform(k1, (1000,), dtype=jnp.float32,
                                  minval=0.0, maxval=cutoff_upper + 2.0)
    ref_big = reference(dist_big, means, betas,
                        cutoff_lower=cutoff_lower, cutoff_upper=cutoff_upper)
    out_big = jax.block_until_ready(exp_normal_smearing(
        dist_big, means, betas,
        cutoff_lower=cutoff_lower, cutoff_upper=cutoff_upper,
        tile_n=256, min_grid_steps=2))
    assert out_big.shape == (1000, num_rbf)
    assert jnp.allclose(out_big, ref_big, atol=1e-5, rtol=1e-5)

    # 5) bf16 writeback (+ bf16 EUP exp, the v6e/v7x fast path); f32 math elsewhere.
    out_bf16 = jax.block_until_ready(exp_normal_smearing(
        dist, means, betas,
        cutoff_lower=cutoff_lower, cutoff_upper=cutoff_upper,
        out_dtype=jnp.bfloat16))
    assert out_bf16.shape == (N, num_rbf) and out_bf16.dtype == jnp.bfloat16
    assert jnp.allclose(out_bf16.astype(jnp.float32), ref, atol=1e-2, rtol=5e-2)

    print("KERNEL_OK")
</pallas_src>

<mosaic_0001>
module attributes {stable_mosaic.version = 11 : i64} {
  func.func @kernel(%arg0: i32, %arg1: memref<384x1xf32, #tpu.memory_space<vmem>>, %arg2: memref<1x50xf32, #tpu.memory_space<vmem>>, %arg3: memref<1x50xf32, #tpu.memory_space<vmem>>, %arg4: memref<384x50xf32, #tpu.memory_space<vmem>>) attributes {dimension_semantics = [#tpu.dimension_semantics<parallel>], iteration_bounds = array<i64: 1>, scalar_prefetch = 0 : i64, scratch_operands = 0 : i64, tpu.core_type = #tpu.core_type<tc>, window_params = [{transform_indices = @transform_0, window_bounds = array<i64: 384, 1>}, {pipeline_mode = #tpu.pipeline_mode<synchronous>, transform_indices = @transform_1, window_bounds = array<i64: 1, 50>}, {pipeline_mode = #tpu.pipeline_mode<synchronous>, transform_indices = @transform_2, window_bounds = array<i64: 1, 50>}, {transform_indices = @transform_3, window_bounds = array<i64: 384, 50>}]} {
    %c0 = arith.constant 0 : index
    %c0_0 = arith.constant 0 : index
    %0 = vector.load %arg1[%c0, %c0_0] : memref<384x1xf32, #tpu.memory_space<vmem>>, vector<384x1xf32>
    %cst = arith.constant 1.000000e+01 : f32
    %1 = vector.broadcast %cst : f32 to vector<384x1xf32>
    %2 = arith.cmpf olt, %0, %1 : vector<384x1xf32>
    %cst_1 = arith.constant 0.314159274 : f32
    %3 = vector.broadcast %cst_1 : f32 to vector<384x1xf32>
    %4 = arith.mulf %0, %3 : vector<384x1xf32>
    %5 = math.cos %4 : vector<384x1xf32>
    %cst_2 = arith.constant 1.000000e+00 : f32
    %6 = vector.broadcast %cst_2 : f32 to vector<384x1xf32>
    %7 = arith.addf %5, %6 : vector<384x1xf32>
    %cst_3 = arith.constant 5.000000e-01 : f32
    %8 = vector.broadcast %cst_3 : f32 to vector<384x1xf32>
    %9 = arith.mulf %8, %7 : vector<384x1xf32>
    %cst_4 = arith.constant 0.000000e+00 : f32
    %10 = vector.broadcast %cst_4 : f32 to vector<384x1xf32>
    %11 = arith.select %2, %9, %10 : vector<384x1xi1>, vector<384x1xf32>
    %cst_5 = arith.constant 0.000000e+00 : f32
    %12 = vector.broadcast %cst_5 : f32 to vector<384x1xf32>
    %13 = arith.subf %12, %0 : vector<384x1xf32>
    %cst_6 = arith.constant 1.000000e+00 : f32
    %14 = vector.broadcast %cst_6 : f32 to vector<384x1xf32>
    %15 = arith.mulf %14, %13 : vector<384x1xf32>
    %16 = math.exp %15 : vector<384x1xf32>
    %c0_7 = arith.constant 0 : index
    %c0_8 = arith.constant 0 : index
    %17 = vector.load %arg2[%c0_7, %c0_8] : memref<1x50xf32, #tpu.memory_space<vmem>>, vector<1x50xf32>
    %c0_9 = arith.constant 0 : index
    %c0_10 = arith.constant 0 : index
    %18 = vector.load %arg3[%c0_9, %c0_10] : memref<1x50xf32, #tpu.memory_space<vmem>>, vector<1x50xf32>
    %19 = vector.broadcast %16 : vector<384x1xf32> to vector<384x50xf32>
    %20 = vector.broadcast %17 : vector<1x50xf32> to vector<384x50xf32>
    %21 = arith.subf %19, %20 : vector<384x50xf32>
    %cst_11 = arith.constant 0.000000e+00 : f32
    %22 = vector.broadcast %cst_11 : f32 to vector<1x50xf32>
    %23 = arith.subf %22, %18 : vector<1x50xf32>
    %24 = vector.broadcast %23 : vector<1x50xf32> to vector<384x50xf32>
    %25 = arith.mulf %24, %21 : vector<384x50xf32>
    %26 = arith.mulf %25, %21 : vector<384x50xf32>
    %27 = math.exp %26 : vector<384x50xf32>
    %28 = vector.broadcast %11 : vector<384x1xf32> to vector<384x50xf32>
    %29 = arith.mulf %28, %27 : vector<384x50xf32>
    %c0_12 = arith.constant 0 : index
    %c0_13 = arith.constant 0 : index
    %30 = vector.load %arg4[%c0_12, %c0_13] : memref<384x50xf32, #tpu.memory_space<vmem>>, vector<384x50xf32>
    tpu.vector_store %arg4[%c0_12, %c0_13], %29 {strides = array<i32>} : memref<384x50xf32, #tpu.memory_space<vmem>>, vector<384x50xf32>,
    return
  }
  func.func @transform_0(%arg0: i32) -> (i32, i32) {
    %c0_i32 = arith.constant 0 : i32
    %c0_i32_0 = arith.constant 0 : i32
    return %arg0, %c0_i32 : i32, i32
  }
  func.func @transform_1(%arg0: i32) -> (i32, i32) {
    %c0_i32 = arith.constant 0 : i32
    %c0_i32_0 = arith.constant 0 : i32
    %c0_i32_1 = arith.constant 0 : i32
    return %c0_i32, %c0_i32_0 : i32, i32
  }
  func.func @transform_2(%arg0: i32) -> (i32, i32) {
    %c0_i32 = arith.constant 0 : i32
    %c0_i32_0 = arith.constant 0 : i32
    %c0_i32_1 = arith.constant 0 : i32
    return %c0_i32, %c0_i32_0 : i32, i32
  }
  func.func @transform_3(%arg0: i32) -> (i32, i32) {
    %c0_i32 = arith.constant 0 : i32
    %c0_i32_0 = arith.constant 0 : i32
    return %arg0, %c0_i32 : i32, i32
  }
}

</mosaic_0001>

<llo_original>
// kernel: tpu_custom_call.1
$region0: #{tpu_custom_call.1}
  #allocation0 [shape = 'u32[]', space=smem, size = 0x4, offset = 0x4, fixed_abs, tag = 'smem constant byte address 0x4 - core index']
  #allocation1 [shape = 'u32[144,128]{1,0:T(1,128)}', space=vmem, size = 0x12000, scoped, tag = 'internal scratch']
  %s0 = inlined_call_operand.vmem [shape: f32[384,1], index: 0, kind: input, shape index: {}]
  %s1 = inlined_call_operand.vmem [shape: f32[1,50], index: 1, kind: input, shape index: {}]
  %s2 = inlined_call_operand.vmem [shape: f32[1,50], index: 2, kind: input, shape index: {}]
  %s3 = inlined_call_operand.vmem [shape: f32[384,50], index: 3, kind: output, shape index: {}]
  %s4 = sld [smem:[#allocation0]]
  $region22: #{tpu_custom_call.1} parent=0
    _
  %s6 = ssub.s32 1, %s4
  %s7 = scalar_select 0, %s6, %s4
  // Predicated region
  $region2: #{tpu_custom_call.1} parent=0 // pred_check
    _
  $region3: #{tpu_custom_call.1} parent=0 // pred_check_branch
    %9 = sbr.rel (0) target = $region5
  $region4: #{tpu_custom_call.1} parent=0 // pred_region
    _
  $region5: #{tpu_custom_call.1} parent=0 // pred_fallthru
    _
  // Predicated region
  $region6: #{tpu_custom_call.1} parent=0 // pred_check
    _
  $region7: #{tpu_custom_call.1} parent=0 // pred_check_branch
    %11 = sbr.rel (0) target = $region9
  $region8: #{tpu_custom_call.1} parent=0 // pred_region
    _
  $region9: #{tpu_custom_call.1} parent=0 // pred_fallthru
    _
  // Predicated region
  $region10: #{tpu_custom_call.1} parent=0 // pred_check
    _
  $region11: #{tpu_custom_call.1} parent=0 // pred_check_branch
    %13 = sbr.rel (0) target = $region13
  $region12: #{tpu_custom_call.1} parent=0 // pred_region
    _
  $region13: #{tpu_custom_call.1} parent=0 // pred_fallthru
    _
  %v14 = vld [vmem:[%s0] sm:$0xff]
  %v15 = vld [vmem:[%s0 + $0x8] sm:$0xff]
  %v16 = vld [vmem:[%s0 + $0x10] sm:$0xff]
  %v17 = vld [vmem:[%s0 + $0x18] sm:$0xff]
  %v18 = vld [vmem:[%s0 + $0x20] sm:$0xff]
  %v19 = vld [vmem:[%s0 + $0x28] sm:$0xff]
  %v20 = vld [vmem:[%s0 + $0x30] sm:$0xff]
  %v21 = vld [vmem:[%s0 + $0x38] sm:$0xff]
  %v22 = vld [vmem:[%s0 + $0x40] sm:$0xff]
  %v23 = vld [vmem:[%s0 + $0x48] sm:$0xff]
  %v24 = vld [vmem:[%s0 + $0x50] sm:$0xff]
  %v25 = vld [vmem:[%s0 + $0x58] sm:$0xff]
  %v26 = vld [vmem:[%s0 + $0x60] sm:$0xff]
  %v27 = vld [vmem:[%s0 + $0x68] sm:$0xff]
  %v28 = vld [vmem:[%s0 + $0x70] sm:$0xff]
  %v29 = vld [vmem:[%s0 + $0x78] sm:$0xff]
  %v30 = vld [vmem:[%s0 + $0x80] sm:$0xff]
  %v31 = vld [vmem:[%s0 + $0x88] sm:$0xff]
  %v32 = vld [vmem:[%s0 + $0x90] sm:$0xff]
  %v33 = vld [vmem:[%s0 + $0x98] sm:$0xff]
  %v34 = vld [vmem:[%s0 + $0xa0] sm:$0xff]
  %v35 = vld [vmem:[%s0 + $0xa8] sm:$0xff]
  %v36 = vld [vmem:[%s0 + $0xb0] sm:$0xff]
  %v37 = vld [vmem:[%s0 + $0xb8] sm:$0xff]
  %v38 = vld [vmem:[%s0 + $0xc0] sm:$0xff]
  %v39 = vld [vmem:[%s0 + $0xc8] sm:$0xff]
  %v40 = vld [vmem:[%s0 + $0xd0] sm:$0xff]
  %v41 = vld [vmem:[%s0 + $0xd8] sm:$0xff]
  %v42 = vld [vmem:[%s0 + $0xe0] sm:$0xff]
  %v43 = vld [vmem:[%s0 + $0xe8] sm:$0xff]
  %v44 = vld [vmem:[%s0 + $0xf0] sm:$0xff]
  %v45 = vld [vmem:[%s0 + $0xf8] sm:$0xff]
  %v46 = vld [vmem:[%s0 + $0x100] sm:$0xff]
  %v47 = vld [vmem:[%s0 + $0x108] sm:$0xff]
  %v48 = vld [vmem:[%s0 + $0x110] sm:$0xff]
  %v49 = vld [vmem:[%s0 + $0x118] sm:$0xff]
  %v50 = vld [vmem:[%s0 + $0x120] sm:$0xff]
  %v51 = vld [vmem:[%s0 + $0x128] sm:$0xff]
  %v52 = vld [vmem:[%s0 + $0x130] sm:$0xff]
  %v53 = vld [vmem:[%s0 + $0x138] sm:$0xff]
  %v54 = vld [vmem:[%s0 + $0x140] sm:$0xff]
  %v55 = vld [vmem:[%s0 + $0x148] sm:$0xff]
  %v56 = vld [vmem:[%s0 + $0x150] sm:$0xff]
  %v57 = vld [vmem:[%s0 + $0x158] sm:$0xff]
  %v58 = vld [vmem:[%s0 + $0x160] sm:$0xff]
  %v59 = vld [vmem:[%s0 + $0x168] sm:$0xff]
  %v60 = vld [vmem:[%s0 + $0x170] sm:$0xff]
  %v61 = vld [vmem:[%s0 + $0x178] sm:$0xff]
  %vm62 = vcmp.lt.f32.partialorder %v14, 10.0
  %vm63 = vcmp.lt.f32.partialorder %v15, 10.0
  %vm64 = vcmp.lt.f32.partialorder %v16, 10.0
  %vm65 = vcmp.lt.f32.partialorder %v17, 10.0
  %vm66 = vcmp.lt.f32.partialorder %v18, 10.0
  %vm67 = vcmp.lt.f32.partialorder %v19, 10.0
  %vm68 = vcmp.lt.f32.partialorder %v20, 10.0
  %vm69 = vcmp.lt.f32.partialorder %v21, 10.0
  %vm70 = vcmp.lt.f32.partialorder %v22, 10.0
  %vm71 = vcmp.lt.f32.partialorder %v23, 10.0
  %vm72 = vcmp.lt.f32.partialorder %v24, 10.0
  %vm73 = vcmp.lt.f32.partialorder %v25, 10.0
  %vm74 = vcmp.lt.f32.partialorder %v26, 10.0
  %vm75 = vcmp.lt.f32.partialorder %v27, 10.0
  %vm76 = vcmp.lt.f32.partialorder %v28, 10.0
  %vm77 = vcmp.lt.f32.partialorder %v29, 10.0
  %vm78 = vcmp.lt.f32.partialorder %v30, 10.0
  %vm79 = vcmp.lt.f32.partialorder %v31, 10.0
  %vm80 = vcmp.lt.f32.partialorder %v32, 10.0
  %vm81 = vcmp.lt.f32.partialorder %v33, 10.0
  %vm82 = vcmp.lt.f32.partialorder %v34, 10.0
  %vm83 = vcmp.lt.f32.partialorder %v35, 10.0
  %vm84 = vcmp.lt.f32.partialorder %v36, 10.0
  %vm85 = vcmp.lt.f32.partialorder %v37, 10.0
  %vm86 = vcmp.lt.f32.partialorder %v38, 10.0
  %vm87 = vcmp.lt.f32.partialorder %v39, 10.0
  %vm88 = vcmp.lt.f32.partialorder %v40, 10.0
  %vm89 = vcmp.lt.f32.partialorder %v41, 10.0
  %vm90 = vcmp.lt.f32.partialorder %v42, 10.0
  %vm91 = vcmp.lt.f32.partialorder %v43, 10.0
  %vm92 = vcmp.lt.f32.partialorder %v44, 10.0
  %vm93 = vcmp.lt.f32.partialorder %v45, 10.0
  %vm94 = vcmp.lt.f32.partialorder %v46, 10.0
  %vm95 = vcmp.lt.f32.partialorder %v47, 10.0
  %vm96 = vcmp.lt.f32.partialorder %v48, 10.0
  %vm97 = vcmp.lt.f32.partialorder %v49, 10.0
  %vm98 = vcmp.lt.f32.partialorder %v50, 10.0
  %vm99 = vcmp.lt.f32.partialorder %v51, 10.0
  %vm100 = vcmp.lt.f32.partialorder %v52, 10.0
  %vm101 = vcmp.lt.f32.partialorder %v53, 10.0
  %vm102 = vcmp.lt.f32.partialorder %v54, 10.0
  %vm103 = vcmp.lt.f32.partialorder %v55, 10.0
  %vm104 = vcmp.lt.f32.partialorder %v56, 10.0
  %vm105 = vcmp.lt.f32.partialorder %v57, 10.0
  %vm106 = vcmp.lt.f32.partialorder %v58, 10.0
  %vm107 = vcmp.lt.f32.partialorder %v59, 10.0
  %vm108 = vcmp.lt.f32.partialorder %v60, 10.0
  %vm109 = vcmp.lt.f32.partialorder %v61, 10.0
  %v110 = vmul.f32 %v14, 0.31415927
  %v111 = vmul.f32 %v15, 0.31415927
  %v112 = vmul.f32 %v16, 0.31415927
  %v113 = vmul.f32 %v17, 0.31415927
  %v114 = vmul.f32 %v18, 0.31415927
  %v115 = vmul.f32 %v19, 0.31415927
  %v116 = vmul.f32 %v20, 0.31415927
  %v117 = vmul.f32 %v21, 0.31415927
  %v118 = vmul.f32 %v22, 0.31415927
  %v119 = vmul.f32 %v23, 0.31415927
  %v120 = vmul.f32 %v24, 0.31415927
  %v121 = vmul.f32 %v25, 0.31415927
  %v122 = vmul.f32 %v26, 0.31415927
  %v123 = vmul.f32 %v27, 0.31415927
  %v124 = vmul.f32 %v28, 0.31415927
  %v125 = vmul.f32 %v29, 0.31415927
  %v126 = vmul.f32 %v30, 0.31415927
  %v127 = vmul.f32 %v31, 0.31415927
  %v128 = vmul.f32 %v32, 0.31415927
  %v129 = vmul.f32 %v33, 0.31415927
  %v130 = vmul.f32 %v34, 0.31415927
  %v131 = vmul.f32 %v35, 0.31415927
  %v132 = vmul.f32 %v36, 0.31415927
  %v133 = vmul.f32 %v37, 0.31415927
  %v134 = vmul.f32 %v38, 0.31415927
  %v135 = vmul.f32 %v39, 0.31415927
  %v136 = vmul.f32 %v40, 0.31415927
  %v137 = vmul.f32 %v41, 0.31415927
  %v138 = vmul.f32 %v42, 0.31415927
  %v139 = vmul.f32 %v43, 0.31415927
  %v140 = vmul.f32 %v44, 0.31415927
  %v141 = vmul.f32 %v45, 0.31415927
  %v142 = vmul.f32 %v46, 0.31415927
  %v143 = vmul.f32 %v47, 0.31415927
  %v144 = vmul.f32 %v48, 0.31415927
  %v145 = vmul.f32 %v49, 0.31415927
  %v146 = vmul.f32 %v50, 0.31415927
  %v147 = vmul.f32 %v51, 0.31415927
  %v148 = vmul.f32 %v52, 0.31415927
  %v149 = vmul.f32 %v53, 0.31415927
  %v150 = vmul.f32 %v54, 0.31415927
  %v151 = vmul.f32 %v55, 0.31415927
  %v152 = vmul.f32 %v56, 0.31415927
  %v153 = vmul.f32 %v57, 0.31415927
  %v154 = vmul.f32 %v58, 0.31415927
  %v155 = vmul.f32 %v59, 0.31415927
  %v156 = vmul.f32 %v60, 0.31415927
  %v157 = vmul.f32 %v61, 0.31415927
  %v158 = vand.u32 2147483647, %v110
  %vm159 = vcmp.le.f32.partialorder %v158, 0.7853982
  %vm160 = vcmp.lt.s32.totalorder %v110, 0
  %v161 = vand.u32 %v110, 2139095040
  %v162 = vshrl.u32 %v161, 23
  %v163 = vsub.s32 %v162, 127
  %v164 = vand.u32 2147483647, %v110
  %v165 = vand.u32 %v164, 8388607
  %v166 = vor.u32 %v165, 8388608
  %v167 = vsub.s32 0, %v166
  %v168 = vadd.s32 %v163, 1
  %vm169 = vcmp.gt.s32.totalorder %v168, 0
  %v170 = vsel %vm169, %v168, 0
  %v171 = vshrl.u32 %v170, 5
  %v172 = vand.u32 %v170, 31
  %v173 = vsub.s32 32, %v172
  %v174 = vshrl.u32 683565275, %v173
  %v175 = vshll.u32 683565275, %v172
  %v176 = vshrl.u32 2475754826, %v173
  %v177 = vor.u32 %v175, %v176
  %v178 = vshll.u32 2475754826, %v172
  %v179 = vshrl.u32 2131351028, %v173
  %v180 = vor.u32 %v178, %v179
  %v181 = vshll.u32 2131351028, %v172
  %v182 = vshrl.u32 2102212464, %v173
  %v183 = vor.u32 %v181, %v182
  %v184 = vshll.u32 2102212464, %v172
  %v185 = vshrl.u32 920167782, %v173
  %v186 = vor.u32 %v184, %v185
  %v187 = vshll.u32 920167782, %v172
  %v188 = vshrl.u32 1326507024, %v173
  %v189 = vor.u32 %v187, %v188
  %vm190 = vcmp.lt.s32.totalorder %v171, 1
  %vm191 = vcmp.lt.s32.totalorder %v171, 2
  %vm192 = vcmp.lt.s32.totalorder %v171, 3
  %vm193 = vcmp.lt.s32.totalorder %v171, 4
  %v194 = vsel %vm190, %v174, %v177
  %v195 = vsel %vm193, %v183, 2102212464
  %v196 = vsel %vm192, %v180, %v195
  %v197 = vsel %vm191, %v194, %v196
  %v198 = vsel %vm190, %v177, %v180
  %v199 = vsel %vm193, %v186, 920167782
  %v200 = vsel %vm192, %v183, %v199
  %v201 = vsel %vm191, %v198, %v200
  %v202 = vsel %vm190, %v180, %v183
  %v203 = vsel %vm193, %v189, 1326507024
  %v204 = vsel %vm192, %v186, %v203
  %v205 = vsel %vm191, %v202, %v204
  %v206 = vshll.u32 %v166, 8
  %v207 = vmul.u32.u64.compose %v206, %v205
  %v208 = vextract.low.u32 %v207
  %v209 = vextract.high.u32 %v207
  %v210 = vmul.u32.u64.compose %v206, %v201
  %v211 = vextract.low.u32 %v210
  %v212 = vextract.high.u32 %v210
  %v213 = vmul.u32 %v206, %v197
  %v214 = vadd.s32 %v209, %v211
  %vm215 = vc.u32 %v209, %v211
  %v216 = vadd.s32 %v212, 1
  %v217 = vsel %vm215, %v216, %v212
  %v218 = vadd.s32 %v213, %v217
  %v219 = vadd.s32 %v218, 536870912
  %v220 = vshrl.u32 %v219, 30
  %v221 = vshll.u32 %v220, 30
  %v222 = vsub.s32 %v218, %v221
  %vm223 = vcmp.lt.s32.totalorder %v222, 0
  %v224 = vsub.s32 0, %v222
  %v225 = vsel %vm223, %v224, %v222
  %v226 = vclz %v225
  %v227 = vsub.s32 %v226, 2
  %vm228 = vcmp.gt.s32.totalorder 0, %v227
  %v229 = vsel %vm228, 0, %v227
  %v230 = vsub.s32 32, %v229
  %v231 = vshll.u32 %v222, %v229
  %v232 = vshrl.u32 %v214, %v230
  %v233 = vor.u32 %v231, %v232
  %v234 = vsub.s32 4294967266, %v229
  %v235 = vadd.s32 %v234, 127
  %v236 = vshll.u32 %v235, 23
  %v237 = vor.u32 4788187, %v236
  %v238 = vand.u32 2147483647, %v237
  %v240 = vcvt.s32.f32 %v233
  %v241 = vmul.f32 %v240, %v238
  %v242 = vxor.u32 %v241, 2147483648
  %v243 = vsel %vm160, %v242, %v241
  %v244 = vsub.s32 4, %v220
  %v245 = vsel %vm160, %v244, %v220
  %v246 = vsel %vm159, %v110, %v243
  %v247 = vsel %vm159, 0, %v245
  %v248 = vcosq.f32.pop %v246
  %v249 = vsinq.f32.pop %v246
  %vm250 = vweird.f32 %v110
  %v251 = vand.u32 %v247, 3
  %vm252 = vcmp.lt.s32.totalorder %v251, 2
  %vm253 = vcmp.eq.s32.totalorder %v251, 0
  %v254 = vxor.u32 %v249, 2147483648
  %v255 = vsel %vm253, %v248, %v254
  %vm256 = vcmp.eq.s32.totalorder %v251, 2
  %v257 = vxor.u32 %v248, 2147483648
  %v258 = vsel %vm256, %v257, %v249
  %v259 = vsel %vm252, %v255, %v258
  %v260 = vsel %vm250, nan, %v259
  %v261 = vand.u32 2147483647, %v111
  %vm262 = vcmp.le.f32.partialorder %v261, 0.7853982
  %vm263 = vcmp.lt.s32.totalorder %v111, 0
  %v264 = vand.u32 %v111, 2139095040
  %v265 = vshrl.u32 %v264, 23
  %v266 = vsub.s32 %v265, 127
  %v267 = vand.u32 2147483647, %v111
  %v268 = vand.u32 %v267, 8388607
  %v269 = vor.u32 %v268, 8388608
  %v270 = vsub.s32 0, %v269
  %v271 = vadd.s32 %v266, 1
  %vm272 = vcmp.gt.s32.totalorder %v271, 0
  %v273 = vsel %vm272, %v271, 0
  %v274 = vshrl.u32 %v273, 5
  %v275 = vand.u32 %v273, 31
  %v276 = vsub.s32 32, %v275
  %v277 = vshrl.u32 683565275, %v276
  %v278 = vshll.u32 683565275, %v275
  %v279 = vshrl.u32 2475754826, %v276
  %v280 = vor.u32 %v278, %v279
  %v281 = vshll.u32 2475754826, %v275
  %v282 = vshrl.u32 2131351028, %v276
  %v283 = vor.u32 %v281, %v282
  %v284 = vshll.u32 2131351028, %v275
  %v285 = vshrl.u32 2102212464, %v276
  %v286 = vor.u32 %v284, %v285
  %v287 = vshll.u32 2102212464, %v275
  %v288 = vshrl.u32 920167782, %v276
  %v289 = vor.u32 %v287, %v288
  %v290 = vshll.u32 920167782, %v275
  %v291 = vshrl.u32 1326507024, %v276
  %v292 = vor.u32 %v290, %v291
  %vm293 = vcmp.lt.s32.totalorder %v274, 1
  %vm294 = vcmp.lt.s32.totalorder %v274, 2
  %vm295 = vcmp.lt.s32.totalorder %v274, 3
  %vm296 = vcmp.lt.s32.totalorder %v274, 4
  %v297 = vsel %vm293, %v277, %v280
  %v298 = vsel %vm296, %v286, 2102212464
  %v299 = vsel %vm295, %v283, %v298
  %v300 = vsel %vm294, %v297, %v299
  %v301 = vsel %vm293, %v280, %v283
  %v302 = vsel %vm296, %v289, 920167782
  %v303 = vsel %vm295, %v286, %v302
  %v304 = vsel %vm294, %v301, %v303
  %v305 = vsel %vm293, %v283, %v286
  %v306 = vsel %vm296, %v292, 1326507024
  %v307 = vsel %vm295, %v289, %v306
  %v308 = vsel %vm294, %v305, %v307
  %v309 = vshll.u32 %v269, 8
  %v310 = vmul.u32.u64.compose %v309, %v308
  %v311 = vextract.low.u32 %v310
  %v312 = vextract.high.u32 %v310
  %v313 = vmul.u32.u64.compose %v309, %v304
  %v314 = vextract.low.u32 %v313
  %v315 = vextract.high.u32 %v313
  %v316 = vmul.u32 %v309, %v300
  %v317 = vadd.s32 %v312, %v314
  %vm318 = vc.u32 %v312, %v314
  %v319 = vadd.s32 %v315, 1
  %v320 = vsel %vm318, %v319, %v315
  %v321 = vadd.s32 %v316, %v320
  %v322 = vadd.s32 %v321, 536870912
  %v323 = vshrl.u32 %v322, 30
  %v324 = vshll.u32 %v323, 30
  %v325 = vsub.s32 %v321, %v324
  %vm326 = vcmp.lt.s32.totalorder %v325, 0
  %v327 = vsub.s32 0, %v325
  %v328 = vsel %vm326, %v327, %v325
  %v329 = vclz %v328
  %v330 = vsub.s32 %v329, 2
  %vm331 = vcmp.gt.s32.totalorder 0, %v330
  %v332 = vsel %vm331, 0, %v330
  %v333 = vsub.s32 32, %v332
  %v334 = vshll.u32 %v325, %v332
  %v335 = vshrl.u32 %v317, %v333
  %v336 = vor.u32 %v334, %v335
  %v337 = vsub.s32 4294967266, %v332
  %v338 = vadd.s32 %v337, 127
  %v339 = vshll.u32 %v338, 23
  %v340 = vor.u32 4788187, %v339
  %v341 = vand.u32 2147483647, %v340
  %v343 = vcvt.s32.f32 %v336
  %v344 = vmul.f32 %v343, %v341
  %v345 = vxor.u32 %v344, 2147483648
  %v346 = vsel %vm263, %v345, %v344
  %v347 = vsub.s32 4, %v323
  %v348 = vsel %vm263, %v347, %v323
  %v349 = vsel %vm262, %v111, %v346
  %v350 = vsel %vm262, 0, %v348
  %v351 = vcosq.f32.pop %v349
  %v352 = vsinq.f32.pop %v349
  %vm353 = vweird.f32 %v111
  %v354 = vand.u32 %v350, 3
  %vm355 = vcmp.lt.s32.totalorder %v354, 2
  %vm356 = vcmp.eq.s32.totalorder %v354, 0
  %v357 = vxor.u32 %v352, 2147483648
  %v358 = vsel %vm356, %v351, %v357
  %vm359 = vcmp.eq.s32.totalorder %v354, 2
  %v360 = vxor.u32 %v351, 2147483648
  %v361 = vsel %vm359, %v360, %v352
  %v362 = vsel %vm355, %v358, %v361
  %v363 = vsel %vm353, nan, %v362
  %v364 = vand.u32 2147483647, %v112
  %vm365 = vcmp.le.f32.partialorder %v364, 0.7853982
  %vm366 = vcmp.lt.s32.totalorder %v112, 0
  %v367 = vand.u32 %v112, 2139095040
  %v368 = vshrl.u32 %v367, 23
  %v369 = vsub.s32 %v368, 127
  %v370 = vand.u32 2147483647, %v112
  %v371 = vand.u32 %v370, 8388607
  %v372 = vor.u32 %v371, 8388608
  %v373 = vsub.s32 0, %v372
  %v374 = vadd.s32 %v369, 1
  %vm375 = vcmp.gt.s32.totalorder %v374, 0
  %v376 = vsel %vm375, %v374, 0
  %v377 = vshrl.u32 %v376, 5
  %v378 = vand.u32 %v376, 31
  %v379 = vsub.s32 32, %v378
  %v380 = vshrl.u32 683565275, %v379
  %v381 = vshll.u32 683565275, %v378
  %v382 = vshrl.u32 2475754826, %v379
  %v383 = vor.u32 %v381, %v382
  %v384 = vshll.u32 2475754826, %v378
  %v385 = vshrl.u32 2131351028, %v379
  %v386 = vor.u32 %v384, %v385
  %v387 = vshll.u32 2131351028, %v378
  %v388 = vshrl.u32 2102212464, %v379
  %v389 = vor.u32 %v387, %v388
  %v390 = vshll.u32 2102212464, %v378
  %v391 = vshrl.u32 920167782, %v379
  %v392 = vor.u32 %v390, %v391
  %v393 = vshll.u32 920167782, %v378
  %v394 = vshrl.u32 1326507024, %v379
  %v395 = vor.u32 %v393, %v394
  %vm396 = vcmp.lt.s32.totalorder %v377, 1
  %vm397 = vcmp.lt.s32.totalorder %v377, 2
  %vm398 = vcmp.lt.s32.totalorder %v377, 3
  %vm399 = vcmp.lt.s32.totalorder %v377, 4
  %v400 = vsel %vm396, %v380, %v383
  %v401 = vsel %vm399, %v389, 2102212464
  %v402 = vsel %vm398, %v386, %v401
  %v403 = vsel %vm397, %v400, %v402
  %v404 = vsel %vm396, %v383, %v386
  %v405 = vsel %vm399, %v392, 920167782
  %v406 = vsel %vm398, %v389, %v405
  %v407 = vsel %vm397, %v404, %v406
  %v408 = vsel %vm396, %v386, %v389
  %v409 = vsel %vm399, %v395, 1326507024
  %v410 = vsel %vm398, %v392, %v409
  %v411 = vsel %vm397, %v408, %v410
  %v412 = vshll.u32 %v372, 8
  %v413 = vmul.u32.u64.compose %v412, %v411
  %v414 = vextract.low.u32 %v413
  %v415 = vextract.high.u32 %v413
  %v416 = vmul.u32.u64.compose %v412, %v407
  %v417 = vextract.low.u32 %v416
  %v418 = vextract.high.u32 %v416
  %v419 = vmul.u32 %v412, %v403
  %v420 = vadd.s32 %v415, %v417
  %vm421 = vc.u32 %v415, %v417
  %v422 = vadd.s32 %v418, 1
  %v423 = vsel %vm421, %v422, %v418
  %v424 = vadd.s32 %v419, %v423
  %v425 = vadd.s32 %v424, 536870912
  %v426 = vshrl.u32 %v425, 30
  %v427 = vshll.u32 %v426, 30
  %v428 = vsub.s32 %v424, %v427
  %vm429 = vcmp.lt.s32.totalorder %v428, 0
  %v430 = vsub.s32 0, %v428
  %v431 = vsel %vm429, %v430, %v428
  %v432 = vclz %v431
  %v433 = vsub.s32 %v432, 2
  %vm434 = vcmp.gt.s32.totalorder 0, %v433
  %v435 = vsel %vm434, 0, %v433
  %v436 = vsub.s32 32, %v435
  %v437 = vshll.u32 %v428, %v435
  %v438 = vshrl.u32 %v420, %v436
  %v439 = vor.u32 %v437, %v438
  %v440 = vsub.s32 4294967266, %v435
  %v441 = vadd.s32 %v440, 127
  %v442 = vshll.u32 %v441, 23
  %v443 = vor.u32 4788187, %v442
  %v444 = vand.u32 2147483647, %v443
  %v446 = vcvt.s32.f32 %v439
  %v447 = vmul.f32 %v446, %v444
  %v448 = vxor.u32 %v447, 2147483648
  %v449 = vsel %vm366, %v448, %v447
  %v450 = vsub.s32 4, %v426
  %v451 = vsel %vm366, %v450, %v426
  %v452 = vsel %vm365, %v112, %v449
  %v453 = vsel %vm365, 0, %v451
  %v454 = vcosq.f32.pop %v452
  %v455 = vsinq.f32.pop %v452
  %vm456 = vweird.f32 %v112
  %v457 = vand.u32 %v453, 3
  %vm458 = vcmp.lt.s32.totalorder %v457, 2
  %vm459 = vcmp.eq.s32.totalorder %v457, 0
  %v460 = vxor.u32 %v455, 2147483648
  %v461 = vsel %vm459, %v454, %v460
  %vm462 = vcmp.eq.s32.totalorder %v457, 2
  %v463 = vxor.u32 %v454, 2147483648
  %v464 = vsel %vm462, %v463, %v455
  %v465 = vsel %vm458, %v461, %v464
  %v466 = vsel %vm456, nan, %v465
  %v467 = vand.u32 2147483647, %v113
  %vm468 = vcmp.le.f32.partialorder %v467, 0.7853982
  %vm469 = vcmp.lt.s32.totalorder %v113, 0
  %v470 = vand.u32 %v113, 2139095040
  %v471 = vshrl.u32 %v470, 23
  %v472 = vsub.s32 %v471, 127
  %v473 = vand.u32 2147483647, %v113
  %v474 = vand.u32 %v473, 8388607
  %v475 = vor.u32 %v474, 8388608
  %v476 = vsub.s32 0, %v475
  %v477 = vadd.s32 %v472, 1
  %vm478 = vcmp.gt.s32.totalorder %v477, 0
  %v479 = vsel %vm478, %v477, 0
  %v480 = vshrl.u32 %v479, 5
  %v481 = vand.u32 %v479, 31
  %v482 = vsub.s32 32, %v481
  %v483 = vshrl.u32 683565275, %v482
  %v484 = vshll.u32 683565275, %v481
  %v485 = vshrl.u32 2475754826, %v482
  %v486 = vor.u32 %v484, %v485
  %v487 = vshll.u32 2475754826, %v481
  %v488 = vshrl.u32 2131351028, %v482
  %v489 = vor.u32 %v487, %v488
  %v490 = vshll.u32 2131351028, %v481
  %v491 = vshrl.u32 2102212464, %v482
  %v492 = vor.u32 %v490, %v491
  %v493 = vshll.u32 2102212464, %v481
  %v494 = vshrl.u32 920167782, %v482
  %v495 = vor.u32 %v493, %v494
  %v496 = vshll.u32 920167782, %v481
  %v497 = vshrl.u32 1326507024, %v482
  %v498 = vor.u32 %v496, %v497
  %vm499 = vcmp.lt.s32.totalorder %v480, 1
  %vm500 = vcmp.lt.s32.totalorder %v480, 2
  %vm501 = vcmp.lt.s32.totalorder %v480, 3
  %vm502 = vcmp.lt.s32.totalorder %v480, 4
  %v503 = vsel %vm499, %v483, %v486
  %v504 = vsel %vm502, %v492, 2102212464
  %v505 = vsel %vm501, %v489, %v504
  %v506 = vsel %vm500, %v503, %v505
  %v507 = vsel %vm499, %v486, %v489
  %v508 = vsel %vm502, %v495, 920167782
  %v509 = vsel %vm501, %v492, %v508
  %v510 = vsel %vm500, %v507, %v509
  %v511 = vsel %vm499, %v489, %v492
  %v512 = vsel %vm502, %v498, 1326507024
  %v513 = vsel %vm501, %v495, %v512
  %v514 = vsel %vm500, %v511, %v513
  %v515 = vshll.u32 %v475, 8
  %v516 = vmul.u32.u64.compose %v515, %v514
  %v517 = vextract.low.u32 %v516
  %v518 = vextract.high.u32 %v516
  %v519 = vmul.u32.u64.compose %v515, %v510
  %v520 = vextract.low.u32 %v519
  %v521 = vextract.high.u32 %v519
  %v522 = vmul.u32 %v515, %v506
  %v523 = vadd.s32 %v518, %v520
  %vm524 = vc.u32 %v518, %v520
  %v525 = vadd.s32 %v521, 1
  %v526 = vsel %vm524, %v525, %v521
  %v527 = vadd.s32 %v522, %v526
  %v528 = vadd.s32 %v527, 536870912
  %v529 = vshrl.u32 %v528, 30
  %v530 = vshll.u32 %v529, 30
  %v531 = vsub.s32 %v527, %v530
  %vm532 = vcmp.lt.s32.totalorder %v531, 0
  %v533 = vsub.s32 0, %v531
  %v534 = vsel %vm532, %v533, %v531
  %v535 = vclz %v534
  %v536 = vsub.s32 %v535, 2
  %vm537 = vcmp.gt.s32.totalorder 0, %v536
  %v538 = vsel %vm537, 0, %v536
  %v539 = vsub.s32 32, %v538
  %v540 = vshll.u32 %v531, %v538
  %v541 = vshrl.u32 %v523, %v539
  %v542 = vor.u32 %v540, %v541
  %v543 = vsub.s32 4294967266, %v538
  %v544 = vadd.s32 %v543, 127
  %v545 = vshll.u32 %v544, 23
  %v546 = vor.u32 4788187, %v545
  %v547 = vand.u32 2147483647, %v546
  %v549 = vcvt.s32.f32 %v542
  %v550 = vmul.f32 %v549, %v547
  %v551 = vxor.u32 %v550, 2147483648
  %v552 = vsel %vm469, %v551, %v550
  %v553 = vsub.s32 4, %v529
  %v554 = vsel %vm469, %v553, %v529
  %v555 = vsel %vm468, %v113, %v552
  %v556 = vsel %vm468, 0, %v554
  %v557 = vcosq.f32.pop %v555
  %v558 = vsinq.f32.pop %v555
  %vm559 = vweird.f32 %v113
  %v560 = vand.u32 %v556, 3
  %vm561 = vcmp.lt.s32.totalorder %v560, 2
  %vm562 = vcmp.eq.s32.totalorder %v560, 0
  %v563 = vxor.u32 %v558, 2147483648
  %v564 = vsel %vm562, %v557, %v563
  %vm565 = vcmp.eq.s32.totalorder %v560, 2
  %v566 = vxor.u32 %v557, 2147483648
  %v567 = vsel %vm565, %v566, %v558
  %v568 = vsel %vm561, %v564, %v567
  %v569 = vsel %vm559, nan, %v568
  %v570 = vand.u32 2147483647, %v114
  %vm571 = vcmp.le.f32.partialorder %v570, 0.7853982
  %vm572 = vcmp.lt.s32.totalorder %v114, 0
  %v573 = vand.u32 %v114, 2139095040
  %v574 = vshrl.u32 %v573, 23
  %v575 = vsub.s32 %v574, 127
  %v576 = vand.u32 2147483647, %v114
  %v577 = vand.u32 %v576, 8388607
  %v578 = vor.u32 %v577, 8388608
  %v579 = vsub.s32 0, %v578
  %v580 = vadd.s32 %v575, 1
  %vm581 = vcmp.gt.s32.totalorder %v580, 0
  %v582 = vsel %vm581, %v580, 0
  %v583 = vshrl.u32 %v582, 5
  %v584 = vand.u32 %v582, 31
  %v585 = vsub.s32 32, %v584
  %v586 = vshrl.u32 683565275, %v585
  %v587 = vshll.u32 683565275, %v584
  %v588 = vshrl.u32 2475754826, %v585
  %v589 = vor.u32 %v587, %v588
  %v590 = vshll.u32 2475754826, %v584
  %v591 = vshrl.u32 2131351028, %v585
  %v592 = vor.u32 %v590, %v591
  %v593 = vshll.u32 2131351028, %v584
  %v594 = vshrl.u32 2102212464, %v585
  %v595 = vor.u32 %v593, %v594
  %v596 = vshll.u32 2102212464, %v584
  %v597 = vshrl.u32 920167782, %v585
  %v598 = vor.u32 %v596, %v597
  %v599 = vshll.u32 920167782, %v584
  %v600 = vshrl.u32 1326507024, %v585
  %v601 = vor.u32 %v599, %v600
  %vm602 = vcmp.lt.s32.totalorder %v583, 1
  %vm603 = vcmp.lt.s32.totalorder %v583, 2
  %vm604 = vcmp.lt.s32.totalorder %v583, 3
  %vm605 = vcmp.lt.s32.totalorder %v583, 4
  %v606 = vsel %vm602, %v586, %v589
  %v607 = vsel %vm605, %v595, 2102212464
  %v608 = vsel %vm604, %v592, %v607
  %v609 = vsel %vm603, %v606, %v608
  %v610 = vsel %vm602, %v589, %v592
  %v611 = vsel %vm605, %v598, 920167782
  %v612 = vsel %vm604, %v595, %v611
  %v613 = vsel %vm603, %v610, %v612
  %v614 = vsel %vm602, %v592, %v595
  %v615 = vsel %vm605, %v601, 1326507024
  %v616 = vsel %vm604, %v598, %v615
  %v617 = vsel %vm603, %v614, %v616
  %v618 = vshll.u32 %v578, 8
  %v619 = vmul.u32.u64.compose %v618, %v617
  %v620 = vextract.low.u32 %v619
  %v621 = vextract.high.u32 %v619
  %v622 = vmul.u32.u64.compose %v618, %v613
  %v623 = vextract.low.u32 %v622
  %v624 = vextract.high.u32 %v622
  %v625 = vmul.u32 %v618, %v609
  %v626 = vadd.s32 %v621, %v623
  %vm627 = vc.u32 %v621, %v623
  %v628 = vadd.s32 %v624, 1
  %v629 = vsel %vm627, %v628, %v624
  %v630 = vadd.s32 %v625, %v629
  %v631 = vadd.s32 %v630, 536870912
  %v632 = vshrl.u32 %v631, 30
  %v633 = vshll.u32 %v632, 30
  %v634 = vsub.s32 %v630, %v633
  %vm635 = vcmp.lt.s32.totalorder %v634, 0
  %v636 = vsub.s32 0, %v634
  %v637 = vsel %vm635, %v636, %v634
  %v638 = vclz %v637
  %v639 = vsub.s32 %v638, 2
  %vm640 = vcmp.gt.s32.totalorder 0, %v639
  %v641 = vsel %vm640, 0, %v639
  %v642 = vsub.s32 32, %v641
  %v643 = vshll.u32 %v634, %v641
  %v644 = vshrl.u32 %v626, %v642
  %v645 = vor.u32 %v643, %v644
  %v646 = vsub.s32 4294967266, %v641
  %v647 = vadd.s32 %v646, 127
  %v648 = vshll.u32 %v647, 23
  %v649 = vor.u32 4788187, %v648
  %v650 = vand.u32 2147483647, %v649
  %v652 = vcvt.s32.f32 %v645
  %v653 = vmul.f32 %v652, %v650
  %v654 = vxor.u32 %v653, 2147483648
  %v655 = vsel %vm572, %v654, %v653
  %v656 = vsub.s32 4, %v632
  %v657 = vsel %vm572, %v656, %v632
  %v658 = vsel %vm571, %v114, %v655
  %v659 = vsel %vm571, 0, %v657
  %v660 = vcosq.f32.pop %v658
  %v661 = vsinq.f32.pop %v658
  %vm662 = vweird.f32 %v114
  %v663 = vand.u32 %v659, 3
  %vm664 = vcmp.lt.s32.totalorder %v663, 2
  %vm665 = vcmp.eq.s32.totalorder %v663, 0
  %v666 = vxor.u32 %v661, 2147483648
  %v667 = vsel %vm665, %v660, %v666
  %vm668 = vcmp.eq.s32.totalorder %v663, 2
  %v669 = vxor.u32 %v660, 2147483648
  %v670 = vsel %vm668, %v669, %v661
  %v671 = vsel %vm664, %v667, %v670
  %v672 = vsel %vm662, nan, %v671
  %v673 = vand.u32 2147483647, %v115
  %vm674 = vcmp.le.f32.partialorder %v673, 0.7853982
  %vm675 = vcmp.lt.s32.totalorder %v115, 0
  %v676 = vand.u32 %v115, 2139095040
  %v677 = vshrl.u32 %v676, 23
  %v678 = vsub.s32 %v677, 127
  %v679 = vand.u32 2147483647, %v115
  %v680 = vand.u32 %v679, 8388607
  %v681 = vor.u32 %v680, 8388608
  %v682 = vsub.s32 0, %v681
  %v683 = vadd.s32 %v678, 1
  %vm684 = vcmp.gt.s32.totalorder %v683, 0
  %v685 = vsel %vm684, %v683, 0
  %v686 = vshrl.u32 %v685, 5
  %v687 = vand.u32 %v685, 31
  %v688 = vsub.s32 32, %v687
  %v689 = vshrl.u32 683565275, %v688
  %v690 = vshll.u32 683565275, %v687
  %v691 = vshrl.u32 2475754826, %v688
  %v692 = vor.u32 %v690, %v691
  %v693 = vshll.u32 2475754826, %v687
  %v694 = vshrl.u32 2131351028, %v688
  %v695 = vor.u32 %v693, %v694
  %v696 = vshll.u32 2131351028, %v687
  %v697 = vshrl.u32 2102212464, %v688
  %v698 = vor.u32 %v696, %v697
  %v699 = vshll.u32 2102212464, %v687
  %v700 = vshrl.u32 920167782, %v688
  %v701 = vor.u32 %v699, %v700
  %v702 = vshll.u32 920167782, %v687
  %v703 = vshrl.u32 1326507024, %v688
  %v704 = vor.u32 %v702, %v703
  %vm705 = vcmp.lt.s32.totalorder %v686, 1
  %vm706 = vcmp.lt.s32.totalorder %v686, 2
  %vm707 = vcmp.lt.s32.totalorder %v686, 3
  %vm708 = vcmp.lt.s32.totalorder %v686, 4
  %v709 = vsel %vm705, %v689, %v692
  %v710 = vsel %vm708, %v698, 2102212464
  %v711 = vsel %vm707, %v695, %v710
  %v712 = vsel %vm706, %v709, %v711
  %v713 = vsel %vm705, %v692, %v695
  %v714 = vsel %vm708, %v701, 920167782
  %v715 = vsel %vm707, %v698, %v714
  %v716 = vsel %vm706, %v713, %v715
  %v717 = vsel %vm705, %v695, %v698
  %v718 = vsel %vm708, %v704, 1326507024
  %v719 = vsel %vm707, %v701, %v718
  %v720 = vsel %vm706, %v717, %v719
  %v721 = vshll.u32 %v681, 8
  %v722 = vmul.u32.u64.compose %v721, %v720
  %v723 = vextract.low.u32 %v722
  %v724 = vextract.high.u32 %v722
  %v725 = vmul.u32.u64.compose %v721, %v716
  %v726 = vextract.low.u32 %v725
  %v727 = vextract.high.u32 %v725
  %v728 = vmul.u32 %v721, %v712
  %v729 = vadd.s32 %v724, %v726
  %vm730 = vc.u32 %v724, %v726
  %v731 = vadd.s32 %v727, 1
  %v732 = vsel %vm730, %v731, %v727
  %v733 = vadd.s32 %v728, %v732
  %v734 = vadd.s32 %v733, 536870912
  %v735 = vshrl.u32 %v734, 30
  %v736 = vshll.u32 %v735, 30
  %v737 = vsub.s32 %v733, %v736
  %vm738 = vcmp.lt.s32.totalorder %v737, 0
  %v739 = vsub.s32 0, %v737
  %v740 = vsel %vm738, %v739, %v737
  %v741 = vclz %v740
  %v742 = vsub.s32 %v741, 2
  %vm743 = vcmp.gt.s32.totalorder 0, %v742
  %v744 = vsel %vm743, 0, %v742
  %v745 = vsub.s32 32, %v744
  %v746 = vshll.u32 %v737, %v744
  %v747 = vshrl.u32 %v729, %v745
  %v748 = vor.u32 %v746, %v747
  %v749 = vsub.s32 4294967266, %v744
  %v750 = vadd.s32 %v749, 127
  %v751 = vshll.u32 %v750, 23
  %v752 = vor.u32 4788187, %v751
  %v753 = vand.u32 2147483647, %v752
  %v755 = vcvt.s32.f32 %v748
  %v756 = vmul.f32 %v755, %v753
  %v757 = vxor.u32 %v756, 2147483648
  %v758 = vsel %vm675, %v757, %v756
  %v759 = vsub.s32 4, %v735
  %v760 = vsel %vm675, %v759, %v735
  %v761 = vsel %vm674, %v115, %v758
  %v762 = vsel %vm674, 0, %v760
  %v763 = vcosq.f32.pop %v761
  %v764 = vsinq.f32.pop %v761
  %vm765 = vweird.f32 %v115
  %v766 = vand.u32 %v762, 3
  %vm767 = vcmp.lt.s32.totalorder %v766, 2
  %vm768 = vcmp.eq.s32.totalorder %v766, 0
  %v769 = vxor.u32 %v764, 2147483648
  %v770 = vsel %vm768, %v763, %v769
  %vm771 = vcmp.eq.s32.totalorder %v766, 2
  %v772 = vxor.u32 %v763, 2147483648
  %v773 = vsel %vm771, %v772, %v764
  %v774 = vsel %vm767, %v770, %v773
  %v775 = vsel %vm765, nan, %v774
  %v776 = vand.u32 2147483647, %v116
  %vm777 = vcmp.le.f32.partialorder %v776, 0.7853982
  %vm778 = vcmp.lt.s32.totalorder %v116, 0
  %v779 = vand.u32 %v116, 2139095040
  %v780 = vshrl.u32 %v779, 23
  %v781 = vsub.s32 %v780, 127
  %v782 = vand.u32 2147483647, %v116
  %v783 = vand.u32 %v782, 8388607
  %v784 = vor.u32 %v783, 8388608
  %v785 = vsub.s32 0, %v784
  %v786 = vadd.s32 %v781, 1
  %vm787 = vcmp.gt.s32.totalorder %v786, 0
  %v788 = vsel %vm787, %v786, 0
  %v789 = vshrl.u32 %v788, 5
  %v790 = vand.u32 %v788, 31
  %v791 = vsub.s32 32, %v790
  %v792 = vshrl.u32 683565275, %v791
  %v793 = vshll.u32 683565275, %v790
  %v794 = vshrl.u32 2475754826, %v791
  %v795 = vor.u32 %v793, %v794
  %v796 = vshll.u32 2475754826, %v790
  %v797 = vshrl.u32 2131351028, %v791
  %v798 = vor.u32 %v796, %v797
  %v799 = vshll.u32 2131351028, %v790
  %v800 = vshrl.u32 2102212464, %v791
  %v801 = vor.u32 %v799, %v800
  %v802 = vshll.u32 2102212464, %v790
  %v803 = vshrl.u32 920167782, %v791
  %v804 = vor.u32 %v802, %v803
  %v805 = vshll.u32 920167782, %v790
  %v806 = vshrl.u32 1326507024, %v791
  %v807 = vor.u32 %v805, %v806
  %vm808 = vcmp.lt.s32.totalorder %v789, 1
  %vm809 = vcmp.lt.s32.totalorder %v789, 2
  %vm810 = vcmp.lt.s32.totalorder %v789, 3
  %vm811 = vcmp.lt.s32.totalorder %v789, 4
  %v812 = vsel %vm808, %v792, %v795
  %v813 = vsel %vm811, %v801, 2102212464
  %v814 = vsel %vm810, %v798, %v813
  %v815 = vsel %vm809, %v812, %v814
  %v816 = vsel %vm808, %v795, %v798
  %v817 = vsel %vm811, %v804, 920167782
  %v818 = vsel %vm810, %v801, %v817
  %v819 = vsel %vm809, %v816, %v818
  %v820 = vsel %vm808, %v798, %v801
  %v821 = vsel %vm811, %v807, 1326507024
  %v822 = vsel %vm810, %v804, %v821
  %v823 = vsel %vm809, %v820, %v822
  %v824 = vshll.u32 %v784, 8
  %v825 = vmul.u32.u64.compose %v824, %v823
  %v826 = vextract.low.u32 %v825
  %v827 = vextract.high.u32 %v825
  %v828 = vmul.u32.u64.compose %v824, %v819
  %v829 = vextract.low.u32 %v828
  %v830 = vextract.high.u32 %v828
  %v831 = vmul.u32 %v824, %v815
  %v832 = vadd.s32 %v827, %v829
  %vm833 = vc.u32 %v827, %v829
  %v834 = vadd.s32 %v830, 1
  %v835 = vsel %vm833, %v834, %v830
  %v836 = vadd.s32 %v831, %v835
  %v837 = vadd.s32 %v836, 536870912
  %v838 = vshrl.u32 %v837, 30
  %v839 = vshll.u32 %v838, 30
  %v840 = vsub.s32 %v836, %v839
  %vm841 = vcmp.lt.s32.totalorder %v840, 0
  %v842 = vsub.s32 0, %v840
  %v843 = vsel %vm841, %v842, %v840
  %v844 = vclz %v843
  %v845 = vsub.s32 %v844, 2
  %vm846 = vcmp.gt.s32.totalorder 0, %v845
  %v847 = vsel %vm846, 0, %v845
  %v848 = vsub.s32 32, %v847
  %v849 = vshll.u32 %v840, %v847
  %v850 = vshrl.u32 %v832, %v848
  %v851 = vor.u32 %v849, %v850
  %v852 = vsub.s32 4294967266, %v847
  %v853 = vadd.s32 %v852, 127
  %v854 = vshll.u32 %v853, 23
  %v855 = vor.u32 4788187, %v854
  %v856 = vand.u32 2147483647, %v855
  %v858 = vcvt.s32.f32 %v851
  %v859 = vmul.f32 %v858, %v856
  %v860 = vxor.u32 %v859, 2147483648
  %v861 = vsel %vm778, %v860, %v859
  %v862 = vsub.s32 4, %v838
  %v863 = vsel %vm778, %v862, %v838
  %v864 = vsel %vm777, %v116, %v861
  %v865 = vsel %vm777, 0, %v863
  %v866 = vcosq.f32.pop %v864
  %v867 = vsinq.f32.pop %v864
  %vm868 = vweird.f32 %v116
  %v869 = vand.u32 %v865, 3
  %vm870 = vcmp.lt.s32.totalorder %v869, 2
  %vm871 = vcmp.eq.s32.totalorder %v869, 0
  %v872 = vxor.u32 %v867, 2147483648
  %v873 = vsel %vm871, %v866, %v872
  %vm874 = vcmp.eq.s32.totalorder %v869, 2
  %v875 = vxor.u32 %v866, 2147483648
  %v876 = vsel %vm874, %v875, %v867
  %v877 = vsel %vm870, %v873, %v876
  %v878 = vsel %vm868, nan, %v877
  %v879 = vand.u32 2147483647, %v117
  %vm880 = vcmp.le.f32.partialorder %v879, 0.7853982
  %vm881 = vcmp.lt.s32.totalorder %v117, 0
  %v882 = vand.u32 %v117, 2139095040
  %v883 = vshrl.u32 %v882, 23
  %v884 = vsub.s32 %v883, 127
  %v885 = vand.u32 2147483647, %v117
  %v886 = vand.u32 %v885, 8388607
  %v887 = vor.u32 %v886, 8388608
  %v888 = vsub.s32 0, %v887
  %v889 = vadd.s32 %v884, 1
  %vm890 = vcmp.gt.s32.totalorder %v889, 0
  %v891 = vsel %vm890, %v889, 0
  %v892 = vshrl.u32 %v891, 5
  %v893 = vand.u32 %v891, 31
  %v894 = vsub.s32 32, %v893
  %v895 = vshrl.u32 683565275, %v894
  %v896 = vshll.u32 683565275, %v893
  %v897 = vshrl.u32 2475754826, %v894
  %v898 = vor.u32 %v896, %v897
  %v899 = vshll.u32 2475754826, %v893
  %v900 = vshrl.u32 2131351028, %v894
  %v901 = vor.u32 %v899, %v900
  %v902 = vshll.u32 2131351028, %v893
  %v903 = vshrl.u32 2102212464, %v894
  %v904 = vor.u32 %v902, %v903
  %v905 = vshll.u32 2102212464, %v893
  %v906 = vshrl.u32 920167782, %v894
  %v907 = vor.u32 %v905, %v906
  %v908 = vshll.u32 920167782, %v893
  %v909 = vshrl.u32 1326507024, %v894
  %v910 = vor.u32 %v908, %v909
  %vm911 = vcmp.lt.s32.totalorder %v892, 1
  %vm912 = vcmp.lt.s32.totalorder %v892, 2
  %vm913 = vcmp.lt.s32.totalorder %v892, 3
  %vm914 = vcmp.lt.s32.totalorder %v892, 4
  %v915 = vsel %vm911, %v895, %v898
  %v916 = vsel %vm914, %v904, 2102212464
  %v917 = vsel %vm913, %v901, %v916
  %v918 = vsel %vm912, %v915, %v917
  %v919 = vsel %vm911, %v898, %v901
  %v920 = vsel %vm914, %v907, 920167782
  %v921 = vsel %vm913, %v904, %v920
  %v922 = vsel %vm912, %v919, %v921
  %v923 = vsel %vm911, %v901, %v904
  %v924 = vsel %vm914, %v910, 1326507024
  %v925 = vsel %vm913, %v907, %v924
  %v926 = vsel %vm912, %v923, %v925
  %v927 = vshll.u32 %v887, 8
  %v928 = vmul.u32.u64.compose %v927, %v926
  %v929 = vextract.low.u32 %v928
  %v930 = vextract.high.u32 %v928
  %v931 = vmul.u32.u64.compose %v927, %v922
  %v932 = vextract.low.u32 %v931
  %v933 = vextract.high.u32 %v931
  %v934 = vmul.u32 %v927, %v918
  %v935 = vadd.s32 %v930, %v932
  %vm936 = vc.u32 %v930, %v932
  %v937 = vadd.s32 %v933, 1
  %v938 = vsel %vm936, %v937, %v933
  %v939 = vadd.s32 %v934, %v938
  %v940 = vadd.s32 %v939, 536870912
  %v941 = vshrl.u32 %v940, 30
  %v942 = vshll.u32 %v941, 30
  %v943 = vsub.s32 %v939, %v942
  %vm944 = vcmp.lt.s32.totalorder %v943, 0
  %v945 = vsub.s32 0, %v943
  %v946 = vsel %vm944, %v945, %v943
  %v947 = vclz %v946
  %v948 = vsub.s32 %v947, 2
  %vm949 = vcmp.gt.s32.totalorder 0, %v948
  %v950 = vsel %vm949, 0, %v948
  %v951 = vsub.s32 32, %v950
  %v952 = vshll.u32 %v943, %v950
  %v953 = vshrl.u32 %v935, %v951
  %v954 = vor.u32 %v952, %v953
  %v955 = vsub.s32 4294967266, %v950
  %v956 = vadd.s32 %v955, 127
  %v957 = vshll.u32 %v956, 23
  %v958 = vor.u32 4788187, %v957
  %v959 = vand.u32 2147483647, %v958
  %v961 = vcvt.s32.f32 %v954
  %v962 = vmul.f32 %v961, %v959
  %v963 = vxor.u32 %v962, 2147483648
  %v964 = vsel %vm881, %v963, %v962
  %v965 = vsub.s32 4, %v941
  %v966 = vsel %vm881, %v965, %v941
  %v967 = vsel %vm880, %v117, %v964
  %v968 = vsel %vm880, 0, %v966
  %v969 = vcosq.f32.pop %v967
  %v970 = vsinq.f32.pop %v967
  %vm971 = vweird.f32 %v117
  %v972 = vand.u32 %v968, 3
  %vm973 = vcmp.lt.s32.totalorder %v972, 2
  %vm974 = vcmp.eq.s32.totalorder %v972, 0
  %v975 = vxor.u32 %v970, 2147483648
  %v976 = vsel %vm974, %v969, %v975
  %vm977 = vcmp.eq.s32.totalorder %v972, 2
  %v978 = vxor.u32 %v969, 2147483648
  %v979 = vsel %vm977, %v978, %v970
  %v980 = vsel %vm973, %v976, %v979
  %v981 = vsel %vm971, nan, %v980
  %v982 = vand.u32 2147483647, %v118
  %vm983 = vcmp.le.f32.partialorder %v982, 0.7853982
  %vm984 = vcmp.lt.s32.totalorder %v118, 0
  %v985 = vand.u32 %v118, 2139095040
  %v986 = vshrl.u32 %v985, 23
  %v987 = vsub.s32 %v986, 127
  %v988 = vand.u32 2147483647, %v118
  %v989 = vand.u32 %v988, 8388607
  %v990 = vor.u32 %v989, 8388608
  %v991 = vsub.s32 0, %v990
  %v992 = vadd.s32 %v987, 1
  %vm993 = vcmp.gt.s32.totalorder %v992, 0
  %v994 = vsel %vm993, %v992, 0
  %v995 = vshrl.u32 %v994, 5
  %v996 = vand.u32 %v994, 31
  %v997 = vsub.s32 32, %v996
  %v998 = vshrl.u32 683565275, %v997
  %v999 = vshll.u32 683565275, %v996
  %v1000 = vshrl.u32 2475754826, %v997
  %v1001 = vor.u32 %v999, %v1000
  %v1002 = vshll.u32 2475754826, %v996
  %v1003 = vshrl.u32 2131351028, %v997
  %v1004 = vor.u32 %v1002, %v1003
  %v1005 = vshll.u32 2131351028, %v996
  %v1006 = vshrl.u32 2102212464, %v997
  %v1007 = vor.u32 %v1005, %v1006
  %v1008 = vshll.u32 2102212464, %v996
  %v1009 = vshrl.u32 920167782, %v997
  %v1010 = vor.u32 %v1008, %v1009
  %v1011 = vshll.u32 920167782, %v996
  %v1012 = vshrl.u32 1326507024, %v997
  %v1013 = vor.u32 %v1011, %v1012
  %vm1014 = vcmp.lt.s32.totalorder %v995, 1
  %vm1015 = vcmp.lt.s32.totalorder %v995, 2
  %vm1016 = vcmp.lt.s32.totalorder %v995, 3
  %vm1017 = vcmp.lt.s32.totalorder %v995, 4
  %v1018 = vsel %vm1014, %v998, %v1001
  %v1019 = vsel %vm1017, %v1007, 2102212464
  %v1020 = vsel %vm1016, %v1004, %v1019
  %v1021 = vsel %vm1015, %v1018, %v1020
  %v1022 = vsel %vm1014, %v1001, %v1004
  %v1023 = vsel %vm1017, %v1010, 920167782
  %v1024 = vsel %vm1016, %v1007, %v1023
  %v1025 = vsel %vm1015, %v1022, %v1024
  %v1026 = vsel %vm1014, %v1004, %v1007
  %v1027 = vsel %vm1017, %v1013, 1326507024
  %v1028 = vsel %vm1016, %v1010, %v1027
  %v1029 = vsel %vm1015, %v1026, %v1028
  %v1030 = vshll.u32 %v990, 8
  %v1031 = vmul.u32.u64.compose %v1030, %v1029
  %v1032 = vextract.low.u32 %v1031
  %v1033 = vextract.high.u32 %v1031
  %v1034 = vmul.u32.u64.compose %v1030, %v1025
  %v1035 = vextract.low.u32 %v1034
  %v1036 = vextract.high.u32 %v1034
  %v1037 = vmul.u32 %v1030, %v1021
  %v1038 = vadd.s32 %v1033, %v1035
  %vm1039 = vc.u32 %v1033, %v1035
  %v1040 = vadd.s32 %v1036, 1
  %v1041 = vsel %vm1039, %v1040, %v1036
  %v1042 = vadd.s32 %v1037, %v1041
  %v1043 = vadd.s32 %v1042, 536870912
  %v1044 = vshrl.u32 %v1043, 30
  %v1045 = vshll.u32 %v1044, 30
  %v1046 = vsub.s32 %v1042, %v1045
  %vm1047 = vcmp.lt.s32.totalorder %v1046, 0
  %v1048 = vsub.s32 0, %v1046
  %v1049 = vsel %vm1047, %v1048, %v1046
  %v1050 = vclz %v1049
  %v1051 = vsub.s32 %v1050, 2
  %vm1052 = vcmp.gt.s32.totalorder 0, %v1051
  %v1053 = vsel %vm1052, 0, %v1051
  %v1054 = vsub.s32 32, %v1053
  %v1055 = vshll.u32 %v1046, %v1053
  %v1056 = vshrl.u32 %v1038, %v1054
  %v1057 = vor.u32 %v1055, %v1056
  %v1058 = vsub.s32 4294967266, %v1053
  %v1059 = vadd.s32 %v1058, 127
  %v1060 = vshll.u32 %v1059, 23
  %v1061 = vor.u32 4788187, %v1060
  %v1062 = vand.u32 2147483647, %v1061
  %v1064 = vcvt.s32.f32 %v1057
  %v1065 = vmul.f32 %v1064, %v1062
  %v1066 = vxor.u32 %v1065, 2147483648
  %v1067 = vsel %vm984, %v1066, %v1065
  %v1068 = vsub.s32 4, %v1044
  %v1069 = vsel %vm984, %v1068, %v1044
  %v1070 = vsel %vm983, %v118, %v1067
  %v1071 = vsel %vm983, 0, %v1069
  %v1072 = vcosq.f32.pop %v1070
  %v1073 = vsinq.f32.pop %v1070
  %vm1074 = vweird.f32 %v118
  %v1075 = vand.u32 %v1071, 3
  %vm1076 = vcmp.lt.s32.totalorder %v1075, 2
  %vm1077 = vcmp.eq.s32.totalorder %v1075, 0
  %v1078 = vxor.u32 %v1073, 2147483648
  %v1079 = vsel %vm1077, %v1072, %v1078
  %vm1080 = vcmp.eq.s32.totalorder %v1075, 2
  %v1081 = vxor.u32 %v1072, 2147483648
  %v1082 = vsel %vm1080, %v1081, %v1073
  %v1083 = vsel %vm1076, %v1079, %v1082
  %v1084 = vsel %vm1074, nan, %v1083
  %v1085 = vand.u32 2147483647, %v119
  %vm1086 = vcmp.le.f32.partialorder %v1085, 0.7853982
  %vm1087 = vcmp.lt.s32.totalorder %v119, 0
  %v1088 = vand.u32 %v119, 2139095040
  %v1089 = vshrl.u32 %v1088, 23
  %v1090 = vsub.s32 %v1089, 127
  %v1091 = vand.u32 2147483647, %v119
  %v1092 = vand.u32 %v1091, 8388607
  %v1093 = vor.u32 %v1092, 8388608
  %v1094 = vsub.s32 0, %v1093
  %v1095 = vadd.s32 %v1090, 1
  %vm1096 = vcmp.gt.s32.totalorder %v1095, 0
  %v1097 = vsel %vm1096, %v1095, 0
  %v1098 = vshrl.u32 %v1097, 5
  %v1099 = vand.u32 %v1097, 31
  %v1100 = vsub.s32 32, %v1099
  %v1101 = vshrl.u32 683565275, %v1100
  %v1102 = vshll.u32 683565275, %v1099
  %v1103 = vshrl.u32 2475754826, %v1100
  %v1104 = vor.u32 %v1102, %v1103
  %v1105 = vshll.u32 2475754826, %v1099
  %v1106 = vshrl.u32 2131351028, %v1100
  %v1107 = vor.u32 %v1105, %v1106
  %v1108 = vshll.u32 2131351028, %v1099
  %v1109 = vshrl.u32 2102212464, %v1100
  %v1110 = vor.u32 %v1108, %v1109
  %v1111 = vshll.u32 2102212464, %v1099
  %v1112 = vshrl.u32 920167782, %v1100
  %v1113 = vor.u32 %v1111, %v1112
  %v1114 = vshll.u32 920167782, %v1099
  %v1115 = vshrl.u32 1326507024, %v1100
  %v1116 = vor.u32 %v1114, %v1115
  %vm1117 = vcmp.lt.s32.totalorder %v1098, 1
  %vm1118 = vcmp.lt.s32.totalorder %v1098, 2
  %vm1119 = vcmp.lt.s32.totalorder %v1098, 3
  %vm1120 = vcmp.lt.s32.totalorder %v1098, 4
  %v1121 = vsel %vm1117, %v1101, %v1104
  %v1122 = vsel %vm1120, %v1110, 2102212464
  %v1123 = vsel %vm1119, %v1107, %v1122
  %v1124 = vsel %vm1118, %v1121, %v1123
  %v1125 = vsel %vm1117, %v1104, %v1107
  %v1126 = vsel %vm1120, %v1113, 920167782
  %v1127 = vsel %vm1119, %v1110, %v1126
  %v1128 = vsel %vm1118, %v1125, %v1127
  %v1129 = vsel %vm1117, %v1107, %v1110
  %v1130 = vsel %vm1120, %v1116, 1326507024
  %v1131 = vsel %vm1119, %v1113, %v1130
  %v1132 = vsel %vm1118, %v1129, %v1131
  %v1133 = vshll.u32 %v1093, 8
  %v1134 = vmul.u32.u64.compose %v1133, %v1132
  %v1135 = vextract.low.u32 %v1134
  %v1136 = vextract.high.u32 %v1134
  %v1137 = vmul.u32.u64.compose %v1133, %v1128
  %v1138 = vextract.low.u32 %v1137
  %v1139 = vextract.high.u32 %v1137
  %v1140 = vmul.u32 %v1133, %v1124
  %v1141 = vadd.s32 %v1136, %v1138
  %vm1142 = vc.u32 %v1136, %v1138
  %v1143 = vadd.s32 %v1139, 1
  %v1144 = vsel %vm1142, %v1143, %v1139
  %v1145 = vadd.s32 %v1140, %v1144
  %v1146 = vadd.s32 %v1145, 536870912
  %v1147 = vshrl.u32 %v1146, 30
  %v1148 = vshll.u32 %v1147, 30
  %v1149 = vsub.s32 %v1145, %v1148
  %vm1150 = vcmp.lt.s32.totalorder %v1149, 0
  %v1151 = vsub.s32 0, %v1149
  %v1152 = vsel %vm1150, %v1151, %v1149
  %v1153 = vclz %v1152
  %v1154 = vsub.s32 %v1153, 2
  %vm1155 = vcmp.gt.s32.totalorder 0, %v1154
  %v1156 = vsel %vm1155, 0, %v1154
  %v1157 = vsub.s32 32, %v1156
  %v1158 = vshll.u32 %v1149, %v1156
  %v1159 = vshrl.u32 %v1141, %v1157
  %v1160 = vor.u32 %v1158, %v1159
  %v1161 = vsub.s32 4294967266, %v1156
  %v1162 = vadd.s32 %v1161, 127
  %v1163 = vshll.u32 %v1162, 23
  %v1164 = vor.u32 4788187, %v1163
  %v1165 = vand.u32 2147483647, %v1164
  %v1167 = vcvt.s32.f32 %v1160
  %v1168 = vmul.f32 %v1167, %v1165
  %v1169 = vxor.u32 %v1168, 2147483648
  %v1170 = vsel %vm1087, %v1169, %v1168
  %v1171 = vsub.s32 4, %v1147
  %v1172 = vsel %vm1087, %v1171, %v1147
  %v1173 = vsel %vm1086, %v119, %v1170
  %v1174 = vsel %vm1086, 0, %v1172
  %v1175 = vcosq.f32.pop %v1173
  %v1176 = vsinq.f32.pop %v1173
  %vm1177 = vweird.f32 %v119
  %v1178 = vand.u32 %v1174, 3
  %vm1179 = vcmp.lt.s32.totalorder %v1178, 2
  %vm1180 = vcmp.eq.s32.totalorder %v1178, 0
  %v1181 = vxor.u32 %v1176, 2147483648
  %v1182 = vsel %vm1180, %v1175, %v1181
  %vm1183 = vcmp.eq.s32.totalorder %v1178, 2
  %v1184 = vxor.u32 %v1175, 2147483648
  %v1185 = vsel %vm1183, %v1184, %v1176
  %v1186 = vsel %vm1179, %v1182, %v1185
  %v1187 = vsel %vm1177, nan, %v1186
  %v1188 = vand.u32 2147483647, %v120
  %vm1189 = vcmp.le.f32.partialorder %v1188, 0.7853982
  %vm1190 = vcmp.lt.s32.totalorder %v120, 0
  %v1191 = vand.u32 %v120, 2139095040
  %v1192 = vshrl.u32 %v1191, 23
  %v1193 = vsub.s32 %v1192, 127
  %v1194 = vand.u32 2147483647, %v120
  %v1195 = vand.u32 %v1194, 8388607
  %v1196 = vor.u32 %v1195, 8388608
  %v1197 = vsub.s32 0, %v1196
  %v1198 = vadd.s32 %v1193, 1
  %vm1199 = vcmp.gt.s32.totalorder %v1198, 0
  %v1200 = vsel %vm1199, %v1198, 0
  %v1201 = vshrl.u32 %v1200, 5
  %v1202 = vand.u32 %v1200, 31
  %v1203 = vsub.s32 32, %v1202
  %v1204 = vshrl.u32 683565275, %v1203
  %v1205 = vshll.u32 683565275, %v1202
  %v1206 = vshrl.u32 2475754826, %v1203
  %v1207 = vor.u32 %v1205, %v1206
  %v1208 = vshll.u32 2475754826, %v1202
  %v1209 = vshrl.u32 2131351028, %v1203
  %v1210 = vor.u32 %v1208, %v1209
  %v1211 = vshll.u32 2131351028, %v1202
  %v1212 = vshrl.u32 2102212464, %v1203
  %v1213 = vor.u32 %v1211, %v1212
  %v1214 = vshll.u32 2102212464, %v1202
  %v1215 = vshrl.u32 920167782, %v1203
  %v1216 = vor.u32 %v1214, %v1215
  %v1217 = vshll.u32 920167782, %v1202
  %v1218 = vshrl.u32 1326507024, %v1203
  %v1219 = vor.u32 %v1217, %v1218
  %vm1220 = vcmp.lt.s32.totalorder %v1201, 1
  %vm1221 = vcmp.lt.s32.totalorder %v1201, 2
  %vm1222 = vcmp.lt.s32.totalorder %v1201, 3
  %vm1223 = vcmp.lt.s32.totalorder %v1201, 4
  %v1224 = vsel %vm1220, %v1204, %v1207
  %v1225 = vsel %vm1223, %v1213, 2102212464
  %v1226 = vsel %vm1222, %v1210, %v1225
  %v1227 = vsel %vm1221, %v1224, %v1226
  %v1228 = vsel %vm1220, %v1207, %v1210
  %v1229 = vsel %vm1223, %v1216, 920167782
  %v1230 = vsel %vm1222, %v1213, %v1229
  %v1231 = vsel %vm1221, %v1228, %v1230
  %v1232 = vsel %vm1220, %v1210, %v1213
  %v1233 = vsel %vm1223, %v1219, 1326507024
  %v1234 = vsel %vm1222, %v1216, %v1233
  %v1235 = vsel %vm1221, %v1232, %v1234
  %v1236 = vshll.u32 %v1196, 8
  %v1237 = vmul.u32.u64.compose %v1236, %v1235
  %v1238 = vextract.low.u32 %v1237
  %v1239 = vextract.high.u32 %v1237
  %v1240 = vmul.u32.u64.compose %v1236, %v1231
  %v1241 = vextract.low.u32 %v1240
  %v1242 = vextract.high.u32 %v1240
  %v1243 = vmul.u32 %v1236, %v1227
  %v1244 = vadd.s32 %v1239, %v1241
  %vm1245 = vc.u32 %v1239, %v1241
  %v1246 = vadd.s32 %v1242, 1
  %v1247 = vsel %vm1245, %v1246, %v1242
  %v1248 = vadd.s32 %v1243, %v1247
  %v1249 = vadd.s32 %v1248, 536870912
  %v1250 = vshrl.u32 %v1249, 30
  %v1251 = vshll.u32 %v1250, 30
  %v1252 = vsub.s32 %v1248, %v1251
  %vm1253 = vcmp.lt.s32.totalorder %v1252, 0
  %v1254 = vsub.s32 0, %v1252
  %v1255 = vsel %vm1253, %v1254, %v1252
  %v1256 = vclz %v1255
  %v1257 = vsub.s32 %v1256, 2
  %vm1258 = vcmp.gt.s32.totalorder 0, %v1257
  %v1259 = vsel %vm1258, 0, %v1257
  %v1260 = vsub.s32 32, %v1259
  %v1261 = vshll.u32 %v1252, %v1259
  %v1262 = vshrl.u32 %v1244, %v1260
  %v1263 = vor.u32 %v1261, %v1262
  %v1264 = vsub.s32 4294967266, %v1259
  %v1265 = vadd.s32 %v1264, 127
  %v1266 = vshll.u32 %v1265, 23
  %v1267 = vor.u32 4788187, %v1266
  %v1268 = vand.u32 2147483647, %v1267
  %v1270 = vcvt.s32.f32 %v1263
  %v1271 = vmul.f32 %v1270, %v1268
  %v1272 = vxor.u32 %v1271, 2147483648
  %v1273 = vsel %vm1190, %v1272, %v1271
  %v1274 = vsub.s32 4, %v1250
  %v1275 = vsel %vm1190, %v1274, %v1250
  %v1276 = vsel %vm1189, %v120, %v1273
  %v1277 = vsel %vm1189, 0, %v1275
  %v1278 = vcosq.f32.pop %v1276
  %v1279 = vsinq.f32.pop %v1276
  %vm1280 = vweird.f32 %v120
  %v1281 = vand.u32 %v1277, 3
  %vm1282 = vcmp.lt.s32.totalorder %v1281, 2
  %vm1283 = vcmp.eq.s32.totalorder %v1281, 0
  %v1284 = vxor.u32 %v1279, 2147483648
  %v1285 = vsel %vm1283, %v1278, %v1284
  %vm1286 = vcmp.eq.s32.totalorder %v1281, 2
  %v1287 = vxor.u32 %v1278, 2147483648
  %v1288 = vsel %vm1286, %v1287, %v1279
  %v1289 = vsel %vm1282, %v1285, %v1288
  %v1290 = vsel %vm1280, nan, %v1289
  %v1291 = vand.u32 2147483647, %v121
  %vm1292 = vcmp.le.f32.partialorder %v1291, 0.7853982
  %vm1293 = vcmp.lt.s32.totalorder %v121, 0
  %v1294 = vand.u32 %v121, 2139095040
  %v1295 = vshrl.u32 %v1294, 23
  %v1296 = vsub.s32 %v1295, 127
  %v1297 = vand.u32 2147483647, %v121
  %v1298 = vand.u32 %v1297, 8388607
  %v1299 = vor.u32 %v1298, 8388608
  %v1300 = vsub.s32 0, %v1299
  %v1301 = vadd.s32 %v1296, 1
  %vm1302 = vcmp.gt.s32.totalorder %v1301, 0
  %v1303 = vsel %vm1302, %v1301, 0
  %v1304 = vshrl.u32 %v1303, 5
  %v1305 = vand.u32 %v1303, 31
  %v1306 = vsub.s32 32, %v1305
  %v1307 = vshrl.u32 683565275, %v1306
  %v1308 = vshll.u32 683565275, %v1305
  %v1309 = vshrl.u32 2475754826, %v1306
  %v1310 = vor.u32 %v1308, %v1309
  %v1311 = vshll.u32 2475754826, %v1305
  %v1312 = vshrl.u32 2131351028, %v1306
  %v1313 = vor.u32 %v1311, %v1312
  %v1314 = vshll.u32 2131351028, %v1305
  %v1315 = vshrl.u32 2102212464, %v1306
  %v1316 = vor.u32 %v1314, %v1315
  %v1317 = vshll.u32 2102212464, %v1305
  %v1318 = vshrl.u32 920167782, %v1306
  %v1319 = vor.u32 %v1317, %v1318
  %v1320 = vshll.u32 920167782, %v1305
  %v1321 = vshrl.u32 1326507024, %v1306
  %v1322 = vor.u32 %v1320, %v1321
  %vm1323 = vcmp.lt.s32.totalorder %v1304, 1
  %vm1324 = vcmp.lt.s32.totalorder %v1304, 2
  %vm1325 = vcmp.lt.s32.totalorder %v1304, 3
  %vm1326 = vcmp.lt.s32.totalorder %v1304, 4
  %v1327 = vsel %vm1323, %v1307, %v1310
  %v1328 = vsel %vm1326, %v1316, 2102212464
  %v1329 = vsel %vm1325, %v1313, %v1328
  %v1330 = vsel %vm1324, %v1327, %v1329
  %v1331 = vsel %vm1323, %v1310, %v1313
  %v1332 = vsel %vm1326, %v1319, 920167782
  %v1333 = vsel %vm1325, %v1316, %v1332
  %v1334 = vsel %vm1324, %v1331, %v1333
  %v1335 = vsel %vm1323, %v1313, %v1316
  %v1336 = vsel %vm1326, %v1322, 1326507024
  %v1337 = vsel %vm1325, %v1319, %v1336
  %v1338 = vsel %vm1324, %v1335, %v1337
  %v1339 = vshll.u32 %v1299, 8
  %v1340 = vmul.u32.u64.compose %v1339, %v1338
  %v1341 = vextract.low.u32 %v1340
  %v1342 = vextract.high.u32 %v1340
  %v1343 = vmul.u32.u64.compose %v1339, %v1334
  %v1344 = vextract.low.u32 %v1343
  %v1345 = vextract.high.u32 %v1343
  %v1346 = vmul.u32 %v1339, %v1330
  %v1347 = vadd.s32 %v1342, %v1344
  %vm1348 = vc.u32 %v1342, %v1344
  %v1349 = vadd.s32 %v1345, 1
  %v1350 = vsel %vm1348, %v1349, %v1345
  %v1351 = vadd.s32 %v1346, %v1350
  %v1352 = vadd.s32 %v1351, 536870912
  %v1353 = vshrl.u32 %v1352, 30
  %v1354 = vshll.u32 %v1353, 30
  %v1355 = vsub.s32 %v1351, %v1354
  %vm1356 = vcmp.lt.s32.totalorder %v1355, 0
  %v1357 = vsub.s32 0, %v1355
  %v1358 = vsel %vm1356, %v1357, %v1355
  %v1359 = vclz %v1358
  %v1360 = vsub.s32 %v1359, 2
  %vm1361 = vcmp.gt.s32.totalorder 0, %v1360
  %v1362 = vsel %vm1361, 0, %v1360
  %v1363 = vsub.s32 32, %v1362
  %v1364 = vshll.u32 %v1355, %v1362
  %v1365 = vshrl.u32 %v1347, %v1363
  %v1366 = vor.u32 %v1364, %v1365
  %v1367 = vsub.s32 4294967266, %v1362
  %v1368 = vadd.s32 %v1367, 127
  %v1369 = vshll.u32 %v1368, 23
  %v1370 = vor.u32 4788187, %v1369
  %v1371 = vand.u32 2147483647, %v1370
  %v1373 = vcvt.s32.f32 %v1366
  %v1374 = vmul.f32 %v1373, %v1371
  %v1375 = vxor.u32 %v1374, 2147483648
  %v1376 = vsel %vm1293, %v1375, %v1374
  %v1377 = vsub.s32 4, %v1353
  %v1378 = vsel %vm1293, %v1377, %v1353
  %v1379 = vsel %vm1292, %v121, %v1376
  %v1380 = vsel %vm1292, 0, %v1378
  %v1381 = vcosq.f32.pop %v1379
  %v1382 = vsinq.f32.pop %v1379
  %vm1383 = vweird.f32 %v121
  %v1384 = vand.u32 %v1380, 3
  %vm1385 = vcmp.lt.s32.totalorder %v1384, 2
  %vm1386 = vcmp.eq.s32.totalorder %v1384, 0
  %v1387 = vxor.u32 %v1382, 2147483648
  %v1388 = vsel %vm1386, %v1381, %v1387
  %vm1389 = vcmp.eq.s32.totalorder %v1384, 2
  %v1390 = vxor.u32 %v1381, 2147483648
  %v1391 = vsel %vm1389, %v1390, %v1382
  %v1392 = vsel %vm1385, %v1388, %v1391
  %v1393 = vsel %vm1383, nan, %v1392
  %v1394 = vand.u32 2147483647, %v122
  %vm1395 = vcmp.le.f32.partialorder %v1394, 0.7853982
  %vm1396 = vcmp.lt.s32.totalorder %v122, 0
  %v1397 = vand.u32 %v122, 2139095040
  %v1398 = vshrl.u32 %v1397, 23
  %v1399 = vsub.s32 %v1398, 127
  %v1400 = vand.u32 2147483647, %v122
  %v1401 = vand.u32 %v1400, 8388607
  %v1402 = vor.u32 %v1401, 8388608
  %v1403 = vsub.s32 0, %v1402
  %v1404 = vadd.s32 %v1399, 1
  %vm1405 = vcmp.gt.s32.totalorder %v1404, 0
  %v1406 = vsel %vm1405, %v1404, 0
  %v1407 = vshrl.u32 %v1406, 5
  %v1408 = vand.u32 %v1406, 31
  %v1409 = vsub.s32 32, %v1408
  %v1410 = vshrl.u32 683565275, %v1409
  %v1411 = vshll.u32 683565275, %v1408
  %v1412 = vshrl.u32 2475754826, %v1409
  %v1413 = vor.u32 %v1411, %v1412
  %v1414 = vshll.u32 2475754826, %v1408
  %v1415 = vshrl.u32 2131351028, %v1409
  %v1416 = vor.u32 %v1414, %v1415
  %v1417 = vshll.u32 2131351028, %v1408
  %v1418 = vshrl.u32 2102212464, %v1409
  %v1419 = vor.u32 %v1417, %v1418
  %v1420 = vshll.u32 2102212464, %v1408
  %v1421 = vshrl.u32 920167782, %v1409
  %v1422 = vor.u32 %v1420, %v1421
  %v1423 = vshll.u32 920167782, %v1408
  %v1424 = vshrl.u32 1326507024, %v1409
  %v1425 = vor.u32 %v1423, %v1424
  %vm1426 = vcmp.lt.s32.totalorder %v1407, 1
  %vm1427 = vcmp.lt.s32.totalorder %v1407, 2
  %vm1428 = vcmp.lt.s32.totalorder %v1407, 3
  %vm1429 = vcmp.lt.s32.totalorder %v1407, 4
  %v1430 = vsel %vm1426, %v1410, %v1413
  %v1431 = vsel %vm1429, %v1419, 2102212464
  %v1432 = vsel %vm1428, %v1416, %v1431
  %v1433 = vsel %vm1427, %v1430, %v1432
  %v1434 = vsel %vm1426, %v1413, %v1416
  %v1435 = vsel %vm1429, %v1422, 920167782
  %v1436 = vsel %vm1428, %v1419, %v1435
  %v1437 = vsel %vm1427, %v1434, %v1436
  %v1438 = vsel %vm1426, %v1416, %v1419
  %v1439 = vsel %vm1429, %v1425, 1326507024
  %v1440 = vsel %vm1428, %v1422, %v1439
  %v1441 = vsel %vm1427, %v1438, %v1440
  %v1442 = vshll.u32 %v1402, 8
  %v1443 = vmul.u32.u64.compose %v1442, %v1441
  %v1444 = vextract.low.u32 %v1443
  %v1445 = vextract.high.u32 %v1443
  %v1446 = vmul.u32.u64.compose %v1442, %v1437
  %v1447 = vextract.low.u32 %v1446
  %v1448 = vextract.high.u32 %v1446
  %v1449 = vmul.u32 %v1442, %v1433
  %v1450 = vadd.s32 %v1445, %v1447
  %vm1451 = vc.u32 %v1445, %v1447
  %v1452 = vadd.s32 %v1448, 1
  %v1453 = vsel %vm1451, %v1452, %v1448
  %v1454 = vadd.s32 %v1449, %v1453
  %v1455 = vadd.s32 %v1454, 536870912
  %v1456 = vshrl.u32 %v1455, 30
  %v1457 = vshll.u32 %v1456, 30
  %v1458 = vsub.s32 %v1454, %v1457
  %vm1459 = vcmp.lt.s32.totalorder %v1458, 0
  %v1460 = vsub.s32 0, %v1458
  %v1461 = vsel %vm1459, %v1460, %v1458
  %v1462 = vclz %v1461
  %v1463 = vsub.s32 %v1462, 2
  %vm1464 = vcmp.gt.s32.totalorder 0, %v1463
  %v1465 = vsel %vm1464, 0, %v1463
  %v1466 = vsub.s32 32, %v1465
  %v1467 = vshll.u32 %v1458, %v1465
  %v1468 = vshrl.u32 %v1450, %v1466
  %v1469 = vor.u32 %v1467, %v1468
  %v1470 = vsub.s32 4294967266, %v1465
  %v1471 = vadd.s32 %v1470, 127
  %v1472 = vshll.u32 %v1471, 23
  %v1473 = vor.u32 4788187, %v1472
  %v1474 = vand.u32 2147483647, %v1473
  %v1476 = vcvt.s32.f32 %v1469
  %v1477 = vmul.f32 %v1476, %v1474
  %v1478 = vxor.u32 %v1477, 2147483648
  %v1479 = vsel %vm1396, %v1478, %v1477
  %v1480 = vsub.s32 4, %v1456
  %v1481 = vsel %vm1396, %v1480, %v1456
  %v1482 = vsel %vm1395, %v122, %v1479
  %v1483 = vsel %vm1395, 0, %v1481
  %v1484 = vcosq.f32.pop %v1482
  %v1485 = vsinq.f32.pop %v1482
  %vm1486 = vweird.f32 %v122
  %v1487 = vand.u32 %v1483, 3
  %vm1488 = vcmp.lt.s32.totalorder %v1487, 2
  %vm1489 = vcmp.eq.s32.totalorder %v1487, 0
  %v1490 = vxor.u32 %v1485, 2147483648
  %v1491 = vsel %vm1489, %v1484, %v1490
  %vm1492 = vcmp.eq.s32.totalorder %v1487, 2
  %v1493 = vxor.u32 %v1484, 2147483648
  %v1494 = vsel %vm1492, %v1493, %v1485
  %v1495 = vsel %vm1488, %v1491, %v1494
  %v1496 = vsel %vm1486, nan, %v1495
  %v1497 = vand.u32 2147483647, %v123
  %vm1498 = vcmp.le.f32.partialorder %v1497, 0.7853982
  %vm1499 = vcmp.lt.s32.totalorder %v123, 0
  %v1500 = vand.u32 %v123, 2139095040
  %v1501 = vshrl.u32 %v1500, 23
  %v1502 = vsub.s32 %v1501, 127
  %v1503 = vand.u32 2147483647, %v123
  %v1504 = vand.u32 %v1503, 8388607
  %v1505 = vor.u32 %v1504, 8388608
  %v1506 = vsub.s32 0, %v1505
  %v1507 = vadd.s32 %v1502, 1
  %vm1508 = vcmp.gt.s32.totalorder %v1507, 0
  %v1509 = vsel %vm1508, %v1507, 0
  %v1510 = vshrl.u32 %v1509, 5
  %v1511 = vand.u32 %v1509, 31
  %v1512 = vsub.s32 32, %v1511
  %v1513 = vshrl.u32 683565275, %v1512
  %v1514 = vshll.u32 683565275, %v1511
  %v1515 = vshrl.u32 2475754826, %v1512
  %v1516 = vor.u32 %v1514, %v1515
  %v1517 = vshll.u32 2475754826, %v1511
  %v1518 = vshrl.u32 2131351028, %v1512
  %v1519 = vor.u32 %v1517, %v1518
  %v1520 = vshll.u32 2131351028, %v1511
  %v1521 = vshrl.u32 2102212464, %v1512
  %v1522 = vor.u32 %v1520, %v1521
  %v1523 = vshll.u32 2102212464, %v1511
  %v1524 = vshrl.u32 920167782, %v1512
  %v1525 = vor.u32 %v1523, %v1524
  %v1526 = vshll.u32 920167782, %v1511
  %v1527 = vshrl.u32 1326507024, %v1512
  %v1528 = vor.u32 %v1526, %v1527
  %vm1529 = vcmp.lt.s32.totalorder %v1510, 1
  %vm1530 = vcmp.lt.s32.totalorder %v1510, 2
  %vm1531 = vcmp.lt.s32.totalorder %v1510, 3
  %vm1532 = vcmp.lt.s32.totalorder %v1510, 4
  %v1533 = vsel %vm1529, %v1513, %v1516
  %v1534 = vsel %vm1532, %v1522, 2102212464
  %v1535 = vsel %vm1531, %v1519, %v1534
  %v1536 = vsel %vm1530, %v1533, %v1535
  %v1537 = vsel %vm1529, %v1516, %v1519
  %v1538 = vsel %vm1532, %v1525, 920167782
  %v1539 = vsel %vm1531, %v1522, %v1538
  %v1540 = vsel %vm1530, %v1537, %v1539
  %v1541 = vsel %vm1529, %v1519, %v1522
  %v1542 = vsel %vm1532, %v1528, 1326507024
  %v1543 = vsel %vm1531, %v1525, %v1542
  %v1544 = vsel %vm1530, %v1541, %v1543
  %v1545 = vshll.u32 %v1505, 8
  %v1546 = vmul.u32.u64.compose %v1545, %v1544
  %v1547 = vextract.low.u32 %v1546
  %v1548 = vextract.high.u32 %v1546
  %v1549 = vmul.u32.u64.compose %v1545, %v1540
  %v1550 = vextract.low.u32 %v1549
  %v1551 = vextract.high.u32 %v1549
  %v1552 = vmul.u32 %v1545, %v1536
  %v1553 = vadd.s32 %v1548, %v1550
  %vm1554 = vc.u32 %v1548, %v1550
  %v1555 = vadd.s32 %v1551, 1
  %v1556 = vsel %vm1554, %v1555, %v1551
  %v1557 = vadd.s32 %v1552, %v1556
  %v1558 = vadd.s32 %v1557, 536870912
  %v1559 = vshrl.u32 %v1558, 30
  %v1560 = vshll.u32 %v1559, 30
  %v1561 = vsub.s32 %v1557, %v1560
  %vm1562 = vcmp.lt.s32.totalorder %v1561, 0
  %v1563 = vsub.s32 0, %v1561
  %v1564 = vsel %vm1562, %v1563, %v1561
  %v1565 = vclz %v1564
  %v1566 = vsub.s32 %v1565, 2
  %vm1567 = vcmp.gt.s32.totalorder 0, %v1566
  %v1568 = vsel %vm1567, 0, %v1566
  %v1569 = vsub.s32 32, %v1568
  %v1570 = vshll.u32 %v1561, %v1568
  %v1571 = vshrl.u32 %v1553, %v1569
  %v1572 = vor.u32 %v1570, %v1571
  %v1573 = vsub.s32 4294967266, %v1568
  %v1574 = vadd.s32 %v1573, 127
  %v1575 = vshll.u32 %v1574, 23
  %v1576 = vor.u32 4788187, %v1575
  %v1577 = vand.u32 2147483647, %v1576
  %v1579 = vcvt.s32.f32 %v1572
  %v1580 = vmul.f32 %v1579, %v1577
  %v1581 = vxor.u32 %v1580, 2147483648
  %v1582 = vsel %vm1499, %v1581, %v1580
  %v1583 = vsub.s32 4, %v1559
  %v1584 = vsel %vm1499, %v1583, %v1559
  %v1585 = vsel %vm1498, %v123, %v1582
  %v1586 = vsel %vm1498, 0, %v1584
  %v1587 = vcosq.f32.pop %v1585
  %v1588 = vsinq.f32.pop %v1585
  %vm1589 = vweird.f32 %v123
  %v1590 = vand.u32 %v1586, 3
  %vm1591 = vcmp.lt.s32.totalorder %v1590, 2
  %vm1592 = vcmp.eq.s32.totalorder %v1590, 0
  %v1593 = vxor.u32 %v1588, 2147483648
  %v1594 = vsel %vm1592, %v1587, %v1593
  %vm1595 = vcmp.eq.s32.totalorder %v1590, 2
  %v1596 = vxor.u32 %v1587, 2147483648
  %v1597 = vsel %vm1595, %v1596, %v1588
  %v1598 = vsel %vm1591, %v1594, %v1597
  %v1599 = vsel %vm1589, nan, %v1598
  %v1600 = vand.u32 2147483647, %v124
  %vm1601 = vcmp.le.f32.partialorder %v1600, 0.7853982
  %vm1602 = vcmp.lt.s32.totalorder %v124, 0
  %v1603 = vand.u32 %v124, 2139095040
  %v1604 = vshrl.u32 %v1603, 23
  %v1605 = vsub.s32 %v1604, 127
  %v1606 = vand.u32 2147483647, %v124
  %v1607 = vand.u32 %v1606, 8388607
  %v1608 = vor.u32 %v1607, 8388608
  %v1609 = vsub.s32 0, %v1608
  %v1610 = vadd.s32 %v1605, 1
  %vm1611 = vcmp.gt.s32.totalorder %v1610, 0
  %v1612 = vsel %vm1611, %v1610, 0
  %v1613 = vshrl.u32 %v1612, 5
  %v1614 = vand.u32 %v1612, 31
  %v1615 = vsub.s32 32, %v1614
  %v1616 = vshrl.u32 683565275, %v1615
  %v1617 = vshll.u32 683565275, %v1614
  %v1618 = vshrl.u32 2475754826, %v1615
  %v1619 = vor.u32 %v1617, %v1618
  %v1620 = vshll.u32 2475754826, %v1614
  %v1621 = vshrl.u32 2131351028, %v1615
  %v1622 = vor.u32 %v1620, %v1621
  %v1623 = vshll.u32 2131351028, %v1614
  %v1624 = vshrl.u32 2102212464, %v1615
  %v1625 = vor.u32 %v1623, %v1624
  %v1626 = vshll.u32 2102212464, %v1614
  %v1627 = vshrl.u32 920167782, %v1615
  %v1628 = vor.u32 %v1626, %v1627
  %v1629 = vshll.u32 920167782, %v1614
  %v1630 = vshrl.u32 1326507024, %v1615
  %v1631 = vor.u32 %v1629, %v1630
  %vm1632 = vcmp.lt.s32.totalorder %v1613, 1
  %vm1633 = vcmp.lt.s32.totalorder %v1613, 2
  %vm1634 = vcmp.lt.s32.totalorder %v1613, 3
  %vm1635 = vcmp.lt.s32.totalorder %v1613, 4
  %v1636 = vsel %vm1632, %v1616, %v1619
  %v1637 = vsel %vm1635, %v1625, 2102212464
  %v1638 = vsel %vm1634, %v1622, %v1637
  %v1639 = vsel %vm1633, %v1636, %v1638
  %v1640 = vsel %vm1632, %v1619, %v1622
  %v1641 = vsel %vm1635, %v1628, 920167782
  %v1642 = vsel %vm1634, %v1625, %v1641
  %v1643 = vsel %vm1633, %v1640, %v1642
  %v1644 = vsel %vm1632, %v1622, %v1625
  %v1645 = vsel %vm1635, %v1631, 1326507024
  %v1646 = vsel %vm1634, %v1628, %v1645
  %v1647 = vsel %vm1633, %v1644, %v1646
  %v1648 = vshll.u32 %v1608, 8
  %v1649 = vmul.u32.u64.compose %v1648, %v1647
  %v1650 = vextract.low.u32 %v1649
  %v1651 = vextract.high.u32 %v1649
  %v1652 = vmul.u32.u64.compose %v1648, %v1643
  %v1653 = vextract.low.u32 %v1652
  %v1654 = vextract.high.u32 %v1652
  %v1655 = vmul.u32 %v1648, %v1639
  %v1656 = vadd.s32 %v1651, %v1653
  %vm1657 = vc.u32 %v1651, %v1653
  %v1658 = vadd.s32 %v1654, 1
  %v1659 = vsel %vm1657, %v1658, %v1654
  %v1660 = vadd.s32 %v1655, %v1659
  %v1661 = vadd.s32 %v1660, 536870912
  %v1662 = vshrl.u32 %v1661, 30
  %v1663 = vshll.u32 %v1662, 30
  %v1664 = vsub.s32 %v1660, %v1663
  %vm1665 = vcmp.lt.s32.totalorder %v1664, 0
  %v1666 = vsub.s32 0, %v1664
  %v1667 = vsel %vm1665, %v1666, %v1664
  %v1668 = vclz %v1667
  %v1669 = vsub.s32 %v1668, 2
  %vm1670 = vcmp.gt.s32.totalorder 0, %v1669
  %v1671 = vsel %vm1670, 0, %v1669
  %v1672 = vsub.s32 32, %v1671
  %v1673 = vshll.u32 %v1664, %v1671
  %v1674 = vshrl.u32 %v1656, %v1672
  %v1675 = vor.u32 %v1673, %v1674
  %v1676 = vsub.s32 4294967266, %v1671
  %v1677 = vadd.s32 %v1676, 127
  %v1678 = vshll.u32 %v1677, 23
  %v1679 = vor.u32 4788187, %v1678
  %v1680 = vand.u32 2147483647, %v1679
  %v1682 = vcvt.s32.f32 %v1675
  %v1683 = vmul.f32 %v1682, %v1680
  %v1684 = vxor.u32 %v1683, 2147483648
  %v1685 = vsel %vm1602, %v1684, %v1683
  %v1686 = vsub.s32 4, %v1662
  %v1687 = vsel %vm1602, %v1686, %v1662
  %v1688 = vsel %vm1601, %v124, %v1685
  %v1689 = vsel %vm1601, 0, %v1687
  %v1690 = vcosq.f32.pop %v1688
  %v1691 = vsinq.f32.pop %v1688
  %vm1692 = vweird.f32 %v124
  %v1693 = vand.u32 %v1689, 3
  %vm1694 = vcmp.lt.s32.totalorder %v1693, 2
  %vm1695 = vcmp.eq.s32.totalorder %v1693, 0
  %v1696 = vxor.u32 %v1691, 2147483648
  %v1697 = vsel %vm1695, %v1690, %v1696
  %vm1698 = vcmp.eq.s32.totalorder %v1693, 2
  %v1699 = vxor.u32 %v1690, 2147483648
  %v1700 = vsel %vm1698, %v1699, %v1691
  %v1701 = vsel %vm1694, %v1697, %v1700
  %v1702 = vsel %vm1692, nan, %v1701
  %v1703 = vand.u32 2147483647, %v125
  %vm1704 = vcmp.le.f32.partialorder %v1703, 0.7853982
  %vm1705 = vcmp.lt.s32.totalorder %v125, 0
  %v1706 = vand.u32 %v125, 2139095040
  %v1707 = vshrl.u32 %v1706, 23
  %v1708 = vsub.s32 %v1707, 127
  %v1709 = vand.u32 2147483647, %v125
  %v1710 = vand.u32 %v1709, 8388607
  %v1711 = vor.u32 %v1710, 8388608
  %v1712 = vsub.s32 0, %v1711
  %v1713 = vadd.s32 %v1708, 1
  %vm1714 = vcmp.gt.s32.totalorder %v1713, 0
  %v1715 = vsel %vm1714, %v1713, 0
  %v1716 = vshrl.u32 %v1715, 5
  %v1717 = vand.u32 %v1715, 31
  %v1718 = vsub.s32 32, %v1717
  %v1719 = vshrl.u32 683565275, %v1718
  %v1720 = vshll.u32 683565275, %v1717
  %v1721 = vshrl.u32 2475754826, %v1718
  %v1722 = vor.u32 %v1720, %v1721
  %v1723 = vshll.u32 2475754826, %v1717
  %v1724 = vshrl.u32 2131351028, %v1718
  %v1725 = vor.u32 %v1723, %v1724
  %v1726 = vshll.u32 2131351028, %v1717
  %v1727 = vshrl.u32 2102212464, %v1718
  %v1728 = vor.u32 %v1726, %v1727
  %v1729 = vshll.u32 2102212464, %v1717
  %v1730 = vshrl.u32 920167782, %v1718
  %v1731 = vor.u32 %v1729, %v1730
  %v1732 = vshll.u32 920167782, %v1717
  %v1733 = vshrl.u32 1326507024, %v1718
  %v1734 = vor.u32 %v1732, %v1733
  %vm1735 = vcmp.lt.s32.totalorder %v1716, 1
  %vm1736 = vcmp.lt.s32.totalorder %v1716, 2
  %vm1737 = vcmp.lt.s32.totalorder %v1716, 3
  %vm1738 = vcmp.lt.s32.totalorder %v1716, 4
  %v1739 = vsel %vm1735, %v1719, %v1722
  %v1740 = vsel %vm1738, %v1728, 2102212464
  %v1741 = vsel %vm1737, %v1725, %v1740
  %v1742 = vsel %vm1736, %v1739, %v1741
  %v1743 = vsel %vm1735, %v1722, %v1725
  %v1744 = vsel %vm1738, %v1731, 920167782
  %v1745 = vsel %vm1737, %v1728, %v1744
  %v1746 = vsel %vm1736, %v1743, %v1745
  %v1747 = vsel %vm1735, %v1725, %v1728
  %v1748 = vsel %vm1738, %v1734, 1326507024
  %v1749 = vsel %vm1737, %v1731, %v1748
  %v1750 = vsel %vm1736, %v1747, %v1749
  %v1751 = vshll.u32 %v1711, 8
  %v1752 = vmul.u32.u64.compose %v1751, %v1750
  %v1753 = vextract.low.u32 %v1752
  %v1754 = vextract.high.u32 %v1752
  %v1755 = vmul.u32.u64.compose %v1751, %v1746
  %v1756 = vextract.low.u32 %v1755
  %v1757 = vextract.high.u32 %v1755
  %v1758 = vmul.u32 %v1751, %v1742
  %v1759 = vadd.s32 %v1754, %v1756
  %vm1760 = vc.u32 %v1754, %v1756
  %v1761 = vadd.s32 %v1757, 1
  %v1762 = vsel %vm1760, %v1761, %v1757
  %v1763 = vadd.s32 %v1758, %v1762
  %v1764 = vadd.s32 %v1763, 536870912
  %v1765 = vshrl.u32 %v1764, 30
  %v1766 = vshll.u32 %v1765, 30
  %v1767 = vsub.s32 %v1763, %v1766
  %vm1768 = vcmp.lt.s32.totalorder %v1767, 0
  %v1769 = vsub.s32 0, %v1767
  %v1770 = vsel %vm1768, %v1769, %v1767
  %v1771 = vclz %v1770
  %v1772 = vsub.s32 %v1771, 2
  %vm1773 = vcmp.gt.s32.totalorder 0, %v1772
  %v1774 = vsel %vm1773, 0, %v1772
  %v1775 = vsub.s32 32, %v1774
  %v1776 = vshll.u32 %v1767, %v1774
  %v1777 = vshrl.u32 %v1759, %v1775
  %v1778 = vor.u32 %v1776, %v1777
  %v1779 = vsub.s32 4294967266, %v1774
  %v1780 = vadd.s32 %v1779, 127
  %v1781 = vshll.u32 %v1780, 23
  %v1782 = vor.u32 4788187, %v1781
  %v1783 = vand.u32 2147483647, %v1782
  %v1785 = vcvt.s32.f32 %v1778
  %v1786 = vmul.f32 %v1785, %v1783
  %v1787 = vxor.u32 %v1786, 2147483648
  %v1788 = vsel %vm1705, %v1787, %v1786
  %v1789 = vsub.s32 4, %v1765
  %v1790 = vsel %vm1705, %v1789, %v1765
  %v1791 = vsel %vm1704, %v125, %v1788
  %v1792 = vsel %vm1704, 0, %v1790
  %v1793 = vcosq.f32.pop %v1791
  %v1794 = vsinq.f32.pop %v1791
  %vm1795 = vweird.f32 %v125
  %v1796 = vand.u32 %v1792, 3
  %vm1797 = vcmp.lt.s32.totalorder %v1796, 2
  %vm1798 = vcmp.eq.s32.totalorder %v1796, 0
  %v1799 = vxor.u32 %v1794, 2147483648
  %v1800 = vsel %vm1798, %v1793, %v1799
  %vm1801 = vcmp.eq.s32.totalorder %v1796, 2
  %v1802 = vxor.u32 %v1793, 2147483648
  %v1803 = vsel %vm1801, %v1802, %v1794
  %v1804 = vsel %vm1797, %v1800, %v1803
  %v1805 = vsel %vm1795, nan, %v1804
  %v1806 = vand.u32 2147483647, %v126
  %vm1807 = vcmp.le.f32.partialorder %v1806, 0.7853982
  %vm1808 = vcmp.lt.s32.totalorder %v126, 0
  %v1809 = vand.u32 %v126, 2139095040
  %v1810 = vshrl.u32 %v1809, 23
  %v1811 = vsub.s32 %v1810, 127
  %v1812 = vand.u32 2147483647, %v126
  %v1813 = vand.u32 %v1812, 8388607
  %v1814 = vor.u32 %v1813, 8388608
  %v1815 = vsub.s32 0, %v1814
  %v1816 = vadd.s32 %v1811, 1
  %vm1817 = vcmp.gt.s32.totalorder %v1816, 0
  %v1818 = vsel %vm1817, %v1816, 0
  %v1819 = vshrl.u32 %v1818, 5
  %v1820 = vand.u32 %v1818, 31
  %v1821 = vsub.s32 32, %v1820
  %v1822 = vshrl.u32 683565275, %v1821
  %v1823 = vshll.u32 683565275, %v1820
  %v1824 = vshrl.u32 2475754826, %v1821
  %v1825 = vor.u32 %v1823, %v1824
  %v1826 = vshll.u32 2475754826, %v1820
  %v1827 = vshrl.u32 2131351028, %v1821
  %v1828 = vor.u32 %v1826, %v1827
  %v1829 = vshll.u32 2131351028, %v1820
  %v1830 = vshrl.u32 2102212464, %v1821
  %v1831 = vor.u32 %v1829, %v1830
  %v1832 = vshll.u32 2102212464, %v1820
  %v1833 = vshrl.u32 920167782, %v1821
  %v1834 = vor.u32 %v1832, %v1833
  %v1835 = vshll.u32 920167782, %v1820
  %v1836 = vshrl.u32 1326507024, %v1821
  %v1837 = vor.u32 %v1835, %v1836
  %vm1838 = vcmp.lt.s32.totalorder %v1819, 1
  %vm1839 = vcmp.lt.s32.totalorder %v1819, 2
  %vm1840 = vcmp.lt.s32.totalorder %v1819, 3
  %vm1841 = vcmp.lt.s32.totalorder %v1819, 4
  %v1842 = vsel %vm1838, %v1822, %v1825
  %v1843 = vsel %vm1841, %v1831, 2102212464
  %v1844 = vsel %vm1840, %v1828, %v1843
  %v1845 = vsel %vm1839, %v1842, %v1844
  %v1846 = vsel %vm1838, %v1825, %v1828
  %v1847 = vsel %vm1841, %v1834, 920167782
  %v1848 = vsel %vm1840, %v1831, %v1847
  %v1849 = vsel %vm1839, %v1846, %v1848
  %v1850 = vsel %vm1838, %v1828, %v1831
  %v1851 = vsel %vm1841, %v1837, 1326507024
  %v1852 = vsel %vm1840, %v1834, %v1851
  %v1853 = vsel %vm1839, %v1850, %v1852
  %v1854 = vshll.u32 %v1814, 8
  %v1855 = vmul.u32.u64.compose %v1854, %v1853
  %v1856 = vextract.low.u32 %v1855
  %v1857 = vextract.high.u32 %v1855
  %v1858 = vmul.u32.u64.compose %v1854, %v1849
  %v1859 = vextract.low.u32 %v1858
  %v1860 = vextract.high.u32 %v1858
  %v1861 = vmul.u32 %v1854, %v1845
  %v1862 = vadd.s32 %v1857, %v1859
  %vm1863 = vc.u32 %v1857, %v1859
  %v1864 = vadd.s32 %v1860, 1
  %v1865 = vsel %vm1863, %v1864, %v1860
  %v1866 = vadd.s32 %v1861, %v1865
  %v1867 = vadd.s32 %v1866, 536870912
  %v1868 = vshrl.u32 %v1867, 30
  %v1869 = vshll.u32 %v1868, 30
  %v1870 = vsub.s32 %v1866, %v1869
  %vm1871 = vcmp.lt.s32.totalorder %v1870, 0
  %v1872 = vsub.s32 0, %v1870
  %v1873 = vsel %vm1871, %v1872, %v1870
  %v1874 = vclz %v1873
  %v1875 = vsub.s32 %v1874, 2
  %vm1876 = vcmp.gt.s32.totalorder 0, %v1875
  %v1877 = vsel %vm1876, 0, %v1875
  %v1878 = vsub.s32 32, %v1877
  %v1879 = vshll.u32 %v1870, %v1877
  %v1880 = vshrl.u32 %v1862, %v1878
  %v1881 = vor.u32 %v1879, %v1880
  %v1882 = vsub.s32 4294967266, %v1877
  %v1883 = vadd.s32 %v1882, 127
  %v1884 = vshll.u32 %v1883, 23
  %v1885 = vor.u32 4788187, %v1884
  %v1886 = vand.u32 2147483647, %v1885
  %v1888 = vcvt.s32.f32 %v1881
  %v1889 = vmul.f32 %v1888, %v1886
  %v1890 = vxor.u32 %v1889, 2147483648
  %v1891 = vsel %vm1808, %v1890, %v1889
  %v1892 = vsub.s32 4, %v1868
  %v1893 = vsel %vm1808, %v1892, %v1868
  %v1894 = vsel %vm1807, %v126, %v1891
  %v1895 = vsel %vm1807, 0, %v1893
  %v1896 = vcosq.f32.pop %v1894
  %v1897 = vsinq.f32.pop %v1894
  %vm1898 = vweird.f32 %v126
  %v1899 = vand.u32 %v1895, 3
  %vm1900 = vcmp.lt.s32.totalorder %v1899, 2
  %vm1901 = vcmp.eq.s32.totalorder %v1899, 0
  %v1902 = vxor.u32 %v1897, 2147483648
  %v1903 = vsel %vm1901, %v1896, %v1902
  %vm1904 = vcmp.eq.s32.totalorder %v1899, 2
  %v1905 = vxor.u32 %v1896, 2147483648
  %v1906 = vsel %vm1904, %v1905, %v1897
  %v1907 = vsel %vm1900, %v1903, %v1906
  %v1908 = vsel %vm1898, nan, %v1907
  %v1909 = vand.u32 2147483647, %v127
  %vm1910 = vcmp.le.f32.partialorder %v1909, 0.7853982
  %vm1911 = vcmp.lt.s32.totalorder %v127, 0
  %v1912 = vand.u32 %v127, 2139095040
  %v1913 = vshrl.u32 %v1912, 23
  %v1914 = vsub.s32 %v1913, 127
  %v1915 = vand.u32 2147483647, %v127
  %v1916 = vand.u32 %v1915, 8388607
  %v1917 = vor.u32 %v1916, 8388608
  %v1918 = vsub.s32 0, %v1917
  %v1919 = vadd.s32 %v1914, 1
  %vm1920 = vcmp.gt.s32.totalorder %v1919, 0
  %v1921 = vsel %vm1920, %v1919, 0
  %v1922 = vshrl.u32 %v1921, 5
  %v1923 = vand.u32 %v1921, 31
  %v1924 = vsub.s32 32, %v1923
  %v1925 = vshrl.u32 683565275, %v1924
  %v1926 = vshll.u32 683565275, %v1923
  %v1927 = vshrl.u32 2475754826, %v1924
  %v1928 = vor.u32 %v1926, %v1927
  %v1929 = vshll.u32 2475754826, %v1923
  %v1930 = vshrl.u32 2131351028, %v1924
  %v1931 = vor.u32 %v1929, %v1930
  %v1932 = vshll.u32 2131351028, %v1923
  %v1933 = vshrl.u32 2102212464, %v1924
  %v1934 = vor.u32 %v1932, %v1933
  %v1935 = vshll.u32 2102212464, %v1923
  %v1936 = vshrl.u32 920167782, %v1924
  %v1937 = vor.u32 %v1935, %v1936
  %v1938 = vshll.u32 920167782, %v1923
  %v1939 = vshrl.u32 1326507024, %v1924
  %v1940 = vor.u32 %v1938, %v1939
  %vm1941 = vcmp.lt.s32.totalorder %v1922, 1
  %vm1942 = vcmp.lt.s32.totalorder %v1922, 2
  %vm1943 = vcmp.lt.s32.totalorder %v1922, 3
  %vm1944 = vcmp.lt.s32.totalorder %v1922, 4
  %v1945 = vsel %vm1941, %v1925, %v1928
  %v1946 = vsel %vm1944, %v1934, 2102212464
  %v1947 = vsel %vm1943, %v1931, %v1946
  %v1948 = vsel %vm1942, %v1945, %v1947
  %v1949 = vsel %vm1941, %v1928, %v1931
  %v1950 = vsel %vm1944, %v1937, 920167782
  %v1951 = vsel %vm1943, %v1934, %v1950
  %v1952 = vsel %vm1942, %v1949, %v1951
  %v1953 = vsel %vm1941, %v1931, %v1934
  %v1954 = vsel %vm1944, %v1940, 1326507024
  %v1955 = vsel %vm1943, %v1937, %v1954
  %v1956 = vsel %vm1942, %v1953, %v1955
  %v1957 = vshll.u32 %v1917, 8
  %v1958 = vmul.u32.u64.compose %v1957, %v1956
  %v1959 = vextract.low.u32 %v1958
  %v1960 = vextract.high.u32 %v1958
  %v1961 = vmul.u32.u64.compose %v1957, %v1952
  %v1962 = vextract.low.u32 %v1961
  %v1963 = vextract.high.u32 %v1961
  %v1964 = vmul.u32 %v1957, %v1948
  %v1965 = vadd.s32 %v1960, %v1962
  %vm1966 = vc.u32 %v1960, %v1962
  %v1967 = vadd.s32 %v1963, 1
  %v1968 = vsel %vm1966, %v1967, %v1963
  %v1969 = vadd.s32 %v1964, %v1968
  %v1970 = vadd.s32 %v1969, 536870912
  %v1971 = vshrl.u32 %v1970, 30
  %v1972 = vshll.u32 %v1971, 30
  %v1973 = vsub.s32 %v1969, %v1972
  %vm1974 = vcmp.lt.s32.totalorder %v1973, 0
  %v1975 = vsub.s32 0, %v1973
  %v1976 = vsel %vm1974, %v1975, %v1973
  %v1977 = vclz %v1976
  %v1978 = vsub.s32 %v1977, 2
  %vm1979 = vcmp.gt.s32.totalorder 0, %v1978
  %v1980 = vsel %vm1979, 0, %v1978
  %v1981 = vsub.s32 32, %v1980
  %v1982 = vshll.u32 %v1973, %v1980
  %v1983 = vshrl.u32 %v1965, %v1981
  %v1984 = vor.u32 %v1982, %v1983
  %v1985 = vsub.s32 4294967266, %v1980
  %v1986 = vadd.s32 %v1985, 127
  %v1987 = vshll.u32 %v1986, 23
  %v1988 = vor.u32 4788187, %v1987
  %v1989 = vand.u32 2147483647, %v1988
  %v1991 = vcvt.s32.f32 %v1984
  %v1992 = vmul.f32 %v1991, %v1989
  %v1993 = vxor.u32 %v1992, 2147483648
  %v1994 = vsel %vm1911, %v1993, %v1992
  %v1995 = vsub.s32 4, %v1971
  %v1996 = vsel %vm1911, %v1995, %v1971
  %v1997 = vsel %vm1910, %v127, %v1994
  %v1998 = vsel %vm1910, 0, %v1996
  %v1999 = vcosq.f32.pop %v1997
  %v2000 = vsinq.f32.pop %v1997
  %vm2001 = vweird.f32 %v127
  %v2002 = vand.u32 %v1998, 3
  %vm2003 = vcmp.lt.s32.totalorder %v2002, 2
  %vm2004 = vcmp.eq.s32.totalorder %v2002, 0
  %v2005 = vxor.u32 %v2000, 2147483648
  %v2006 = vsel %vm2004, %v1999, %v2005
  %vm2007 = vcmp.eq.s32.totalorder %v2002, 2
  %v2008 = vxor.u32 %v1999, 2147483648
  %v2009 = vsel %vm2007, %v2008, %v2000
  %v2010 = vsel %vm2003, %v2006, %v2009
  %v2011 = vsel %vm2001, nan, %v2010
  %v2012 = vand.u32 2147483647, %v128
  %vm2013 = vcmp.le.f32.partialorder %v2012, 0.7853982
  %vm2014 = vcmp.lt.s32.totalorder %v128, 0
  %v2015 = vand.u32 %v128, 2139095040
  %v2016 = vshrl.u32 %v2015, 23
  %v2017 = vsub.s32 %v2016, 127
  %v2018 = vand.u32 2147483647, %v128
  %v2019 = vand.u32 %v2018, 8388607
  %v2020 = vor.u32 %v2019, 8388608
  %v2021 = vsub.s32 0, %v2020
  %v2022 = vadd.s32 %v2017, 1
  %vm2023 = vcmp.gt.s32.totalorder %v2022, 0
  %v2024 = vsel %vm2023, %v2022, 0
  %v2025 = vshrl.u32 %v2024, 5
  %v2026 = vand.u32 %v2024, 31
  %v2027 = vsub.s32 32, %v2026
  %v2028 = vshrl.u32 683565275, %v2027
  %v2029 = vshll.u32 683565275, %v2026
  %v2030 = vshrl.u32 2475754826, %v2027
  %v2031 = vor.u32 %v2029, %v2030
  %v2032 = vshll.u32 2475754826, %v2026
  %v2033 = vshrl.u32 2131351028, %v2027
  %v2034 = vor.u32 %v2032, %v2033
  %v2035 = vshll.u32 2131351028, %v2026
  %v2036 = vshrl.u32 2102212464, %v2027
  %v2037 = vor.u32 %v2035, %v2036
  %v2038 = vshll.u32 2102212464, %v2026
  %v2039 = vshrl.u32 920167782, %v2027
  %v2040 = vor.u32 %v2038, %v2039
  %v2041 = vshll.u32 920167782, %v2026
  %v2042 = vshrl.u32 1326507024, %v2027
  %v2043 = vor.u32 %v2041, %v2042
  %vm2044 = vcmp.lt.s32.totalorder %v2025, 1
  %vm2045 = vcmp.lt.s32.totalorder %v2025, 2
  %vm2046 = vcmp.lt.s32.totalorder %v2025, 3
  %vm2047 = vcmp.lt.s32.totalorder %v2025, 4
  %v2048 = vsel %vm2044, %v2028, %v2031
  %v2049 = vsel %vm2047, %v2037, 2102212464
  %v2050 = vsel %vm2046, %v2034, %v2049
  %v2051 = vsel %vm2045, %v2048, %v2050
  %v2052 = vsel %vm2044, %v2031, %v2034
  %v2053 = vsel %vm2047, %v2040, 920167782
  %v2054 = vsel %vm2046, %v2037, %v2053
  %v2055 = vsel %vm2045, %v2052, %v2054
  %v2056 = vsel %vm2044, %v2034, %v2037
  %v2057 = vsel %vm2047, %v2043, 1326507024
  %v2058 = vsel %vm2046, %v2040, %v2057
  %v2059 = vsel %vm2045, %v2056, %v2058
  %v2060 = vshll.u32 %v2020, 8
  %v2061 = vmul.u32.u64.compose %v2060, %v2059
  %v2062 = vextract.low.u32 %v2061
  %v2063 = vextract.high.u32 %v2061
  %v2064 = vmul.u32.u64.compose %v2060, %v2055
  %v2065 = vextract.low.u32 %v2064
  %v2066 = vextract.high.u32 %v2064
  %v2067 = vmul.u32 %v2060, %v2051
  %v2068 = vadd.s32 %v2063, %v2065
  %vm2069 = vc.u32 %v2063, %v2065
  %v2070 = vadd.s32 %v2066, 1
  %v2071 = vsel %vm2069, %v2070, %v2066
  %v2072 = vadd.s32 %v2067, %v2071
  %v2073 = vadd.s32 %v2072, 536870912
  %v2074 = vshrl.u32 %v2073, 30
  %v2075 = vshll.u32 %v2074, 30
  %v2076 = vsub.s32 %v2072, %v2075
  %vm2077 = vcmp.lt.s32.totalorder %v2076, 0
  %v2078 = vsub.s32 0, %v2076
  %v2079 = vsel %vm2077, %v2078, %v2076
  %v2080 = vclz %v2079
  %v2081 = vsub.s32 %v2080, 2
  %vm2082 = vcmp.gt.s32.totalorder 0, %v2081
  %v2083 = vsel %vm2082, 0, %v2081
  %v2084 = vsub.s32 32, %v2083
  %v2085 = vshll.u32 %v2076, %v2083
  %v2086 = vshrl.u32 %v2068, %v2084
  %v2087 = vor.u32 %v2085, %v2086
  %v2088 = vsub.s32 4294967266, %v2083
  %v2089 = vadd.s32 %v2088, 127
  %v2090 = vshll.u32 %v2089, 23
  %v2091 = vor.u32 4788187, %v2090
  %v2092 = vand.u32 2147483647, %v2091
  %v2094 = vcvt.s32.f32 %v2087
  %v2095 = vmul.f32 %v2094, %v2092
  %v2096 = vxor.u32 %v2095, 2147483648
  %v2097 = vsel %vm2014, %v2096, %v2095
  %v2098 = vsub.s32 4, %v2074
  %v2099 = vsel %vm2014, %v2098, %v2074
  %v2100 = vsel %vm2013, %v128, %v2097
  %v2101 = vsel %vm2013, 0, %v2099
  %v2102 = vcosq.f32.pop %v2100
  %v2103 = vsinq.f32.pop %v2100
  %vm2104 = vweird.f32 %v128
  %v2105 = vand.u32 %v2101, 3
  %vm2106 = vcmp.lt.s32.totalorder %v2105, 2
  %vm2107 = vcmp.eq.s32.totalorder %v2105, 0
  %v2108 = vxor.u32 %v2103, 2147483648
  %v2109 = vsel %vm2107, %v2102, %v2108
  %vm2110 = vcmp.eq.s32.totalorder %v2105, 2
  %v2111 = vxor.u32 %v2102, 2147483648
  %v2112 = vsel %vm2110, %v2111, %v2103
  %v2113 = vsel %vm2106, %v2109, %v2112
  %v2114 = vsel %vm2104, nan, %v2113
  %v2115 = vand.u32 2147483647, %v129
  %vm2116 = vcmp.le.f32.partialorder %v2115, 0.7853982
  %vm2117 = vcmp.lt.s32.totalorder %v129, 0
  %v2118 = vand.u32 %v129, 2139095040
  %v2119 = vshrl.u32 %v2118, 23
  %v2120 = vsub.s32 %v2119, 127
  %v2121 = vand.u32 2147483647, %v129
  %v2122 = vand.u32 %v2121, 8388607
  %v2123 = vor.u32 %v2122, 8388608
  %v2124 = vsub.s32 0, %v2123
  %v2125 = vadd.s32 %v2120, 1
  %vm2126 = vcmp.gt.s32.totalorder %v2125, 0
  %v2127 = vsel %vm2126, %v2125, 0
  %v2128 = vshrl.u32 %v2127, 5
  %v2129 = vand.u32 %v2127, 31
  %v2130 = vsub.s32 32, %v2129
  %v2131 = vshrl.u32 683565275, %v2130
  %v2132 = vshll.u32 683565275, %v2129
  %v2133 = vshrl.u32 2475754826, %v2130
  %v2134 = vor.u32 %v2132, %v2133
  %v2135 = vshll.u32 2475754826, %v2129
  %v2136 = vshrl.u32 2131351028, %v2130
  %v2137 = vor.u32 %v2135, %v2136
  %v2138 = vshll.u32 2131351028, %v2129
  %v2139 = vshrl.u32 2102212464, %v2130
  %v2140 = vor.u32 %v2138, %v2139
  %v2141 = vshll.u32 2102212464, %v2129
  %v2142 = vshrl.u32 920167782, %v2130
  %v2143 = vor.u32 %v2141, %v2142
  %v2144 = vshll.u32 920167782, %v2129
  %v2145 = vshrl.u32 1326507024, %v2130
  %v2146 = vor.u32 %v2144, %v2145
  %vm2147 = vcmp.lt.s32.totalorder %v2128, 1
  %vm2148 = vcmp.lt.s32.totalorder %v2128, 2
  %vm2149 = vcmp.lt.s32.totalorder %v2128, 3
  %vm2150 = vcmp.lt.s32.totalorder %v2128, 4
  %v2151 = vsel %vm2147, %v2131, %v2134
  %v2152 = vsel %vm2150, %v2140, 2102212464
  %v2153 = vsel %vm2149, %v2137, %v2152
  %v2154 = vsel %vm2148, %v2151, %v2153
  %v2155 = vsel %vm2147, %v2134, %v2137
  %v2156 = vsel %vm2150, %v2143, 920167782
  %v2157 = vsel %vm2149, %v2140, %v2156
  %v2158 = vsel %vm2148, %v2155, %v2157
  %v2159 = vsel %vm2147, %v2137, %v2140
  %v2160 = vsel %vm2150, %v2146, 1326507024
  %v2161 = vsel %vm2149, %v2143, %v2160
  %v2162 = vsel %vm2148, %v2159, %v2161
  %v2163 = vshll.u32 %v2123, 8
  %v2164 = vmul.u32.u64.compose %v2163, %v2162
  %v2165 = vextract.low.u32 %v2164
  %v2166 = vextract.high.u32 %v2164
  %v2167 = vmul.u32.u64.compose %v2163, %v2158
  %v2168 = vextract.low.u32 %v2167
  %v2169 = vextract.high.u32 %v2167
  %v2170 = vmul.u32 %v2163, %v2154
  %v2171 = vadd.s32 %v2166, %v2168
  %vm2172 = vc.u32 %v2166, %v2168
  %v2173 = vadd.s32 %v2169, 1
  %v2174 = vsel %vm2172, %v2173, %v2169
  %v2175 = vadd.s32 %v2170, %v2174
  %v2176 = vadd.s32 %v2175, 536870912
  %v2177 = vshrl.u32 %v2176, 30
  %v2178 = vshll.u32 %v2177, 30
  %v2179 = vsub.s32 %v2175, %v2178
  %vm2180 = vcmp.lt.s32.totalorder %v2179, 0
  %v2181 = vsub.s32 0, %v2179
  %v2182 = vsel %vm2180, %v2181, %v2179
  %v2183 = vclz %v2182
  %v2184 = vsub.s32 %v2183, 2
  %vm2185 = vcmp.gt.s32.totalorder 0, %v2184
  %v2186 = vsel %vm2185, 0, %v2184
  %v2187 = vsub.s32 32, %v2186
  %v2188 = vshll.u32 %v2179, %v2186
  %v2189 = vshrl.u32 %v2171, %v2187
  %v2190 = vor.u32 %v2188, %v2189
  %v2191 = vsub.s32 4294967266, %v2186
  %v2192 = vadd.s32 %v2191, 127
  %v2193 = vshll.u32 %v2192, 23
  %v2194 = vor.u32 4788187, %v2193
  %v2195 = vand.u32 2147483647, %v2194
  %v2197 = vcvt.s32.f32 %v2190
  %v2198 = vmul.f32 %v2197, %v2195
  %v2199 = vxor.u32 %v2198, 2147483648
  %v2200 = vsel %vm2117, %v2199, %v2198
  %v2201 = vsub.s32 4, %v2177
  %v2202 = vsel %vm2117, %v2201, %v2177
  %v2203 = vsel %vm2116, %v129, %v2200
  %v2204 = vsel %vm2116, 0, %v2202
  %v2205 = vcosq.f32.pop %v2203
  %v2206 = vsinq.f32.pop %v2203
  %vm2207 = vweird.f32 %v129
  %v2208 = vand.u32 %v2204, 3
  %vm2209 = vcmp.lt.s32.totalorder %v2208, 2
  %vm2210 = vcmp.eq.s32.totalorder %v2208, 0
  %v2211 = vxor.u32 %v2206, 2147483648
  %v2212 = vsel %vm2210, %v2205, %v2211
  %vm2213 = vcmp.eq.s32.totalorder %v2208, 2
  %v2214 = vxor.u32 %v2205, 2147483648
  %v2215 = vsel %vm2213, %v2214, %v2206
  %v2216 = vsel %vm2209, %v2212, %v2215
  %v2217 = vsel %vm2207, nan, %v2216
  %v2218 = vand.u32 2147483647, %v130
  %vm2219 = vcmp.le.f32.partialorder %v2218, 0.7853982
  %vm2220 = vcmp.lt.s32.totalorder %v130, 0
  %v2221 = vand.u32 %v130, 2139095040
  %v2222 = vshrl.u32 %v2221, 23
  %v2223 = vsub.s32 %v2222, 127
  %v2224 = vand.u32 2147483647, %v130
  %v2225 = vand.u32 %v2224, 8388607
  %v2226 = vor.u32 %v2225, 8388608
  %v2227 = vsub.s32 0, %v2226
  %v2228 = vadd.s32 %v2223, 1
  %vm2229 = vcmp.gt.s32.totalorder %v2228, 0
  %v2230 = vsel %vm2229, %v2228, 0
  %v2231 = vshrl.u32 %v2230, 5
  %v2232 = vand.u32 %v2230, 31
  %v2233 = vsub.s32 32, %v2232
  %v2234 = vshrl.u32 683565275, %v2233
  %v2235 = vshll.u32 683565275, %v2232
  %v2236 = vshrl.u32 2475754826, %v2233
  %v2237 = vor.u32 %v2235, %v2236
  %v2238 = vshll.u32 2475754826, %v2232
  %v2239 = vshrl.u32 2131351028, %v2233
  %v2240 = vor.u32 %v2238, %v2239
  %v2241 = vshll.u32 2131351028, %v2232
  %v2242 = vshrl.u32 2102212464, %v2233
  %v2243 = vor.u32 %v2241, %v2242
  %v2244 = vshll.u32 2102212464, %v2232
  %v2245 = vshrl.u32 920167782, %v2233
  %v2246 = vor.u32 %v2244, %v2245
  %v2247 = vshll.u32 920167782, %v2232
  %v2248 = vshrl.u32 1326507024, %v2233
  %v2249 = vor.u32 %v2247, %v2248
  %vm2250 = vcmp.lt.s32.totalorder %v2231, 1
  %vm2251 = vcmp.lt.s32.totalorder %v2231, 2
  %vm2252 = vcmp.lt.s32.totalorder %v2231, 3
  %vm2253 = vcmp.lt.s32.totalorder %v2231, 4
  %v2254 = vsel %vm2250, %v2234, %v2237
  %v2255 = vsel %vm2253, %v2243, 2102212464
  %v2256 = vsel %vm2252, %v2240, %v2255
  %v2257 = vsel %vm2251, %v2254, %v2256
  %v2258 = vsel %vm2250, %v2237, %v2240
  %v2259 = vsel %vm2253, %v2246, 920167782
  %v2260 = vsel %vm2252, %v2243, %v2259
  %v2261 = vsel %vm2251, %v2258, %v2260
  %v2262 = vsel %vm2250, %v2240, %v2243
  %v2263 = vsel %vm2253, %v2249, 1326507024
  %v2264 = vsel %vm2252, %v2246, %v2263
  %v2265 = vsel %vm2251, %v2262, %v2264
  %v2266 = vshll.u32 %v2226, 8
  %v2267 = vmul.u32.u64.compose %v2266, %v2265
  %v2268 = vextract.low.u32 %v2267
  %v2269 = vextract.high.u32 %v2267
  %v2270 = vmul.u32.u64.compose %v2266, %v2261
  %v2271 = vextract.low.u32 %v2270
  %v2272 = vextract.high.u32 %v2270
  %v2273 = vmul.u32 %v2266, %v2257
  %v2274 = vadd.s32 %v2269, %v2271
  %vm2275 = vc.u32 %v2269, %v2271
  %v2276 = vadd.s32 %v2272, 1
  %v2277 = vsel %vm2275, %v2276, %v2272
  %v2278 = vadd.s32 %v2273, %v2277
  %v2279 = vadd.s32 %v2278, 536870912
  %v2280 = vshrl.u32 %v2279, 30
  %v2281 = vshll.u32 %v2280, 30
  %v2282 = vsub.s32 %v2278, %v2281
  %vm2283 = vcmp.lt.s32.totalorder %v2282, 0
  %v2284 = vsub.s32 0, %v2282
  %v2285 = vsel %vm2283, %v2284, %v2282
  %v2286 = vclz %v2285
  %v2287 = vsub.s32 %v2286, 2
  %vm2288 = vcmp.gt.s32.totalorder 0, %v2287
  %v2289 = vsel %vm2288, 0, %v2287
  %v2290 = vsub.s32 32, %v2289
  %v2291 = vshll.u32 %v2282, %v2289
  %v2292 = vshrl.u32 %v2274, %v2290
  %v2293 = vor.u32 %v2291, %v2292
  %v2294 = vsub.s32 4294967266, %v2289
  %v2295 = vadd.s32 %v2294, 127
  %v2296 = vshll.u32 %v2295, 23
  %v2297 = vor.u32 4788187, %v2296
  %v2298 = vand.u32 2147483647, %v2297
  %v2300 = vcvt.s32.f32 %v2293
  %v2301 = vmul.f32 %v2300, %v2298
  %v2302 = vxor.u32 %v2301, 2147483648
  %v2303 = vsel %vm2220, %v2302, %v2301
  %v2304 = vsub.s32 4, %v2280
  %v2305 = vsel %vm2220, %v2304, %v2280
  %v2306 = vsel %vm2219, %v130, %v2303
  %v2307 = vsel %vm2219, 0, %v2305
  %v2308 = vcosq.f32.pop %v2306
  %v2309 = vsinq.f32.pop %v2306
  %vm2310 = vweird.f32 %v130
  %v2311 = vand.u32 %v2307, 3
  %vm2312 = vcmp.lt.s32.totalorder %v2311, 2
  %vm2313 = vcmp.eq.s32.totalorder %v2311, 0
  %v2314 = vxor.u32 %v2309, 2147483648
  %v2315 = vsel %vm2313, %v2308, %v2314
  %vm2316 = vcmp.eq.s32.totalorder %v2311, 2
  %v2317 = vxor.u32 %v2308, 2147483648
  %v2318 = vsel %vm2316, %v2317, %v2309
  %v2319 = vsel %vm2312, %v2315, %v2318
  %v2320 = vsel %vm2310, nan, %v2319
  %v2321 = vand.u32 2147483647, %v131
  %vm2322 = vcmp.le.f32.partialorder %v2321, 0.7853982
  %vm2323 = vcmp.lt.s32.totalorder %v131, 0
  %v2324 = vand.u32 %v131, 2139095040
  %v2325 = vshrl.u32 %v2324, 23
  %v2326 = vsub.s32 %v2325, 127
  %v2327 = vand.u32 2147483647, %v131
  %v2328 = vand.u32 %v2327, 8388607
  %v2329 = vor.u32 %v2328, 8388608
  %v2330 = vsub.s32 0, %v2329
  %v2331 = vadd.s32 %v2326, 1
  %vm2332 = vcmp.gt.s32.totalorder %v2331, 0
  %v2333 = vsel %vm2332, %v2331, 0
  %v2334 = vshrl.u32 %v2333, 5
  %v2335 = vand.u32 %v2333, 31
  %v2336 = vsub.s32 32, %v2335
  %v2337 = vshrl.u32 683565275, %v2336
  %v2338 = vshll.u32 683565275, %v2335
  %v2339 = vshrl.u32 2475754826, %v2336
  %v2340 = vor.u32 %v2338, %v2339
  %v2341 = vshll.u32 2475754826, %v2335
  %v2342 = vshrl.u32 2131351028, %v2336
  %v2343 = vor.u32 %v2341, %v2342
  %v2344 = vshll.u32 2131351028, %v2335
  %v2345 = vshrl.u32 2102212464, %v2336
  %v2346 = vor.u32 %v2344, %v2345
  %v2347 = vshll.u32 2102212464, %v2335
  %v2348 = vshrl.u32 920167782, %v2336
  %v2349 = vor.u32 %v2347, %v2348
  %v2350 = vshll.u32 920167782, %v2335
  %v2351 = vshrl.u32 1326507024, %v2336
  %v2352 = vor.u32 %v2350, %v2351
  %vm2353 = vcmp.lt.s32.totalorder %v2334, 1
  %vm2354 = vcmp.lt.s32.totalorder %v2334, 2
  %vm2355 = vcmp.lt.s32.totalorder %v2334, 3
  %vm2356 = vcmp.lt.s32.totalorder %v2334, 4
  %v2357 = vsel %vm2353, %v2337, %v2340
  %v2358 = vsel %vm2356, %v2346, 2102212464
  %v2359 = vsel %vm2355, %v2343, %v2358
  %v2360 = vsel %vm2354, %v2357, %v2359
  %v2361 = vsel %vm2353, %v2340, %v2343
  %v2362 = vsel %vm2356, %v2349, 920167782
  %v2363 = vsel %vm2355, %v2346, %v2362
  %v2364 = vsel %vm2354, %v2361, %v2363
  %v2365 = vsel %vm2353, %v2343, %v2346
  %v2366 = vsel %vm2356, %v2352, 1326507024
  %v2367 = vsel %vm2355, %v2349, %v2366
  %v2368 = vsel %vm2354, %v2365, %v2367
  %v2369 = vshll.u32 %v2329, 8
  %v2370 = vmul.u32.u64.compose %v2369, %v2368
  %v2371 = vextract.low.u32 %v2370
  %v2372 = vextract.high.u32 %v2370
  %v2373 = vmul.u32.u64.compose %v2369, %v2364
  %v2374 = vextract.low.u32 %v2373
  %v2375 = vextract.high.u32 %v2373
  %v2376 = vmul.u32 %v2369, %v2360
  %v2377 = vadd.s32 %v2372, %v2374
  %vm2378 = vc.u32 %v2372, %v2374
  %v2379 = vadd.s32 %v2375, 1
  %v2380 = vsel %vm2378, %v2379, %v2375
  %v2381 = vadd.s32 %v2376, %v2380
  %v2382 = vadd.s32 %v2381, 536870912
  %v2383 = vshrl.u32 %v2382, 30
  %v2384 = vshll.u32 %v2383, 30
  %v2385 = vsub.s32 %v2381, %v2384
  %vm2386 = vcmp.lt.s32.totalorder %v2385, 0
  %v2387 = vsub.s32 0, %v2385
  %v2388 = vsel %vm2386, %v2387, %v2385
  %v2389 = vclz %v2388
  %v2390 = vsub.s32 %v2389, 2
  %vm2391 = vcmp.gt.s32.totalorder 0, %v2390
  %v2392 = vsel %vm2391, 0, %v2390
  %v2393 = vsub.s32 32, %v2392
  %v2394 = vshll.u32 %v2385, %v2392
  %v2395 = vshrl.u32 %v2377, %v2393
  %v2396 = vor.u32 %v2394, %v2395
  %v2397 = vsub.s32 4294967266, %v2392
  %v2398 = vadd.s32 %v2397, 127
  %v2399 = vshll.u32 %v2398, 23
  %v2400 = vor.u32 4788187, %v2399
  %v2401 = vand.u32 2147483647, %v2400
  %v2403 = vcvt.s32.f32 %v2396
  %v2404 = vmul.f32 %v2403, %v2401
  %v2405 = vxor.u32 %v2404, 2147483648
  %v2406 = vsel %vm2323, %v2405, %v2404
  %v2407 = vsub.s32 4, %v2383
  %v2408 = vsel %vm2323, %v2407, %v2383
  %v2409 = vsel %vm2322, %v131, %v2406
  %v2410 = vsel %vm2322, 0, %v2408
  %v2411 = vcosq.f32.pop %v2409
  %v2412 = vsinq.f32.pop %v2409
  %vm2413 = vweird.f32 %v131
  %v2414 = vand.u32 %v2410, 3
  %vm2415 = vcmp.lt.s32.totalorder %v2414, 2
  %vm2416 = vcmp.eq.s32.totalorder %v2414, 0
  %v2417 = vxor.u32 %v2412, 2147483648
  %v2418 = vsel %vm2416, %v2411, %v2417
  %vm2419 = vcmp.eq.s32.totalorder %v2414, 2
  %v2420 = vxor.u32 %v2411, 2147483648
  %v2421 = vsel %vm2419, %v2420, %v2412
  %v2422 = vsel %vm2415, %v2418, %v2421
  %v2423 = vsel %vm2413, nan, %v2422
  %v2424 = vand.u32 2147483647, %v132
  %vm2425 = vcmp.le.f32.partialorder %v2424, 0.7853982
  %vm2426 = vcmp.lt.s32.totalorder %v132, 0
  %v2427 = vand.u32 %v132, 2139095040
  %v2428 = vshrl.u32 %v2427, 23
  %v2429 = vsub.s32 %v2428, 127
  %v2430 = vand.u32 2147483647, %v132
  %v2431 = vand.u32 %v2430, 8388607
  %v2432 = vor.u32 %v2431, 8388608
  %v2433 = vsub.s32 0, %v2432
  %v2434 = vadd.s32 %v2429, 1
  %vm2435 = vcmp.gt.s32.totalorder %v2434, 0
  %v2436 = vsel %vm2435, %v2434, 0
  %v2437 = vshrl.u32 %v2436, 5
  %v2438 = vand.u32 %v2436, 31
  %v2439 = vsub.s32 32, %v2438
  %v2440 = vshrl.u32 683565275, %v2439
  %v2441 = vshll.u32 683565275, %v2438
  %v2442 = vshrl.u32 2475754826, %v2439
  %v2443 = vor.u32 %v2441, %v2442
  %v2444 = vshll.u32 2475754826, %v2438
  %v2445 = vshrl.u32 2131351028, %v2439
  %v2446 = vor.u32 %v2444, %v2445
  %v2447 = vshll.u32 2131351028, %v2438
  %v2448 = vshrl.u32 2102212464, %v2439
  %v2449 = vor.u32 %v2447, %v2448
  %v2450 = vshll.u32 2102212464, %v2438
  %v2451 = vshrl.u32 920167782, %v2439
  %v2452 = vor.u32 %v2450, %v2451
  %v2453 = vshll.u32 920167782, %v2438
  %v2454 = vshrl.u32 1326507024, %v2439
  %v2455 = vor.u32 %v2453, %v2454
  %vm2456 = vcmp.lt.s32.totalorder %v2437, 1
  %vm2457 = vcmp.lt.s32.totalorder %v2437, 2
  %vm2458 = vcmp.lt.s32.totalorder %v2437, 3
  %vm2459 = vcmp.lt.s32.totalorder %v2437, 4
  %v2460 = vsel %vm2456, %v2440, %v2443
  %v2461 = vsel %vm2459, %v2449, 2102212464
  %v2462 = vsel %vm2458, %v2446, %v2461
  %v2463 = vsel %vm2457, %v2460, %v2462
  %v2464 = vsel %vm2456, %v2443, %v2446
  %v2465 = vsel %vm2459, %v2452, 920167782
  %v2466 = vsel %vm2458, %v2449, %v2465
  %v2467 = vsel %vm2457, %v2464, %v2466
  %v2468 = vsel %vm2456, %v2446, %v2449
  %v2469 = vsel %vm2459, %v2455, 1326507024
  %v2470 = vsel %vm2458, %v2452, %v2469
  %v2471 = vsel %vm2457, %v2468, %v2470
  %v2472 = vshll.u32 %v2432, 8
  %v2473 = vmul.u32.u64.compose %v2472, %v2471
  %v2474 = vextract.low.u32 %v2473
  %v2475 = vextract.high.u32 %v2473
  %v2476 = vmul.u32.u64.compose %v2472, %v2467
  %v2477 = vextract.low.u32 %v2476
  %v2478 = vextract.high.u32 %v2476
  %v2479 = vmul.u32 %v2472, %v2463
  %v2480 = vadd.s32 %v2475, %v2477
  %vm2481 = vc.u32 %v2475, %v2477
  %v2482 = vadd.s32 %v2478, 1
  %v2483 = vsel %vm2481, %v2482, %v2478
  %v2484 = vadd.s32 %v2479, %v2483
  %v2485 = vadd.s32 %v2484, 536870912
  %v2486 = vshrl.u32 %v2485, 30
  %v2487 = vshll.u32 %v2486, 30
  %v2488 = vsub.s32 %v2484, %v2487
  %vm2489 = vcmp.lt.s32.totalorder %v2488, 0
  %v2490 = vsub.s32 0, %v2488
  %v2491 = vsel %vm2489, %v2490, %v2488
  %v2492 = vclz %v2491
  %v2493 = vsub.s32 %v2492, 2
  %vm2494 = vcmp.gt.s32.totalorder 0, %v2493
  %v2495 = vsel %vm2494, 0, %v2493
  %v2496 = vsub.s32 32, %v2495
  %v2497 = vshll.u32 %v2488, %v2495
  %v2498 = vshrl.u32 %v2480, %v2496
  %v2499 = vor.u32 %v2497, %v2498
  %v2500 = vsub.s32 4294967266, %v2495
  %v2501 = vadd.s32 %v2500, 127
  %v2502 = vshll.u32 %v2501, 23
  %v2503 = vor.u32 4788187, %v2502
  %v2504 = vand.u32 2147483647, %v2503
  %v2506 = vcvt.s32.f32 %v2499
  %v2507 = vmul.f32 %v2506, %v2504
  %v2508 = vxor.u32 %v2507, 2147483648
  %v2509 = vsel %vm2426, %v2508, %v2507
  %v2510 = vsub.s32 4, %v2486
  %v2511 = vsel %vm2426, %v2510, %v2486
  %v2512 = vsel %vm2425, %v132, %v2509
  %v2513 = vsel %vm2425, 0, %v2511
  %v2514 = vcosq.f32.pop %v2512
  %v2515 = vsinq.f32.pop %v2512
  %vm2516 = vweird.f32 %v132
  %v2517 = vand.u32 %v2513, 3
  %vm2518 = vcmp.lt.s32.totalorder %v2517, 2
  %vm2519 = vcmp.eq.s32.totalorder %v2517, 0
  %v2520 = vxor.u32 %v2515, 2147483648
  %v2521 = vsel %vm2519, %v2514, %v2520
  %vm2522 = vcmp.eq.s32.totalorder %v2517, 2
  %v2523 = vxor.u32 %v2514, 2147483648
  %v2524 = vsel %vm2522, %v2523, %v2515
  %v2525 = vsel %vm2518, %v2521, %v2524
  %v2526 = vsel %vm2516, nan, %v2525
  %v2527 = vand.u32 2147483647, %v133
  %vm2528 = vcmp.le.f32.partialorder %v2527, 0.7853982
  %vm2529 = vcmp.lt.s32.totalorder %v133, 0
  %v2530 = vand.u32 %v133, 2139095040
  %v2531 = vshrl.u32 %v2530, 23
  %v2532 = vsub.s32 %v2531, 127
  %v2533 = vand.u32 2147483647, %v133
  %v2534 = vand.u32 %v2533, 8388607
  %v2535 = vor.u32 %v2534, 8388608
  %v2536 = vsub.s32 0, %v2535
  %v2537 = vadd.s32 %v2532, 1
  %vm2538 = vcmp.gt.s32.totalorder %v2537, 0
  %v2539 = vsel %vm2538, %v2537, 0
  %v2540 = vshrl.u32 %v2539, 5
  %v2541 = vand.u32 %v2539, 31
  %v2542 = vsub.s32 32, %v2541
  %v2543 = vshrl.u32 683565275, %v2542
  %v2544 = vshll.u32 683565275, %v2541
  %v2545 = vshrl.u32 2475754826, %v2542
  %v2546 = vor.u32 %v2544, %v2545
  %v2547 = vshll.u32 2475754826, %v2541
  %v2548 = vshrl.u32 2131351028, %v2542
  %v2549 = vor.u32 %v2547, %v2548
  %v2550 = vshll.u32 2131351028, %v2541
  %v2551 = vshrl.u32 2102212464, %v2542
  %v2552 = vor.u32 %v2550, %v2551
  %v2553 = vshll.u32 2102212464, %v2541
  %v2554 = vshrl.u32 920167782, %v2542
  %v2555 = vor.u32 %v2553, %v2554
  %v2556 = vshll.u32 920167782, %v2541
  %v2557 = vshrl.u32 1326507024, %v2542
  %v2558 = vor.u32 %v2556, %v2557
  %vm2559 = vcmp.lt.s32.totalorder %v2540, 1
  %vm2560 = vcmp.lt.s32.totalorder %v2540, 2
  %vm2561 = vcmp.lt.s32.totalorder %v2540, 3
  %vm2562 = vcmp.lt.s32.totalorder %v2540, 4
  %v2563 = vsel %vm2559, %v2543, %v2546
  %v2564 = vsel %vm2562, %v2552, 2102212464
  %v2565 = vsel %vm2561, %v2549, %v2564
  %v2566 = vsel %vm2560, %v2563, %v2565
  %v2567 = vsel %vm2559, %v2546, %v2549
  %v2568 = vsel %vm2562, %v2555, 920167782
  %v2569 = vsel %vm2561, %v2552, %v2568
  %v2570 = vsel %vm2560, %v2567, %v2569
  %v2571 = vsel %vm2559, %v2549, %v2552
  %v2572 = vsel %vm2562, %v2558, 1326507024
  %v2573 = vsel %vm2561, %v2555, %v2572
  %v2574 = vsel %vm2560, %v2571, %v2573
  %v2575 = vshll.u32 %v2535, 8
  %v2576 = vmul.u32.u64.compose %v2575, %v2574
  %v2577 = vextract.low.u32 %v2576
  %v2578 = vextract.high.u32 %v2576
  %v2579 = vmul.u32.u64.compose %v2575, %v2570
  %v2580 = vextract.low.u32 %v2579
  %v2581 = vextract.high.u32 %v2579
  %v2582 = vmul.u32 %v2575, %v2566
  %v2583 = vadd.s32 %v2578, %v2580
  %vm2584 = vc.u32 %v2578, %v2580
  %v2585 = vadd.s32 %v2581, 1
  %v2586 = vsel %vm2584, %v2585, %v2581
  %v2587 = vadd.s32 %v2582, %v2586
  %v2588 = vadd.s32 %v2587, 536870912
  %v2589 = vshrl.u32 %v2588, 30
  %v2590 = vshll.u32 %v2589, 30
  %v2591 = vsub.s32 %v2587, %v2590
  %vm2592 = vcmp.lt.s32.totalorder %v2591, 0
  %v2593 = vsub.s32 0, %v2591
  %v2594 = vsel %vm2592, %v2593, %v2591
  %v2595 = vclz %v2594
  %v2596 = vsub.s32 %v2595, 2
  %vm2597 = vcmp.gt.s32.totalorder 0, %v2596
  %v2598 = vsel %vm2597, 0, %v2596
  %v2599 = vsub.s32 32, %v2598
  %v2600 = vshll.u32 %v2591, %v2598
  %v2601 = vshrl.u32 %v2583, %v2599
  %v2602 = vor.u32 %v2600, %v2601
  %v2603 = vsub.s32 4294967266, %v2598
  %v2604 = vadd.s32 %v2603, 127
  %v2605 = vshll.u32 %v2604, 23
  %v2606 = vor.u32 4788187, %v2605
  %v2607 = vand.u32 2147483647, %v2606
  %v2609 = vcvt.s32.f32 %v2602
  %v2610 = vmul.f32 %v2609, %v2607
  %v2611 = vxor.u32 %v2610, 2147483648
  %v2612 = vsel %vm2529, %v2611, %v2610
  %v2613 = vsub.s32 4, %v2589
  %v2614 = vsel %vm2529, %v2613, %v2589
  %v2615 = vsel %vm2528, %v133, %v2612
  %v2616 = vsel %vm2528, 0, %v2614
  %v2617 = vcosq.f32.pop %v2615
  %v2618 = vsinq.f32.pop %v2615
  %vm2619 = vweird.f32 %v133
  %v2620 = vand.u32 %v2616, 3
  %vm2621 = vcmp.lt.s32.totalorder %v2620, 2
  %vm2622 = vcmp.eq.s32.totalorder %v2620, 0
  %v2623 = vxor.u32 %v2618, 2147483648
  %v2624 = vsel %vm2622, %v2617, %v2623
  %vm2625 = vcmp.eq.s32.totalorder %v2620, 2
  %v2626 = vxor.u32 %v2617, 2147483648
  %v2627 = vsel %vm2625, %v2626, %v2618
  %v2628 = vsel %vm2621, %v2624, %v2627
  %v2629 = vsel %vm2619, nan, %v2628
  %v2630 = vand.u32 2147483647, %v134
  %vm2631 = vcmp.le.f32.partialorder %v2630, 0.7853982
  %vm2632 = vcmp.lt.s32.totalorder %v134, 0
  %v2633 = vand.u32 %v134, 2139095040
  %v2634 = vshrl.u32 %v2633, 23
  %v2635 = vsub.s32 %v2634, 127
  %v2636 = vand.u32 2147483647, %v134
  %v2637 = vand.u32 %v2636, 8388607
  %v2638 = vor.u32 %v2637, 8388608
  %v2639 = vsub.s32 0, %v2638
  %v2640 = vadd.s32 %v2635, 1
  %vm2641 = vcmp.gt.s32.totalorder %v2640, 0
  %v2642 = vsel %vm2641, %v2640, 0
  %v2643 = vshrl.u32 %v2642, 5
  %v2644 = vand.u32 %v2642, 31
  %v2645 = vsub.s32 32, %v2644
  %v2646 = vshrl.u32 683565275, %v2645
  %v2647 = vshll.u32 683565275, %v2644
  %v2648 = vshrl.u32 2475754826, %v2645
  %v2649 = vor.u32 %v2647, %v2648
  %v2650 = vshll.u32 2475754826, %v2644
  %v2651 = vshrl.u32 2131351028, %v2645
  %v2652 = vor.u32 %v2650, %v2651
  %v2653 = vshll.u32 2131351028, %v2644
  %v2654 = vshrl.u32 2102212464, %v2645
  %v2655 = vor.u32 %v2653, %v2654
  %v2656 = vshll.u32 2102212464, %v2644
  %v2657 = vshrl.u32 920167782, %v2645
  %v2658 = vor.u32 %v2656, %v2657
  %v2659 = vshll.u32 920167782, %v2644
  %v2660 = vshrl.u32 1326507024, %v2645
  %v2661 = vor.u32 %v2659, %v2660
  %vm2662 = vcmp.lt.s32.totalorder %v2643, 1
  %vm2663 = vcmp.lt.s32.totalorder %v2643, 2
  %vm2664 = vcmp.lt.s32.totalorder %v2643, 3
  %vm2665 = vcmp.lt.s32.totalorder %v2643, 4
  %v2666 = vsel %vm2662, %v2646, %v2649
  %v2667 = vsel %vm2665, %v2655, 2102212464
  %v2668 = vsel %vm2664, %v2652, %v2667
  %v2669 = vsel %vm2663, %v2666, %v2668
  %v2670 = vsel %vm2662, %v2649, %v2652
  %v2671 = vsel %vm2665, %v2658, 920167782
  %v2672 = vsel %vm2664, %v2655, %v2671
  %v2673 = vsel %vm2663, %v2670, %v2672
  %v2674 = vsel %vm2662, %v2652, %v2655
  %v2675 = vsel %vm2665, %v2661, 1326507024
  %v2676 = vsel %vm2664, %v2658, %v2675
  %v2677 = vsel %vm2663, %v2674, %v2676
  %v2678 = vshll.u32 %v2638, 8
  %v2679 = vmul.u32.u64.compose %v2678, %v2677
  %v2680 = vextract.low.u32 %v2679
  %v2681 = vextract.high.u32 %v2679
  %v2682 = vmul.u32.u64.compose %v2678, %v2673
  %v2683 = vextract.low.u32 %v2682
  %v2684 = vextract.high.u32 %v2682
  %v2685 = vmul.u32 %v2678, %v2669
  %v2686 = vadd.s32 %v2681, %v2683
  %vm2687 = vc.u32 %v2681, %v2683
  %v2688 = vadd.s32 %v2684, 1
  %v2689 = vsel %vm2687, %v2688, %v2684
  %v2690 = vadd.s32 %v2685, %v2689
  %v2691 = vadd.s32 %v2690, 536870912
  %v2692 = vshrl.u32 %v2691, 30
  %v2693 = vshll.u32 %v2692, 30
  %v2694 = vsub.s32 %v2690, %v2693
  %vm2695 = vcmp.lt.s32.totalorder %v2694, 0
  %v2696 = vsub.s32 0, %v2694
  %v2697 = vsel %vm2695, %v2696, %v2694
  %v2698 = vclz %v2697
  %v2699 = vsub.s32 %v2698, 2
  %vm2700 = vcmp.gt.s32.totalorder 0, %v2699
  %v2701 = vsel %vm2700, 0, %v2699
  %v2702 = vsub.s32 32, %v2701
  %v2703 = vshll.u32 %v2694, %v2701
  %v2704 = vshrl.u32 %v2686, %v2702
  %v2705 = vor.u32 %v2703, %v2704
  %v2706 = vsub.s32 4294967266, %v2701
  %v2707 = vadd.s32 %v2706, 127
  %v2708 = vshll.u32 %v2707, 23
  %v2709 = vor.u32 4788187, %v2708
  %v2710 = vand.u32 2147483647, %v2709
  %v2712 = vcvt.s32.f32 %v2705
  %v2713 = vmul.f32 %v2712, %v2710
  %v2714 = vxor.u32 %v2713, 2147483648
  %v2715 = vsel %vm2632, %v2714, %v2713
  %v2716 = vsub.s32 4, %v2692
  %v2717 = vsel %vm2632, %v2716, %v2692
  %v2718 = vsel %vm2631, %v134, %v2715
  %v2719 = vsel %vm2631, 0, %v2717
  %v2720 = vcosq.f32.pop %v2718
  %v2721 = vsinq.f32.pop %v2718
  %vm2722 = vweird.f32 %v134
  %v2723 = vand.u32 %v2719, 3
  %vm2724 = vcmp.lt.s32.totalorder %v2723, 2
  %vm2725 = vcmp.eq.s32.totalorder %v2723, 0
  %v2726 = vxor.u32 %v2721, 2147483648
  %v2727 = vsel %vm2725, %v2720, %v2726
  %vm2728 = vcmp.eq.s32.totalorder %v2723, 2
  %v2729 = vxor.u32 %v2720, 2147483648
  %v2730 = vsel %vm2728, %v2729, %v2721
  %v2731 = vsel %vm2724, %v2727, %v2730
  %v2732 = vsel %vm2722, nan, %v2731
  %v2733 = vand.u32 2147483647, %v135
  %vm2734 = vcmp.le.f32.partialorder %v2733, 0.7853982
  %vm2735 = vcmp.lt.s32.totalorder %v135, 0
  %v2736 = vand.u32 %v135, 2139095040
  %v2737 = vshrl.u32 %v2736, 23
  %v2738 = vsub.s32 %v2737, 127
  %v2739 = vand.u32 2147483647, %v135
  %v2740 = vand.u32 %v2739, 8388607
  %v2741 = vor.u32 %v2740, 8388608
  %v2742 = vsub.s32 0, %v2741
  %v2743 = vadd.s32 %v2738, 1
  %vm2744 = vcmp.gt.s32.totalorder %v2743, 0
  %v2745 = vsel %vm2744, %v2743, 0
  %v2746 = vshrl.u32 %v2745, 5
  %v2747 = vand.u32 %v2745, 31
  %v2748 = vsub.s32 32, %v2747
  %v2749 = vshrl.u32 683565275, %v2748
  %v2750 = vshll.u32 683565275, %v2747
  %v2751 = vshrl.u32 2475754826, %v2748
  %v2752 = vor.u32 %v2750, %v2751
  %v2753 = vshll.u32 2475754826, %v2747
  %v2754 = vshrl.u32 2131351028, %v2748
  %v2755 = vor.u32 %v2753, %v2754
  %v2756 = vshll.u32 2131351028, %v2747
  %v2757 = vshrl.u32 2102212464, %v2748
  %v2758 = vor.u32 %v2756, %v2757
  %v2759 = vshll.u32 2102212464, %v2747
  %v2760 = vshrl.u32 920167782, %v2748
  %v2761 = vor.u32 %v2759, %v2760
  %v2762 = vshll.u32 920167782, %v2747
  %v2763 = vshrl.u32 1326507024, %v2748
  %v2764 = vor.u32 %v2762, %v2763
  %vm2765 = vcmp.lt.s32.totalorder %v2746, 1
  %vm2766 = vcmp.lt.s32.totalorder %v2746, 2
  %vm2767 = vcmp.lt.s32.totalorder %v2746, 3
  %vm2768 = vcmp.lt.s32.totalorder %v2746, 4
  %v2769 = vsel %vm2765, %v2749, %v2752
  %v2770 = vsel %vm2768, %v2758, 2102212464
  %v2771 = vsel %vm2767, %v2755, %v2770
  %v2772 = vsel %vm2766, %v2769, %v2771
  %v2773 = vsel %vm2765, %v2752, %v2755
  %v2774 = vsel %vm2768, %v2761, 920167782
  %v2775 = vsel %vm2767, %v2758, %v2774
  %v2776 = vsel %vm2766, %v2773, %v2775
  %v2777 = vsel %vm2765, %v2755, %v2758
  %v2778 = vsel %vm2768, %v2764, 1326507024
  %v2779 = vsel %vm2767, %v2761, %v2778
  %v2780 = vsel %vm2766, %v2777, %v2779
  %v2781 = vshll.u32 %v2741, 8
  %v2782 = vmul.u32.u64.compose %v2781, %v2780
  %v2783 = vextract.low.u32 %v2782
  %v2784 = vextract.high.u32 %v2782
  %v2785 = vmul.u32.u64.compose %v2781, %v2776
  %v2786 = vextract.low.u32 %v2785
  %v2787 = vextract.high.u32 %v2785
  %v2788 = vmul.u32 %v2781, %v2772
  %v2789 = vadd.s32 %v2784, %v2786
  %vm2790 = vc.u32 %v2784, %v2786
  %v2791 = vadd.s32 %v2787, 1
  %v2792 = vsel %vm2790, %v2791, %v2787
  %v2793 = vadd.s32 %v2788, %v2792
  %v2794 = vadd.s32 %v2793, 536870912
  %v2795 = vshrl.u32 %v2794, 30
  %v2796 = vshll.u32 %v2795, 30
  %v2797 = vsub.s32 %v2793, %v2796
  %vm2798 = vcmp.lt.s32.totalorder %v2797, 0
  %v2799 = vsub.s32 0, %v2797
  %v2800 = vsel %vm2798, %v2799, %v2797
  %v2801 = vclz %v2800
  %v2802 = vsub.s32 %v2801, 2
  %vm2803 = vcmp.gt.s32.totalorder 0, %v2802
  %v2804 = vsel %vm2803, 0, %v2802
  %v2805 = vsub.s32 32, %v2804
  %v2806 = vshll.u32 %v2797, %v2804
  %v2807 = vshrl.u32 %v2789, %v2805
  %v2808 = vor.u32 %v2806, %v2807
  %v2809 = vsub.s32 4294967266, %v2804
  %v2810 = vadd.s32 %v2809, 127
  %v2811 = vshll.u32 %v2810, 23
  %v2812 = vor.u32 4788187, %v2811
  %v2813 = vand.u32 2147483647, %v2812
  %v2815 = vcvt.s32.f32 %v2808
  %v2816 = vmul.f32 %v2815, %v2813
  %v2817 = vxor.u32 %v2816, 2147483648
  %v2818 = vsel %vm2735, %v2817, %v2816
  %v2819 = vsub.s32 4, %v2795
  %v2820 = vsel %vm2735, %v2819, %v2795
  %v2821 = vsel %vm2734, %v135, %v2818
  %v2822 = vsel %vm2734, 0, %v2820
  %v2823 = vcosq.f32.pop %v2821
  %v2824 = vsinq.f32.pop %v2821
  %vm2825 = vweird.f32 %v135
  %v2826 = vand.u32 %v2822, 3
  %vm2827 = vcmp.lt.s32.totalorder %v2826, 2
  %vm2828 = vcmp.eq.s32.totalorder %v2826, 0
  %v2829 = vxor.u32 %v2824, 2147483648
  %v2830 = vsel %vm2828, %v2823, %v2829
  %vm2831 = vcmp.eq.s32.totalorder %v2826, 2
  %v2832 = vxor.u32 %v2823, 2147483648
  %v2833 = vsel %vm2831, %v2832, %v2824
  %v2834 = vsel %vm2827, %v2830, %v2833
  %v2835 = vsel %vm2825, nan, %v2834
  %v2836 = vand.u32 2147483647, %v136
  %vm2837 = vcmp.le.f32.partialorder %v2836, 0.7853982
  %vm2838 = vcmp.lt.s32.totalorder %v136, 0
  %v2839 = vand.u32 %v136, 2139095040
  %v2840 = vshrl.u32 %v2839, 23
  %v2841 = vsub.s32 %v2840, 127
  %v2842 = vand.u32 2147483647, %v136
  %v2843 = vand.u32 %v2842, 8388607
  %v2844 = vor.u32 %v2843, 8388608
  %v2845 = vsub.s32 0, %v2844
  %v2846 = vadd.s32 %v2841, 1
  %vm2847 = vcmp.gt.s32.totalorder %v2846, 0
  %v2848 = vsel %vm2847, %v2846, 0
  %v2849 = vshrl.u32 %v2848, 5
  %v2850 = vand.u32 %v2848, 31
  %v2851 = vsub.s32 32, %v2850
  %v2852 = vshrl.u32 683565275, %v2851
  %v2853 = vshll.u32 683565275, %v2850
  %v2854 = vshrl.u32 2475754826, %v2851
  %v2855 = vor.u32 %v2853, %v2854
  %v2856 = vshll.u32 2475754826, %v2850
  %v2857 = vshrl.u32 2131351028, %v2851
  %v2858 = vor.u32 %v2856, %v2857
  %v2859 = vshll.u32 2131351028, %v2850
  %v2860 = vshrl.u32 2102212464, %v2851
  %v2861 = vor.u32 %v2859, %v2860
  %v2862 = vshll.u32 2102212464, %v2850
  %v2863 = vshrl.u32 920167782, %v2851
  %v2864 = vor.u32 %v2862, %v2863
  %v2865 = vshll.u32 920167782, %v2850
  %v2866 = vshrl.u32 1326507024, %v2851
  %v2867 = vor.u32 %v2865, %v2866
  %vm2868 = vcmp.lt.s32.totalorder %v2849, 1
  %vm2869 = vcmp.lt.s32.totalorder %v2849, 2
  %vm2870 = vcmp.lt.s32.totalorder %v2849, 3
  %vm2871 = vcmp.lt.s32.totalorder %v2849, 4
  %v2872 = vsel %vm2868, %v2852, %v2855
  %v2873 = vsel %vm2871, %v2861, 2102212464
  %v2874 = vsel %vm2870, %v2858, %v2873
  %v2875 = vsel %vm2869, %v2872, %v2874
  %v2876 = vsel %vm2868, %v2855, %v2858
  %v2877 = vsel %vm2871, %v2864, 920167782
  %v2878 = vsel %vm2870, %v2861, %v2877
  %v2879 = vsel %vm2869, %v2876, %v2878
  %v2880 = vsel %vm2868, %v2858, %v2861
  %v2881 = vsel %vm2871, %v2867, 1326507024
  %v2882 = vsel %vm2870, %v2864, %v2881
  %v2883 = vsel %vm2869, %v2880, %v2882
  %v2884 = vshll.u32 %v2844, 8
  %v2885 = vmul.u32.u64.compose %v2884, %v2883
  %v2886 = vextract.low.u32 %v2885
  %v2887 = vextract.high.u32 %v2885
  %v2888 = vmul.u32.u64.compose %v2884, %v2879
  %v2889 = vextract.low.u32 %v2888
  %v2890 = vextract.high.u32 %v2888
  %v2891 = vmul.u32 %v2884, %v2875
  %v2892 = vadd.s32 %v2887, %v2889
  %vm2893 = vc.u32 %v2887, %v2889
  %v2894 = vadd.s32 %v2890, 1
  %v2895 = vsel %vm2893, %v2894, %v2890
  %v2896 = vadd.s32 %v2891, %v2895
  %v2897 = vadd.s32 %v2896, 536870912
  %v2898 = vshrl.u32 %v2897, 30
  %v2899 = vshll.u32 %v2898, 30
  %v2900 = vsub.s32 %v2896, %v2899
  %vm2901 = vcmp.lt.s32.totalorder %v2900, 0
  %v2902 = vsub.s32 0, %v2900
  %v2903 = vsel %vm2901, %v2902, %v2900
  %v2904 = vclz %v2903
  %v2905 = vsub.s32 %v2904, 2
  %vm2906 = vcmp.gt.s32.totalorder 0, %v2905
  %v2907 = vsel %vm2906, 0, %v2905
  %v2908 = vsub.s32 32, %v2907
  %v2909 = vshll.u32 %v2900, %v2907
  %v2910 = vshrl.u32 %v2892, %v2908
  %v2911 = vor.u32 %v2909, %v2910
  %v2912 = vsub.s32 4294967266, %v2907
  %v2913 = vadd.s32 %v2912, 127
  %v2914 = vshll.u32 %v2913, 23
  %v2915 = vor.u32 4788187, %v2914
  %v2916 = vand.u32 2147483647, %v2915
  %v2918 = vcvt.s32.f32 %v2911
  %v2919 = vmul.f32 %v2918, %v2916
  %v2920 = vxor.u32 %v2919, 2147483648
  %v2921 = vsel %vm2838, %v2920, %v2919
  %v2922 = vsub.s32 4, %v2898
  %v2923 = vsel %vm2838, %v2922, %v2898
  %v2924 = vsel %vm2837, %v136, %v2921
  %v2925 = vsel %vm2837, 0, %v2923
  %v2926 = vcosq.f32.pop %v2924
  %v2927 = vsinq.f32.pop %v2924
  %vm2928 = vweird.f32 %v136
  %v2929 = vand.u32 %v2925, 3
  %vm2930 = vcmp.lt.s32.totalorder %v2929, 2
  %vm2931 = vcmp.eq.s32.totalorder %v2929, 0
  %v2932 = vxor.u32 %v2927, 2147483648
  %v2933 = vsel %vm2931, %v2926, %v2932
  %vm2934 = vcmp.eq.s32.totalorder %v2929, 2
  %v2935 = vxor.u32 %v2926, 2147483648
  %v2936 = vsel %vm2934, %v2935, %v2927
  %v2937 = vsel %vm2930, %v2933, %v2936
  %v2938 = vsel %vm2928, nan, %v2937
  %v2939 = vand.u32 2147483647, %v137
  %vm2940 = vcmp.le.f32.partialorder %v2939, 0.7853982
  %vm2941 = vcmp.lt.s32.totalorder %v137, 0
  %v2942 = vand.u32 %v137, 2139095040
  %v2943 = vshrl.u32 %v2942, 23
  %v2944 = vsub.s32 %v2943, 127
  %v2945 = vand.u32 2147483647, %v137
  %v2946 = vand.u32 %v2945, 8388607
  %v2947 = vor.u32 %v2946, 8388608
  %v2948 = vsub.s32 0, %v2947
  %v2949 = vadd.s32 %v2944, 1
  %vm2950 = vcmp.gt.s32.totalorder %v2949, 0
  %v2951 = vsel %vm2950, %v2949, 0
  %v2952 = vshrl.u32 %v2951, 5
  %v2953 = vand.u32 %v2951, 31
  %v2954 = vsub.s32 32, %v2953
  %v2955 = vshrl.u32 683565275, %v2954
  %v2956 = vshll.u32 683565275, %v2953
  %v2957 = vshrl.u32 2475754826, %v2954
  %v2958 = vor.u32 %v2956, %v2957
  %v2959 = vshll.u32 2475754826, %v2953
  %v2960 = vshrl.u32 2131351028, %v2954
  %v2961 = vor.u32 %v2959, %v2960
  %v2962 = vshll.u32 2131351028, %v2953
  %v2963 = vshrl.u32 2102212464, %v2954
  %v2964 = vor.u32 %v2962, %v2963
  %v2965 = vshll.u32 2102212464, %v2953
  %v2966 = vshrl.u32 920167782, %v2954
  %v2967 = vor.u32 %v2965, %v2966
  %v2968 = vshll.u32 920167782, %v2953
  %v2969 = vshrl.u32 1326507024, %v2954
  %v2970 = vor.u32 %v2968, %v2969
  %vm2971 = vcmp.lt.s32.totalorder %v2952, 1
  %vm2972 = vcmp.lt.s32.totalorder %v2952, 2
  %vm2973 = vcmp.lt.s32.totalorder %v2952, 3
  %vm2974 = vcmp.lt.s32.totalorder %v2952, 4
  %v2975 = vsel %vm2971, %v2955, %v2958
  %v2976 = vsel %vm2974, %v2964, 2102212464
  %v2977 = vsel %vm2973, %v2961, %v2976
  %v2978 = vsel %vm2972, %v2975, %v2977
  %v2979 = vsel %vm2971, %v2958, %v2961
  %v2980 = vsel %vm2974, %v2967, 920167782
  %v2981 = vsel %vm2973, %v2964, %v2980
  %v2982 = vsel %vm2972, %v2979, %v2981
  %v2983 = vsel %vm2971, %v2961, %v2964
  %v2984 = vsel %vm2974, %v2970, 1326507024
  %v2985 = vsel %vm2973, %v2967, %v2984
  %v2986 = vsel %vm2972, %v2983, %v2985
  %v2987 = vshll.u32 %v2947, 8
  %v2988 = vmul.u32.u64.compose %v2987, %v2986
  %v2989 = vextract.low.u32 %v2988
  %v2990 = vextract.high.u32 %v2988
  %v2991 = vmul.u32.u64.compose %v2987, %v2982
  %v2992 = vextract.low.u32 %v2991
  %v2993 = vextract.high.u32 %v2991
  %v2994 = vmul.u32 %v2987, %v2978
  %v2995 = vadd.s32 %v2990, %v2992
  %vm2996 = vc.u32 %v2990, %v2992
  %v2997 = vadd.s32 %v2993, 1
  %v2998 = vsel %vm2996, %v2997, %v2993
  %v2999 = vadd.s32 %v2994, %v2998
  %v3000 = vadd.s32 %v2999, 536870912
  %v3001 = vshrl.u32 %v3000, 30
  %v3002 = vshll.u32 %v3001, 30
  %v3003 = vsub.s32 %v2999, %v3002
  %vm3004 = vcmp.lt.s32.totalorder %v3003, 0
  %v3005 = vsub.s32 0, %v3003
  %v3006 = vsel %vm3004, %v3005, %v3003
  %v3007 = vclz %v3006
  %v3008 = vsub.s32 %v3007, 2
  %vm3009 = vcmp.gt.s32.totalorder 0, %v3008
  %v3010 = vsel %vm3009, 0, %v3008
  %v3011 = vsub.s32 32, %v3010
  %v3012 = vshll.u32 %v3003, %v3010
  %v3013 = vshrl.u32 %v2995, %v3011
  %v3014 = vor.u32 %v3012, %v3013
  %v3015 = vsub.s32 4294967266, %v3010
  %v3016 = vadd.s32 %v3015, 127
  %v3017 = vshll.u32 %v3016, 23
  %v3018 = vor.u32 4788187, %v3017
  %v3019 = vand.u32 2147483647, %v3018
  %v3021 = vcvt.s32.f32 %v3014
  %v3022 = vmul.f32 %v3021, %v3019
  %v3023 = vxor.u32 %v3022, 2147483648
  %v3024 = vsel %vm2941, %v3023, %v3022
  %v3025 = vsub.s32 4, %v3001
  %v3026 = vsel %vm2941, %v3025, %v3001
  %v3027 = vsel %vm2940, %v137, %v3024
  %v3028 = vsel %vm2940, 0, %v3026
  %v3029 = vcosq.f32.pop %v3027
  %v3030 = vsinq.f32.pop %v3027
  %vm3031 = vweird.f32 %v137
  %v3032 = vand.u32 %v3028, 3
  %vm3033 = vcmp.lt.s32.totalorder %v3032, 2
  %vm3034 = vcmp.eq.s32.totalorder %v3032, 0
  %v3035 = vxor.u32 %v3030, 2147483648
  %v3036 = vsel %vm3034, %v3029, %v3035
  %vm3037 = vcmp.eq.s32.totalorder %v3032, 2
  %v3038 = vxor.u32 %v3029, 2147483648
  %v3039 = vsel %vm3037, %v3038, %v3030
  %v3040 = vsel %vm3033, %v3036, %v3039
  %v3041 = vsel %vm3031, nan, %v3040
  %v3042 = vand.u32 2147483647, %v138
  %vm3043 = vcmp.le.f32.partialorder %v3042, 0.7853982
  %vm3044 = vcmp.lt.s32.totalorder %v138, 0
  %v3045 = vand.u32 %v138, 2139095040
  %v3046 = vshrl.u32 %v3045, 23
  %v3047 = vsub.s32 %v3046, 127
  %v3048 = vand.u32 2147483647, %v138
  %v3049 = vand.u32 %v3048, 8388607
  %v3050 = vor.u32 %v3049, 8388608
  %v3051 = vsub.s32 0, %v3050
  %v3052 = vadd.s32 %v3047, 1
  %vm3053 = vcmp.gt.s32.totalorder %v3052, 0
  %v3054 = vsel %vm3053, %v3052, 0
  %v3055 = vshrl.u32 %v3054, 5
  %v3056 = vand.u32 %v3054, 31
  %v3057 = vsub.s32 32, %v3056
  %v3058 = vshrl.u32 683565275, %v3057
  %v3059 = vshll.u32 683565275, %v3056
  %v3060 = vshrl.u32 2475754826, %v3057
  %v3061 = vor.u32 %v3059, %v3060
  %v3062 = vshll.u32 2475754826, %v3056
  %v3063 = vshrl.u32 2131351028, %v3057
  %v3064 = vor.u32 %v3062, %v3063
  %v3065 = vshll.u32 2131351028, %v3056
  %v3066 = vshrl.u32 2102212464, %v3057
  %v3067 = vor.u32 %v3065, %v3066
  %v3068 = vshll.u32 2102212464, %v3056
  %v3069 = vshrl.u32 920167782, %v3057
  %v3070 = vor.u32 %v3068, %v3069
  %v3071 = vshll.u32 920167782, %v3056
  %v3072 = vshrl.u32 1326507024, %v3057
  %v3073 = vor.u32 %v3071, %v3072
  %vm3074 = vcmp.lt.s32.totalorder %v3055, 1
  %vm3075 = vcmp.lt.s32.totalorder %v3055, 2
  %vm3076 = vcmp.lt.s32.totalorder %v3055, 3
  %vm3077 = vcmp.lt.s32.totalorder %v3055, 4
  %v3078 = vsel %vm3074, %v3058, %v3061
  %v3079 = vsel %vm3077, %v3067, 2102212464
  %v3080 = vsel %vm3076, %v3064, %v3079
  %v3081 = vsel %vm3075, %v3078, %v3080
  %v3082 = vsel %vm3074, %v3061, %v3064
  %v3083 = vsel %vm3077, %v3070, 920167782
  %v3084 = vsel %vm3076, %v3067, %v3083
  %v3085 = vsel %vm3075, %v3082, %v3084
  %v3086 = vsel %vm3074, %v3064, %v3067
  %v3087 = vsel %vm3077, %v3073, 1326507024
  %v3088 = vsel %vm3076, %v3070, %v3087
  %v3089 = vsel %vm3075, %v3086, %v3088
  %v3090 = vshll.u32 %v3050, 8
  %v3091 = vmul.u32.u64.compose %v3090, %v3089
  %v3092 = vextract.low.u32 %v3091
  %v3093 = vextract.high.u32 %v3091
  %v3094 = vmul.u32.u64.compose %v3090, %v3085
  %v3095 = vextract.low.u32 %v3094
  %v3096 = vextract.high.u32 %v3094
  %v3097 = vmul.u32 %v3090, %v3081
  %v3098 = vadd.s32 %v3093, %v3095
  %vm3099 = vc.u32 %v3093, %v3095
  %v3100 = vadd.s32 %v3096, 1
  %v3101 = vsel %vm3099, %v3100, %v3096
  %v3102 = vadd.s32 %v3097, %v3101
  %v3103 = vadd.s32 %v3102, 536870912
  %v3104 = vshrl.u32 %v3103, 30
  %v3105 = vshll.u32 %v3104, 30
  %v3106 = vsub.s32 %v3102, %v3105
  %vm3107 = vcmp.lt.s32.totalorder %v3106, 0
  %v3108 = vsub.s32 0, %v3106
  %v3109 = vsel %vm3107, %v3108, %v3106
  %v3110 = vclz %v3109
  %v3111 = vsub.s32 %v3110, 2
  %vm3112 = vcmp.gt.s32.totalorder 0, %v3111
  %v3113 = vsel %vm3112, 0, %v3111
  %v3114 = vsub.s32 32, %v3113
  %v3115 = vshll.u32 %v3106, %v3113
  %v3116 = vshrl.u32 %v3098, %v3114
  %v3117 = vor.u32 %v3115, %v3116
  %v3118 = vsub.s32 4294967266, %v3113
  %v3119 = vadd.s32 %v3118, 127
  %v3120 = vshll.u32 %v3119, 23
  %v3121 = vor.u32 4788187, %v3120
  %v3122 = vand.u32 2147483647, %v3121
  %v3124 = vcvt.s32.f32 %v3117
  %v3125 = vmul.f32 %v3124, %v3122
  %v3126 = vxor.u32 %v3125, 2147483648
  %v3127 = vsel %vm3044, %v3126, %v3125
  %v3128 = vsub.s32 4, %v3104
  %v3129 = vsel %vm3044, %v3128, %v3104
  %v3130 = vsel %vm3043, %v138, %v3127
  %v3131 = vsel %vm3043, 0, %v3129
  %v3132 = vcosq.f32.pop %v3130
  %v3133 = vsinq.f32.pop %v3130
  %vm3134 = vweird.f32 %v138
  %v3135 = vand.u32 %v3131, 3
  %vm3136 = vcmp.lt.s32.totalorder %v3135, 2
  %vm3137 = vcmp.eq.s32.totalorder %v3135, 0
  %v3138 = vxor.u32 %v3133, 2147483648
  %v3139 = vsel %vm3137, %v3132, %v3138
  %vm3140 = vcmp.eq.s32.totalorder %v3135, 2
  %v3141 = vxor.u32 %v3132, 2147483648
  %v3142 = vsel %vm3140, %v3141, %v3133
  %v3143 = vsel %vm3136, %v3139, %v3142
  %v3144 = vsel %vm3134, nan, %v3143
  %v3145 = vand.u32 2147483647, %v139
  %vm3146 = vcmp.le.f32.partialorder %v3145, 0.7853982
  %vm3147 = vcmp.lt.s32.totalorder %v139, 0
  %v3148 = vand.u32 %v139, 2139095040
  %v3149 = vshrl.u32 %v3148, 23
  %v3150 = vsub.s32 %v3149, 127
  %v3151 = vand.u32 2147483647, %v139
  %v3152 = vand.u32 %v3151, 8388607
  %v3153 = vor.u32 %v3152, 8388608
  %v3154 = vsub.s32 0, %v3153
  %v3155 = vadd.s32 %v3150, 1
  %vm3156 = vcmp.gt.s32.totalorder %v3155, 0
  %v3157 = vsel %vm3156, %v3155, 0
  %v3158 = vshrl.u32 %v3157, 5
  %v3159 = vand.u32 %v3157, 31
  %v3160 = vsub.s32 32, %v3159
  %v3161 = vshrl.u32 683565275, %v3160
  %v3162 = vshll.u32 683565275, %v3159
  %v3163 = vshrl.u32 2475754826, %v3160
  %v3164 = vor.u32 %v3162, %v3163
  %v3165 = vshll.u32 2475754826, %v3159
  %v3166 = vshrl.u32 2131351028, %v3160
  %v3167 = vor.u32 %v3165, %v3166
  %v3168 = vshll.u32 2131351028, %v3159
  %v3169 = vshrl.u32 2102212464, %v3160
  %v3170 = vor.u32 %v3168, %v3169
  %v3171 = vshll.u32 2102212464, %v3159
  %v3172 = vshrl.u32 920167782, %v3160
  %v3173 = vor.u32 %v3171, %v3172
  %v3174 = vshll.u32 920167782, %v3159
  %v3175 = vshrl.u32 1326507024, %v3160
  %v3176 = vor.u32 %v3174, %v3175
  %vm3177 = vcmp.lt.s32.totalorder %v3158, 1
  %vm3178 = vcmp.lt.s32.totalorder %v3158, 2
  %vm3179 = vcmp.lt.s32.totalorder %v3158, 3
  %vm3180 = vcmp.lt.s32.totalorder %v3158, 4
  %v3181 = vsel %vm3177, %v3161, %v3164
  %v3182 = vsel %vm3180, %v3170, 2102212464
  %v3183 = vsel %vm3179, %v3167, %v3182
  %v3184 = vsel %vm3178, %v3181, %v3183
  %v3185 = vsel %vm3177, %v3164, %v3167
  %v3186 = vsel %vm3180, %v3173, 920167782
  %v3187 = vsel %vm3179, %v3170, %v3186
  %v3188 = vsel %vm3178, %v3185, %v3187
  %v3189 = vsel %vm3177, %v3167, %v3170
  %v3190 = vsel %vm3180, %v3176, 1326507024
  %v3191 = vsel %vm3179, %v3173, %v3190
  %v3192 = vsel %vm3178, %v3189, %v3191
  %v3193 = vshll.u32 %v3153, 8
  %v3194 = vmul.u32.u64.compose %v3193, %v3192
  %v3195 = vextract.low.u32 %v3194
  %v3196 = vextract.high.u32 %v3194
  %v3197 = vmul.u32.u64.compose %v3193, %v3188
  %v3198 = vextract.low.u32 %v3197
  %v3199 = vextract.high.u32 %v3197
  %v3200 = vmul.u32 %v3193, %v3184
  %v3201 = vadd.s32 %v3196, %v3198
  %vm3202 = vc.u32 %v3196, %v3198
  %v3203 = vadd.s32 %v3199, 1
  %v3204 = vsel %vm3202, %v3203, %v3199
  %v3205 = vadd.s32 %v3200, %v3204
  %v3206 = vadd.s32 %v3205, 536870912
  %v3207 = vshrl.u32 %v3206, 30
  %v3208 = vshll.u32 %v3207, 30
  %v3209 = vsub.s32 %v3205, %v3208
  %vm3210 = vcmp.lt.s32.totalorder %v3209, 0
  %v3211 = vsub.s32 0, %v3209
  %v3212 = vsel %vm3210, %v3211, %v3209
  %v3213 = vclz %v3212
  %v3214 = vsub.s32 %v3213, 2
  %vm3215 = vcmp.gt.s32.totalorder 0, %v3214
  %v3216 = vsel %vm3215, 0, %v3214
  %v3217 = vsub.s32 32, %v3216
  %v3218 = vshll.u32 %v3209, %v3216
  %v3219 = vshrl.u32 %v3201, %v3217
  %v3220 = vor.u32 %v3218, %v3219
  %v3221 = vsub.s32 4294967266, %v3216
  %v3222 = vadd.s32 %v3221, 127
  %v3223 = vshll.u32 %v3222, 23
  %v3224 = vor.u32 4788187, %v3223
  %v3225 = vand.u32 2147483647, %v3224
  %v3227 = vcvt.s32.f32 %v3220
  %v3228 = vmul.f32 %v3227, %v3225
  %v3229 = vxor.u32 %v3228, 2147483648
  %v3230 = vsel %vm3147, %v3229, %v3228
  %v3231 = vsub.s32 4, %v3207
  %v3232 = vsel %vm3147, %v3231, %v3207
  %v3233 = vsel %vm3146, %v139, %v3230
  %v3234 = vsel %vm3146, 0, %v3232
  %v3235 = vcosq.f32.pop %v3233
  %v3236 = vsinq.f32.pop %v3233
  %vm3237 = vweird.f32 %v139
  %v3238 = vand.u32 %v3234, 3
  %vm3239 = vcmp.lt.s32.totalorder %v3238, 2
  %vm3240 = vcmp.eq.s32.totalorder %v3238, 0
  %v3241 = vxor.u32 %v3236, 2147483648
  %v3242 = vsel %vm3240, %v3235, %v3241
  %vm3243 = vcmp.eq.s32.totalorder %v3238, 2
  %v3244 = vxor.u32 %v3235, 2147483648
  %v3245 = vsel %vm3243, %v3244, %v3236
  %v3246 = vsel %vm3239, %v3242, %v3245
  %v3247 = vsel %vm3237, nan, %v3246
  %v3248 = vand.u32 2147483647, %v140
  %vm3249 = vcmp.le.f32.partialorder %v3248, 0.7853982
  %vm3250 = vcmp.lt.s32.totalorder %v140, 0
  %v3251 = vand.u32 %v140, 2139095040
  %v3252 = vshrl.u32 %v3251, 23
  %v3253 = vsub.s32 %v3252, 127
  %v3254 = vand.u32 2147483647, %v140
  %v3255 = vand.u32 %v3254, 8388607
  %v3256 = vor.u32 %v3255, 8388608
  %v3257 = vsub.s32 0, %v3256
  %v3258 = vadd.s32 %v3253, 1
  %vm3259 = vcmp.gt.s32.totalorder %v3258, 0
  %v3260 = vsel %vm3259, %v3258, 0
  %v3261 = vshrl.u32 %v3260, 5
  %v3262 = vand.u32 %v3260, 31
  %v3263 = vsub.s32 32, %v3262
  %v3264 = vshrl.u32 683565275, %v3263
  %v3265 = vshll.u32 683565275, %v3262
  %v3266 = vshrl.u32 2475754826, %v3263
  %v3267 = vor.u32 %v3265, %v3266
  %v3268 = vshll.u32 2475754826, %v3262
  %v3269 = vshrl.u32 2131351028, %v3263
  %v3270 = vor.u32 %v3268, %v3269
  %v3271 = vshll.u32 2131351028, %v3262
  %v3272 = vshrl.u32 2102212464, %v3263
  %v3273 = vor.u32 %v3271, %v3272
  %v3274 = vshll.u32 2102212464, %v3262
  %v3275 = vshrl.u32 920167782, %v3263
  %v3276 = vor.u32 %v3274, %v3275
  %v3277 = vshll.u32 920167782, %v3262
  %v3278 = vshrl.u32 1326507024, %v3263
  %v3279 = vor.u32 %v3277, %v3278
  %vm3280 = vcmp.lt.s32.totalorder %v3261, 1
  %vm3281 = vcmp.lt.s32.totalorder %v3261, 2
  %vm3282 = vcmp.lt.s32.totalorder %v3261, 3
  %vm3283 = vcmp.lt.s32.totalorder %v3261, 4
  %v3284 = vsel %vm3280, %v3264, %v3267
  %v3285 = vsel %vm3283, %v3273, 2102212464
  %v3286 = vsel %vm3282, %v3270, %v3285
  %v3287 = vsel %vm3281, %v3284, %v3286
  %v3288 = vsel %vm3280, %v3267, %v3270
  %v3289 = vsel %vm3283, %v3276, 920167782
  %v3290 = vsel %vm3282, %v3273, %v3289
  %v3291 = vsel %vm3281, %v3288, %v3290
  %v3292 = vsel %vm3280, %v3270, %v3273
  %v3293 = vsel %vm3283, %v3279, 1326507024
  %v3294 = vsel %vm3282, %v3276, %v3293
  %v3295 = vsel %vm3281, %v3292, %v3294
  %v3296 = vshll.u32 %v3256, 8
  %v3297 = vmul.u32.u64.compose %v3296, %v3295
  %v3298 = vextract.low.u32 %v3297
  %v3299 = vextract.high.u32 %v3297
  %v3300 = vmul.u32.u64.compose %v3296, %v3291
  %v3301 = vextract.low.u32 %v3300
  %v3302 = vextract.high.u32 %v3300
  %v3303 = vmul.u32 %v3296, %v3287
  %v3304 = vadd.s32 %v3299, %v3301
  %vm3305 = vc.u32 %v3299, %v3301
  %v3306 = vadd.s32 %v3302, 1
  %v3307 = vsel %vm3305, %v3306, %v3302
  %v3308 = vadd.s32 %v3303, %v3307
  %v3309 = vadd.s32 %v3308, 536870912
  %v3310 = vshrl.u32 %v3309, 30
  %v3311 = vshll.u32 %v3310, 30
  %v3312 = vsub.s32 %v3308, %v3311
  %vm3313 = vcmp.lt.s32.totalorder %v3312, 0
  %v3314 = vsub.s32 0, %v3312
  %v3315 = vsel %vm3313, %v3314, %v3312
  %v3316 = vclz %v3315
  %v3317 = vsub.s32 %v3316, 2
  %vm3318 = vcmp.gt.s32.totalorder 0, %v3317
  %v3319 = vsel %vm3318, 0, %v3317
  %v3320 = vsub.s32 32, %v3319
  %v3321 = vshll.u32 %v3312, %v3319
  %v3322 = vshrl.u32 %v3304, %v3320
  %v3323 = vor.u32 %v3321, %v3322
  %v3324 = vsub.s32 4294967266, %v3319
  %v3325 = vadd.s32 %v3324, 127
  %v3326 = vshll.u32 %v3325, 23
  %v3327 = vor.u32 4788187, %v3326
  %v3328 = vand.u32 2147483647, %v3327
  %v3330 = vcvt.s32.f32 %v3323
  %v3331 = vmul.f32 %v3330, %v3328
  %v3332 = vxor.u32 %v3331, 2147483648
  %v3333 = vsel %vm3250, %v3332, %v3331
  %v3334 = vsub.s32 4, %v3310
  %v3335 = vsel %vm3250, %v3334, %v3310
  %v3336 = vsel %vm3249, %v140, %v3333
  %v3337 = vsel %vm3249, 0, %v3335
  %v3338 = vcosq.f32.pop %v3336
  %v3339 = vsinq.f32.pop %v3336
  %vm3340 = vweird.f32 %v140
  %v3341 = vand.u32 %v3337, 3
  %vm3342 = vcmp.lt.s32.totalorder %v3341, 2
  %vm3343 = vcmp.eq.s32.totalorder %v3341, 0
  %v3344 = vxor.u32 %v3339, 2147483648
  %v3345 = vsel %vm3343, %v3338, %v3344
  %vm3346 = vcmp.eq.s32.totalorder %v3341, 2
  %v3347 = vxor.u32 %v3338, 2147483648
  %v3348 = vsel %vm3346, %v3347, %v3339
  %v3349 = vsel %vm3342, %v3345, %v3348
  %v3350 = vsel %vm3340, nan, %v3349
  %v3351 = vand.u32 2147483647, %v141
  %vm3352 = vcmp.le.f32.partialorder %v3351, 0.7853982
  %vm3353 = vcmp.lt.s32.totalorder %v141, 0
  %v3354 = vand.u32 %v141, 2139095040
  %v3355 = vshrl.u32 %v3354, 23
  %v3356 = vsub.s32 %v3355, 127
  %v3357 = vand.u32 2147483647, %v141
  %v3358 = vand.u32 %v3357, 8388607
  %v3359 = vor.u32 %v3358, 8388608
  %v3360 = vsub.s32 0, %v3359
  %v3361 = vadd.s32 %v3356, 1
  %vm3362 = vcmp.gt.s32.totalorder %v3361, 0
  %v3363 = vsel %vm3362, %v3361, 0
  %v3364 = vshrl.u32 %v3363, 5
  %v3365 = vand.u32 %v3363, 31
  %v3366 = vsub.s32 32, %v3365
  %v3367 = vshrl.u32 683565275, %v3366
  %v3368 = vshll.u32 683565275, %v3365
  %v3369 = vshrl.u32 2475754826, %v3366
  %v3370 = vor.u32 %v3368, %v3369
  %v3371 = vshll.u32 2475754826, %v3365
  %v3372 = vshrl.u32 2131351028, %v3366
  %v3373 = vor.u32 %v3371, %v3372
  %v3374 = vshll.u32 2131351028, %v3365
  %v3375 = vshrl.u32 2102212464, %v3366
  %v3376 = vor.u32 %v3374, %v3375
  %v3377 = vshll.u32 2102212464, %v3365
  %v3378 = vshrl.u32 920167782, %v3366
  %v3379 = vor.u32 %v3377, %v3378
  %v3380 = vshll.u32 920167782, %v3365
  %v3381 = vshrl.u32 1326507024, %v3366
  %v3382 = vor.u32 %v3380, %v3381
  %vm3383 = vcmp.lt.s32.totalorder %v3364, 1
  %vm3384 = vcmp.lt.s32.totalorder %v3364, 2
  %vm3385 = vcmp.lt.s32.totalorder %v3364, 3
  %vm3386 = vcmp.lt.s32.totalorder %v3364, 4
  %v3387 = vsel %vm3383, %v3367, %v3370
  %v3388 = vsel %vm3386, %v3376, 2102212464
  %v3389 = vsel %vm3385, %v3373, %v3388
  %v3390 = vsel %vm3384, %v3387, %v3389
  %v3391 = vsel %vm3383, %v3370, %v3373
  %v3392 = vsel %vm3386, %v3379, 920167782
  %v3393 = vsel %vm3385, %v3376, %v3392
  %v3394 = vsel %vm3384, %v3391, %v3393
  %v3395 = vsel %vm3383, %v3373, %v3376
  %v3396 = vsel %vm3386, %v3382, 1326507024
  %v3397 = vsel %vm3385, %v3379, %v3396
  %v3398 = vsel %vm3384, %v3395, %v3397
  %v3399 = vshll.u32 %v3359, 8
  %v3400 = vmul.u32.u64.compose %v3399, %v3398
  %v3401 = vextract.low.u32 %v3400
  %v3402 = vextract.high.u32 %v3400
  %v3403 = vmul.u32.u64.compose %v3399, %v3394
  %v3404 = vextract.low.u32 %v3403
  %v3405 = vextract.high.u32 %v3403
  %v3406 = vmul.u32 %v3399, %v3390
  %v3407 = vadd.s32 %v3402, %v3404
  %vm3408 = vc.u32 %v3402, %v3404
  %v3409 = vadd.s32 %v3405, 1
  %v3410 = vsel %vm3408, %v3409, %v3405
  %v3411 = vadd.s32 %v3406, %v3410
  %v3412 = vadd.s32 %v3411, 536870912
  %v3413 = vshrl.u32 %v3412, 30
  %v3414 = vshll.u32 %v3413, 30
  %v3415 = vsub.s32 %v3411, %v3414
  %vm3416 = vcmp.lt.s32.totalorder %v3415, 0
  %v3417 = vsub.s32 0, %v3415
  %v3418 = vsel %vm3416, %v3417, %v3415
  %v3419 = vclz %v3418
  %v3420 = vsub.s32 %v3419, 2
  %vm3421 = vcmp.gt.s32.totalorder 0, %v3420
  %v3422 = vsel %vm3421, 0, %v3420
  %v3423 = vsub.s32 32, %v3422
  %v3424 = vshll.u32 %v3415, %v3422
  %v3425 = vshrl.u32 %v3407, %v3423
  %v3426 = vor.u32 %v3424, %v3425
  %v3427 = vsub.s32 4294967266, %v3422
  %v3428 = vadd.s32 %v3427, 127
  %v3429 = vshll.u32 %v3428, 23
  %v3430 = vor.u32 4788187, %v3429
  %v3431 = vand.u32 2147483647, %v3430
  %v3433 = vcvt.s32.f32 %v3426
  %v3434 = vmul.f32 %v3433, %v3431
  %v3435 = vxor.u32 %v3434, 2147483648
  %v3436 = vsel %vm3353, %v3435, %v3434
  %v3437 = vsub.s32 4, %v3413
  %v3438 = vsel %vm3353, %v3437, %v3413
  %v3439 = vsel %vm3352, %v141, %v3436
  %v3440 = vsel %vm3352, 0, %v3438
  %v3441 = vcosq.f32.pop %v3439
  %v3442 = vsinq.f32.pop %v3439
  %vm3443 = vweird.f32 %v141
  %v3444 = vand.u32 %v3440, 3
  %vm3445 = vcmp.lt.s32.totalorder %v3444, 2
  %vm3446 = vcmp.eq.s32.totalorder %v3444, 0
  %v3447 = vxor.u32 %v3442, 2147483648
  %v3448 = vsel %vm3446, %v3441, %v3447
  %vm3449 = vcmp.eq.s32.totalorder %v3444, 2
  %v3450 = vxor.u32 %v3441, 2147483648
  %v3451 = vsel %vm3449, %v3450, %v3442
  %v3452 = vsel %vm3445, %v3448, %v3451
  %v3453 = vsel %vm3443, nan, %v3452
  %v3454 = vand.u32 2147483647, %v142
  %vm3455 = vcmp.le.f32.partialorder %v3454, 0.7853982
  %vm3456 = vcmp.lt.s32.totalorder %v142, 0
  %v3457 = vand.u32 %v142, 2139095040
  %v3458 = vshrl.u32 %v3457, 23
  %v3459 = vsub.s32 %v3458, 127
  %v3460 = vand.u32 2147483647, %v142
  %v3461 = vand.u32 %v3460, 8388607
  %v3462 = vor.u32 %v3461, 8388608
  %v3463 = vsub.s32 0, %v3462
  %v3464 = vadd.s32 %v3459, 1
  %vm3465 = vcmp.gt.s32.totalorder %v3464, 0
  %v3466 = vsel %vm3465, %v3464, 0
  %v3467 = vshrl.u32 %v3466, 5
  %v3468 = vand.u32 %v3466, 31
  %v3469 = vsub.s32 32, %v3468
  %v3470 = vshrl.u32 683565275, %v3469
  %v3471 = vshll.u32 683565275, %v3468
  %v3472 = vshrl.u32 2475754826, %v3469
  %v3473 = vor.u32 %v3471, %v3472
  %v3474 = vshll.u32 2475754826, %v3468
  %v3475 = vshrl.u32 2131351028, %v3469
  %v3476 = vor.u32 %v3474, %v3475
  %v3477 = vshll.u32 2131351028, %v3468
  %v3478 = vshrl.u32 2102212464, %v3469
  %v3479 = vor.u32 %v3477, %v3478
  %v3480 = vshll.u32 2102212464, %v3468
  %v3481 = vshrl.u32 920167782, %v3469
  %v3482 = vor.u32 %v3480, %v3481
  %v3483 = vshll.u32 920167782, %v3468
  %v3484 = vshrl.u32 1326507024, %v3469
  %v3485 = vor.u32 %v3483, %v3484
  %vm3486 = vcmp.lt.s32.totalorder %v3467, 1
  %vm3487 = vcmp.lt.s32.totalorder %v3467, 2
  %vm3488 = vcmp.lt.s32.totalorder %v3467, 3
  %vm3489 = vcmp.lt.s32.totalorder %v3467, 4
  %v3490 = vsel %vm3486, %v3470, %v3473
  %v3491 = vsel %vm3489, %v3479, 2102212464
  %v3492 = vsel %vm3488, %v3476, %v3491
  %v3493 = vsel %vm3487, %v3490, %v3492
  %v3494 = vsel %vm3486, %v3473, %v3476
  %v3495 = vsel %vm3489, %v3482, 920167782
  %v3496 = vsel %vm3488, %v3479, %v3495
  %v3497 = vsel %vm3487, %v3494, %v3496
  %v3498 = vsel %vm3486, %v3476, %v3479
  %v3499 = vsel %vm3489, %v3485, 1326507024
  %v3500 = vsel %vm3488, %v3482, %v3499
  %v3501 = vsel %vm3487, %v3498, %v3500
  %v3502 = vshll.u32 %v3462, 8
  %v3503 = vmul.u32.u64.compose %v3502, %v3501
  %v3504 = vextract.low.u32 %v3503
  %v3505 = vextract.high.u32 %v3503
  %v3506 = vmul.u32.u64.compose %v3502, %v3497
  %v3507 = vextract.low.u32 %v3506
  %v3508 = vextract.high.u32 %v3506
  %v3509 = vmul.u32 %v3502, %v3493
  %v3510 = vadd.s32 %v3505, %v3507
  %vm3511 = vc.u32 %v3505, %v3507
  %v3512 = vadd.s32 %v3508, 1
  %v3513 = vsel %vm3511, %v3512, %v3508
  %v3514 = vadd.s32 %v3509, %v3513
  %v3515 = vadd.s32 %v3514, 536870912
  %v3516 = vshrl.u32 %v3515, 30
  %v3517 = vshll.u32 %v3516, 30
  %v3518 = vsub.s32 %v3514, %v3517
  %vm3519 = vcmp.lt.s32.totalorder %v3518, 0
  %v3520 = vsub.s32 0, %v3518
  %v3521 = vsel %vm3519, %v3520, %v3518
  %v3522 = vclz %v3521
  %v3523 = vsub.s32 %v3522, 2
  %vm3524 = vcmp.gt.s32.totalorder 0, %v3523
  %v3525 = vsel %vm3524, 0, %v3523
  %v3526 = vsub.s32 32, %v3525
  %v3527 = vshll.u32 %v3518, %v3525
  %v3528 = vshrl.u32 %v3510, %v3526
  %v3529 = vor.u32 %v3527, %v3528
  %v3530 = vsub.s32 4294967266, %v3525
  %v3531 = vadd.s32 %v3530, 127
  %v3532 = vshll.u32 %v3531, 23
  %v3533 = vor.u32 4788187, %v3532
  %v3534 = vand.u32 2147483647, %v3533
  %v3536 = vcvt.s32.f32 %v3529
  %v3537 = vmul.f32 %v3536, %v3534
  %v3538 = vxor.u32 %v3537, 2147483648
  %v3539 = vsel %vm3456, %v3538, %v3537
  %v3540 = vsub.s32 4, %v3516
  %v3541 = vsel %vm3456, %v3540, %v3516
  %v3542 = vsel %vm3455, %v142, %v3539
  %v3543 = vsel %vm3455, 0, %v3541
  %v3544 = vcosq.f32.pop %v3542
  %v3545 = vsinq.f32.pop %v3542
  %vm3546 = vweird.f32 %v142
  %v3547 = vand.u32 %v3543, 3
  %vm3548 = vcmp.lt.s32.totalorder %v3547, 2
  %vm3549 = vcmp.eq.s32.totalorder %v3547, 0
  %v3550 = vxor.u32 %v3545, 2147483648
  %v3551 = vsel %vm3549, %v3544, %v3550
  %vm3552 = vcmp.eq.s32.totalorder %v3547, 2
  %v3553 = vxor.u32 %v3544, 2147483648
  %v3554 = vsel %vm3552, %v3553, %v3545
  %v3555 = vsel %vm3548, %v3551, %v3554
  %v3556 = vsel %vm3546, nan, %v3555
  %v3557 = vand.u32 2147483647, %v143
  %vm3558 = vcmp.le.f32.partialorder %v3557, 0.7853982
  %vm3559 = vcmp.lt.s32.totalorder %v143, 0
  %v3560 = vand.u32 %v143, 2139095040
  %v3561 = vshrl.u32 %v3560, 23
  %v3562 = vsub.s32 %v3561, 127
  %v3563 = vand.u32 2147483647, %v143
  %v3564 = vand.u32 %v3563, 8388607
  %v3565 = vor.u32 %v3564, 8388608
  %v3566 = vsub.s32 0, %v3565
  %v3567 = vadd.s32 %v3562, 1
  %vm3568 = vcmp.gt.s32.totalorder %v3567, 0
  %v3569 = vsel %vm3568, %v3567, 0
  %v3570 = vshrl.u32 %v3569, 5
  %v3571 = vand.u32 %v3569, 31
  %v3572 = vsub.s32 32, %v3571
  %v3573 = vshrl.u32 683565275, %v3572
  %v3574 = vshll.u32 683565275, %v3571
  %v3575 = vshrl.u32 2475754826, %v3572
  %v3576 = vor.u32 %v3574, %v3575
  %v3577 = vshll.u32 2475754826, %v3571
  %v3578 = vshrl.u32 2131351028, %v3572
  %v3579 = vor.u32 %v3577, %v3578
  %v3580 = vshll.u32 2131351028, %v3571
  %v3581 = vshrl.u32 2102212464, %v3572
  %v3582 = vor.u32 %v3580, %v3581
  %v3583 = vshll.u32 2102212464, %v3571
  %v3584 = vshrl.u32 920167782, %v3572
  %v3585 = vor.u32 %v3583, %v3584
  %v3586 = vshll.u32 920167782, %v3571
  %v3587 = vshrl.u32 1326507024, %v3572
  %v3588 = vor.u32 %v3586, %v3587
  %vm3589 = vcmp.lt.s32.totalorder %v3570, 1
  %vm3590 = vcmp.lt.s32.totalorder %v3570, 2
  %vm3591 = vcmp.lt.s32.totalorder %v3570, 3
  %vm3592 = vcmp.lt.s32.totalorder %v3570, 4
  %v3593 = vsel %vm3589, %v3573, %v3576
  %v3594 = vsel %vm3592, %v3582, 2102212464
  %v3595 = vsel %vm3591, %v3579, %v3594
  %v3596 = vsel %vm3590, %v3593, %v3595
  %v3597 = vsel %vm3589, %v3576, %v3579
  %v3598 = vsel %vm3592, %v3585, 920167782
  %v3599 = vsel %vm3591, %v3582, %v3598
  %v3600 = vsel %vm3590, %v3597, %v3599
  %v3601 = vsel %vm3589, %v3579, %v3582
  %v3602 = vsel %vm3592, %v3588, 1326507024
  %v3603 = vsel %vm3591, %v3585, %v3602
  %v3604 = vsel %vm3590, %v3601, %v3603
  %v3605 = vshll.u32 %v3565, 8
  %v3606 = vmul.u32.u64.compose %v3605, %v3604
  %v3607 = vextract.low.u32 %v3606
  %v3608 = vextract.high.u32 %v3606
  %v3609 = vmul.u32.u64.compose %v3605, %v3600
  %v3610 = vextract.low.u32 %v3609
  %v3611 = vextract.high.u32 %v3609
  %v3612 = vmul.u32 %v3605, %v3596
  %v3613 = vadd.s32 %v3608, %v3610
  %vm3614 = vc.u32 %v3608, %v3610
  %v3615 = vadd.s32 %v3611, 1
  %v3616 = vsel %vm3614, %v3615, %v3611
  %v3617 = vadd.s32 %v3612, %v3616
  %v3618 = vadd.s32 %v3617, 536870912
  %v3619 = vshrl.u32 %v3618, 30
  %v3620 = vshll.u32 %v3619, 30
  %v3621 = vsub.s32 %v3617, %v3620
  %vm3622 = vcmp.lt.s32.totalorder %v3621, 0
  %v3623 = vsub.s32 0, %v3621
  %v3624 = vsel %vm3622, %v3623, %v3621
  %v3625 = vclz %v3624
  %v3626 = vsub.s32 %v3625, 2
  %vm3627 = vcmp.gt.s32.totalorder 0, %v3626
  %v3628 = vsel %vm3627, 0, %v3626
  %v3629 = vsub.s32 32, %v3628
  %v3630 = vshll.u32 %v3621, %v3628
  %v3631 = vshrl.u32 %v3613, %v3629
  %v3632 = vor.u32 %v3630, %v3631
  %v3633 = vsub.s32 4294967266, %v3628
  %v3634 = vadd.s32 %v3633, 127
  %v3635 = vshll.u32 %v3634, 23
  %v3636 = vor.u32 4788187, %v3635
  %v3637 = vand.u32 2147483647, %v3636
  %v3639 = vcvt.s32.f32 %v3632
  %v3640 = vmul.f32 %v3639, %v3637
  %v3641 = vxor.u32 %v3640, 2147483648
  %v3642 = vsel %vm3559, %v3641, %v3640
  %v3643 = vsub.s32 4, %v3619
  %v3644 = vsel %vm3559, %v3643, %v3619
  %v3645 = vsel %vm3558, %v143, %v3642
  %v3646 = vsel %vm3558, 0, %v3644
  %v3647 = vcosq.f32.pop %v3645
  %v3648 = vsinq.f32.pop %v3645
  %vm3649 = vweird.f32 %v143
  %v3650 = vand.u32 %v3646, 3
  %vm3651 = vcmp.lt.s32.totalorder %v3650, 2
  %vm3652 = vcmp.eq.s32.totalorder %v3650, 0
  %v3653 = vxor.u32 %v3648, 2147483648
  %v3654 = vsel %vm3652, %v3647, %v3653
  %vm3655 = vcmp.eq.s32.totalorder %v3650, 2
  %v3656 = vxor.u32 %v3647, 2147483648
  %v3657 = vsel %vm3655, %v3656, %v3648
  %v3658 = vsel %vm3651, %v3654, %v3657
  %v3659 = vsel %vm3649, nan, %v3658
  %v3660 = vand.u32 2147483647, %v144
  %vm3661 = vcmp.le.f32.partialorder %v3660, 0.7853982
  %vm3662 = vcmp.lt.s32.totalorder %v144, 0
  %v3663 = vand.u32 %v144, 2139095040
  %v3664 = vshrl.u32 %v3663, 23
  %v3665 = vsub.s32 %v3664, 127
  %v3666 = vand.u32 2147483647, %v144
  %v3667 = vand.u32 %v3666, 8388607
  %v3668 = vor.u32 %v3667, 8388608
  %v3669 = vsub.s32 0, %v3668
  %v3670 = vadd.s32 %v3665, 1
  %vm3671 = vcmp.gt.s32.totalorder %v3670, 0
  %v3672 = vsel %vm3671, %v3670, 0
  %v3673 = vshrl.u32 %v3672, 5
  %v3674 = vand.u32 %v3672, 31
  %v3675 = vsub.s32 32, %v3674
  %v3676 = vshrl.u32 683565275, %v3675
  %v3677 = vshll.u32 683565275, %v3674
  %v3678 = vshrl.u32 2475754826, %v3675
  %v3679 = vor.u32 %v3677, %v3678
  %v3680 = vshll.u32 2475754826, %v3674
  %v3681 = vshrl.u32 2131351028, %v3675
  %v3682 = vor.u32 %v3680, %v3681
  %v3683 = vshll.u32 2131351028, %v3674
  %v3684 = vshrl.u32 2102212464, %v3675
  %v3685 = vor.u32 %v3683, %v3684
  %v3686 = vshll.u32 2102212464, %v3674
  %v3687 = vshrl.u32 920167782, %v3675
  %v3688 = vor.u32 %v3686, %v3687
  %v3689 = vshll.u32 920167782, %v3674
  %v3690 = vshrl.u32 1326507024, %v3675
  %v3691 = vor.u32 %v3689, %v3690
  %vm3692 = vcmp.lt.s32.totalorder %v3673, 1
  %vm3693 = vcmp.lt.s32.totalorder %v3673, 2
  %vm3694 = vcmp.lt.s32.totalorder %v3673, 3
  %vm3695 = vcmp.lt.s32.totalorder %v3673, 4
  %v3696 = vsel %vm3692, %v3676, %v3679
  %v3697 = vsel %vm3695, %v3685, 2102212464
  %v3698 = vsel %vm3694, %v3682, %v3697
  %v3699 = vsel %vm3693, %v3696, %v3698
  %v3700 = vsel %vm3692, %v3679, %v3682
  %v3701 = vsel %vm3695, %v3688, 920167782
  %v3702 = vsel %vm3694, %v3685, %v3701
  %v3703 = vsel %vm3693, %v3700, %v3702
  %v3704 = vsel %vm3692, %v3682, %v3685
  %v3705 = vsel %vm3695, %v3691, 1326507024
  %v3706 = vsel %vm3694, %v3688, %v3705
  %v3707 = vsel %vm3693, %v3704, %v3706
  %v3708 = vshll.u32 %v3668, 8
  %v3709 = vmul.u32.u64.compose %v3708, %v3707
  %v3710 = vextract.low.u32 %v3709
  %v3711 = vextract.high.u32 %v3709
  %v3712 = vmul.u32.u64.compose %v3708, %v3703
  %v3713 = vextract.low.u32 %v3712
  %v3714 = vextract.high.u32 %v3712
  %v3715 = vmul.u32 %v3708, %v3699
  %v3716 = vadd.s32 %v3711, %v3713
  %vm3717 = vc.u32 %v3711, %v3713
  %v3718 = vadd.s32 %v3714, 1
  %v3719 = vsel %vm3717, %v3718, %v3714
  %v3720 = vadd.s32 %v3715, %v3719
  %v3721 = vadd.s32 %v3720, 536870912
  %v3722 = vshrl.u32 %v3721, 30
  %v3723 = vshll.u32 %v3722, 30
  %v3724 = vsub.s32 %v3720, %v3723
  %vm3725 = vcmp.lt.s32.totalorder %v3724, 0
  %v3726 = vsub.s32 0, %v3724
  %v3727 = vsel %vm3725, %v3726, %v3724
  %v3728 = vclz %v3727
  %v3729 = vsub.s32 %v3728, 2
  %vm3730 = vcmp.gt.s32.totalorder 0, %v3729
  %v3731 = vsel %vm3730, 0, %v3729
  %v3732 = vsub.s32 32, %v3731
  %v3733 = vshll.u32 %v3724, %v3731
  %v3734 = vshrl.u32 %v3716, %v3732
  %v3735 = vor.u32 %v3733, %v3734
  %v3736 = vsub.s32 4294967266, %v3731
  %v3737 = vadd.s32 %v3736, 127
  %v3738 = vshll.u32 %v3737, 23
  %v3739 = vor.u32 4788187, %v3738
  %v3740 = vand.u32 2147483647, %v3739
  %v3742 = vcvt.s32.f32 %v3735
  %v3743 = vmul.f32 %v3742, %v3740
  %v3744 = vxor.u32 %v3743, 2147483648
  %v3745 = vsel %vm3662, %v3744, %v3743
  %v3746 = vsub.s32 4, %v3722
  %v3747 = vsel %vm3662, %v3746, %v3722
  %v3748 = vsel %vm3661, %v144, %v3745
  %v3749 = vsel %vm3661, 0, %v3747
  %v3750 = vcosq.f32.pop %v3748
  %v3751 = vsinq.f32.pop %v3748
  %vm3752 = vweird.f32 %v144
  %v3753 = vand.u32 %v3749, 3
  %vm3754 = vcmp.lt.s32.totalorder %v3753, 2
  %vm3755 = vcmp.eq.s32.totalorder %v3753, 0
  %v3756 = vxor.u32 %v3751, 2147483648
  %v3757 = vsel %vm3755, %v3750, %v3756
  %vm3758 = vcmp.eq.s32.totalorder %v3753, 2
  %v3759 = vxor.u32 %v3750, 2147483648
  %v3760 = vsel %vm3758, %v3759, %v3751
  %v3761 = vsel %vm3754, %v3757, %v3760
  %v3762 = vsel %vm3752, nan, %v3761
  %v3763 = vand.u32 2147483647, %v145
  %vm3764 = vcmp.le.f32.partialorder %v3763, 0.7853982
  %vm3765 = vcmp.lt.s32.totalorder %v145, 0
  %v3766 = vand.u32 %v145, 2139095040
  %v3767 = vshrl.u32 %v3766, 23
  %v3768 = vsub.s32 %v3767, 127
  %v3769 = vand.u32 2147483647, %v145
  %v3770 = vand.u32 %v3769, 8388607
  %v3771 = vor.u32 %v3770, 8388608
  %v3772 = vsub.s32 0, %v3771
  %v3773 = vadd.s32 %v3768, 1
  %vm3774 = vcmp.gt.s32.totalorder %v3773, 0
  %v3775 = vsel %vm3774, %v3773, 0
  %v3776 = vshrl.u32 %v3775, 5
  %v3777 = vand.u32 %v3775, 31
  %v3778 = vsub.s32 32, %v3777
  %v3779 = vshrl.u32 683565275, %v3778
  %v3780 = vshll.u32 683565275, %v3777
  %v3781 = vshrl.u32 2475754826, %v3778
  %v3782 = vor.u32 %v3780, %v3781
  %v3783 = vshll.u32 2475754826, %v3777
  %v3784 = vshrl.u32 2131351028, %v3778
  %v3785 = vor.u32 %v3783, %v3784
  %v3786 = vshll.u32 2131351028, %v3777
  %v3787 = vshrl.u32 2102212464, %v3778
  %v3788 = vor.u32 %v3786, %v3787
  %v3789 = vshll.u32 2102212464, %v3777
  %v3790 = vshrl.u32 920167782, %v3778
  %v3791 = vor.u32 %v3789, %v3790
  %v3792 = vshll.u32 920167782, %v3777
  %v3793 = vshrl.u32 1326507024, %v3778
  %v3794 = vor.u32 %v3792, %v3793
  %vm3795 = vcmp.lt.s32.totalorder %v3776, 1
  %vm3796 = vcmp.lt.s32.totalorder %v3776, 2
  %vm3797 = vcmp.lt.s32.totalorder %v3776, 3
  %vm3798 = vcmp.lt.s32.totalorder %v3776, 4
  %v3799 = vsel %vm3795, %v3779, %v3782
  %v3800 = vsel %vm3798, %v3788, 2102212464
  %v3801 = vsel %vm3797, %v3785, %v3800
  %v3802 = vsel %vm3796, %v3799, %v3801
  %v3803 = vsel %vm3795, %v3782, %v3785
  %v3804 = vsel %vm3798, %v3791, 920167782
  %v3805 = vsel %vm3797, %v3788, %v3804
  %v3806 = vsel %vm3796, %v3803, %v3805
  %v3807 = vsel %vm3795, %v3785, %v3788
  %v3808 = vsel %vm3798, %v3794, 1326507024
  %v3809 = vsel %vm3797, %v3791, %v3808
  %v3810 = vsel %vm3796, %v3807, %v3809
  %v3811 = vshll.u32 %v3771, 8
  %v3812 = vmul.u32.u64.compose %v3811, %v3810
  %v3813 = vextract.low.u32 %v3812
  %v3814 = vextract.high.u32 %v3812
  %v3815 = vmul.u32.u64.compose %v3811, %v3806
  %v3816 = vextract.low.u32 %v3815
  %v3817 = vextract.high.u32 %v3815
  %v3818 = vmul.u32 %v3811, %v3802
  %v3819 = vadd.s32 %v3814, %v3816
  %vm3820 = vc.u32 %v3814, %v3816
  %v3821 = vadd.s32 %v3817, 1
  %v3822 = vsel %vm3820, %v3821, %v3817
  %v3823 = vadd.s32 %v3818, %v3822
  %v3824 = vadd.s32 %v3823, 536870912
  %v3825 = vshrl.u32 %v3824, 30
  %v3826 = vshll.u32 %v3825, 30
  %v3827 = vsub.s32 %v3823, %v3826
  %vm3828 = vcmp.lt.s32.totalorder %v3827, 0
  %v3829 = vsub.s32 0, %v3827
  %v3830 = vsel %vm3828, %v3829, %v3827
  %v3831 = vclz %v3830
  %v3832 = vsub.s32 %v3831, 2
  %vm3833 = vcmp.gt.s32.totalorder 0, %v3832
  %v3834 = vsel %vm3833, 0, %v3832
  %v3835 = vsub.s32 32, %v3834
  %v3836 = vshll.u32 %v3827, %v3834
  %v3837 = vshrl.u32 %v3819, %v3835
  %v3838 = vor.u32 %v3836, %v3837
  %v3839 = vsub.s32 4294967266, %v3834
  %v3840 = vadd.s32 %v3839, 127
  %v3841 = vshll.u32 %v3840, 23
  %v3842 = vor.u32 4788187, %v3841
  %v3843 = vand.u32 2147483647, %v3842
  %v3845 = vcvt.s32.f32 %v3838
  %v3846 = vmul.f32 %v3845, %v3843
  %v3847 = vxor.u32 %v3846, 2147483648
  %v3848 = vsel %vm3765, %v3847, %v3846
  %v3849 = vsub.s32 4, %v3825
  %v3850 = vsel %vm3765, %v3849, %v3825
  %v3851 = vsel %vm3764, %v145, %v3848
  %v3852 = vsel %vm3764, 0, %v3850
  %v3853 = vcosq.f32.pop %v3851
  %v3854 = vsinq.f32.pop %v3851
  %vm3855 = vweird.f32 %v145
  %v3856 = vand.u32 %v3852, 3
  %vm3857 = vcmp.lt.s32.totalorder %v3856, 2
  %vm3858 = vcmp.eq.s32.totalorder %v3856, 0
  %v3859 = vxor.u32 %v3854, 2147483648
  %v3860 = vsel %vm3858, %v3853, %v3859
  %vm3861 = vcmp.eq.s32.totalorder %v3856, 2
  %v3862 = vxor.u32 %v3853, 2147483648
  %v3863 = vsel %vm3861, %v3862, %v3854
  %v3864 = vsel %vm3857, %v3860, %v3863
  %v3865 = vsel %vm3855, nan, %v3864
  %v3866 = vand.u32 2147483647, %v146
  %vm3867 = vcmp.le.f32.partialorder %v3866, 0.7853982
  %vm3868 = vcmp.lt.s32.totalorder %v146, 0
  %v3869 = vand.u32 %v146, 2139095040
  %v3870 = vshrl.u32 %v3869, 23
  %v3871 = vsub.s32 %v3870, 127
  %v3872 = vand.u32 2147483647, %v146
  %v3873 = vand.u32 %v3872, 8388607
  %v3874 = vor.u32 %v3873, 8388608
  %v3875 = vsub.s32 0, %v3874
  %v3876 = vadd.s32 %v3871, 1
  %vm3877 = vcmp.gt.s32.totalorder %v3876, 0
  %v3878 = vsel %vm3877, %v3876, 0
  %v3879 = vshrl.u32 %v3878, 5
  %v3880 = vand.u32 %v3878, 31
  %v3881 = vsub.s32 32, %v3880
  %v3882 = vshrl.u32 683565275, %v3881
  %v3883 = vshll.u32 683565275, %v3880
  %v3884 = vshrl.u32 2475754826, %v3881
  %v3885 = vor.u32 %v3883, %v3884
  %v3886 = vshll.u32 2475754826, %v3880
  %v3887 = vshrl.u32 2131351028, %v3881
  %v3888 = vor.u32 %v3886, %v3887
  %v3889 = vshll.u32 2131351028, %v3880
  %v3890 = vshrl.u32 2102212464, %v3881
  %v3891 = vor.u32 %v3889, %v3890
  %v3892 = vshll.u32 2102212464, %v3880
  %v3893 = vshrl.u32 920167782, %v3881
  %v3894 = vor.u32 %v3892, %v3893
  %v3895 = vshll.u32 920167782, %v3880
  %v3896 = vshrl.u32 1326507024, %v3881
  %v3897 = vor.u32 %v3895, %v3896
  %vm3898 = vcmp.lt.s32.totalorder %v3879, 1
  %vm3899 = vcmp.lt.s32.totalorder %v3879, 2
  %vm3900 = vcmp.lt.s32.totalorder %v3879, 3
  %vm3901 = vcmp.lt.s32.totalorder %v3879, 4
  %v3902 = vsel %vm3898, %v3882, %v3885
  %v3903 = vsel %vm3901, %v3891, 2102212464
  %v3904 = vsel %vm3900, %v3888, %v3903
  %v3905 = vsel %vm3899, %v3902, %v3904
  %v3906 = vsel %vm3898, %v3885, %v3888
  %v3907 = vsel %vm3901, %v3894, 920167782
  %v3908 = vsel %vm3900, %v3891, %v3907
  %v3909 = vsel %vm3899, %v3906, %v3908
  %v3910 = vsel %vm3898, %v3888, %v3891
  %v3911 = vsel %vm3901, %v3897, 1326507024
  %v3912 = vsel %vm3900, %v3894, %v3911
  %v3913 = vsel %vm3899, %v3910, %v3912
  %v3914 = vshll.u32 %v3874, 8
  %v3915 = vmul.u32.u64.compose %v3914, %v3913
  %v3916 = vextract.low.u32 %v3915
  %v3917 = vextract.high.u32 %v3915
  %v3918 = vmul.u32.u64.compose %v3914, %v3909
  %v3919 = vextract.low.u32 %v3918
  %v3920 = vextract.high.u32 %v3918
  %v3921 = vmul.u32 %v3914, %v3905
  %v3922 = vadd.s32 %v3917, %v3919
  %vm3923 = vc.u32 %v3917, %v3919
  %v3924 = vadd.s32 %v3920, 1
  %v3925 = vsel %vm3923, %v3924, %v3920
  %v3926 = vadd.s32 %v3921, %v3925
  %v3927 = vadd.s32 %v3926, 536870912
  %v3928 = vshrl.u32 %v3927, 30
  %v3929 = vshll.u32 %v3928, 30
  %v3930 = vsub.s32 %v3926, %v3929
  %vm3931 = vcmp.lt.s32.totalorder %v3930, 0
  %v3932 = vsub.s32 0, %v3930
  %v3933 = vsel %vm3931, %v3932, %v3930
  %v3934 = vclz %v3933
  %v3935 = vsub.s32 %v3934, 2
  %vm3936 = vcmp.gt.s32.totalorder 0, %v3935
  %v3937 = vsel %vm3936, 0, %v3935
  %v3938 = vsub.s32 32, %v3937
  %v3939 = vshll.u32 %v3930, %v3937
  %v3940 = vshrl.u32 %v3922, %v3938
  %v3941 = vor.u32 %v3939, %v3940
  %v3942 = vsub.s32 4294967266, %v3937
  %v3943 = vadd.s32 %v3942, 127
  %v3944 = vshll.u32 %v3943, 23
  %v3945 = vor.u32 4788187, %v3944
  %v3946 = vand.u32 2147483647, %v3945
  %v3948 = vcvt.s32.f32 %v3941
  %v3949 = vmul.f32 %v3948, %v3946
  %v3950 = vxor.u32 %v3949, 2147483648
  %v3951 = vsel %vm3868, %v3950, %v3949
  %v3952 = vsub.s32 4, %v3928
  %v3953 = vsel %vm3868, %v3952, %v3928
  %v3954 = vsel %vm3867, %v146, %v3951
  %v3955 = vsel %vm3867, 0, %v3953
  %v3956 = vcosq.f32.pop %v3954
  %v3957 = vsinq.f32.pop %v3954
  %vm3958 = vweird.f32 %v146
  %v3959 = vand.u32 %v3955, 3
  %vm3960 = vcmp.lt.s32.totalorder %v3959, 2
  %vm3961 = vcmp.eq.s32.totalorder %v3959, 0
  %v3962 = vxor.u32 %v3957, 2147483648
  %v3963 = vsel %vm3961, %v3956, %v3962
  %vm3964 = vcmp.eq.s32.totalorder %v3959, 2
  %v3965 = vxor.u32 %v3956, 2147483648
  %v3966 = vsel %vm3964, %v3965, %v3957
  %v3967 = vsel %vm3960, %v3963, %v3966
  %v3968 = vsel %vm3958, nan, %v3967
  %v3969 = vand.u32 2147483647, %v147
  %vm3970 = vcmp.le.f32.partialorder %v3969, 0.7853982
  %vm3971 = vcmp.lt.s32.totalorder %v147, 0
  %v3972 = vand.u32 %v147, 2139095040
  %v3973 = vshrl.u32 %v3972, 23
  %v3974 = vsub.s32 %v3973, 127
  %v3975 = vand.u32 2147483647, %v147
  %v3976 = vand.u32 %v3975, 8388607
  %v3977 = vor.u32 %v3976, 8388608
  %v3978 = vsub.s32 0, %v3977
  %v3979 = vadd.s32 %v3974, 1
  %vm3980 = vcmp.gt.s32.totalorder %v3979, 0
  %v3981 = vsel %vm3980, %v3979, 0
  %v3982 = vshrl.u32 %v3981, 5
  %v3983 = vand.u32 %v3981, 31
  %v3984 = vsub.s32 32, %v3983
  %v3985 = vshrl.u32 683565275, %v3984
  %v3986 = vshll.u32 683565275, %v3983
  %v3987 = vshrl.u32 2475754826, %v3984
  %v3988 = vor.u32 %v3986, %v3987
  %v3989 = vshll.u32 2475754826, %v3983
  %v3990 = vshrl.u32 2131351028, %v3984
  %v3991 = vor.u32 %v3989, %v3990
  %v3992 = vshll.u32 2131351028, %v3983
  %v3993 = vshrl.u32 2102212464, %v3984
  %v3994 = vor.u32 %v3992, %v3993
  %v3995 = vshll.u32 2102212464, %v3983
  %v3996 = vshrl.u32 920167782, %v3984
  %v3997 = vor.u32 %v3995, %v3996
  %v3998 = vshll.u32 920167782, %v3983
  %v3999 = vshrl.u32 1326507024, %v3984
  %v4000 = vor.u32 %v3998, %v3999
  %vm4001 = vcmp.lt.s32.totalorder %v3982, 1
  %vm4002 = vcmp.lt.s32.totalorder %v3982, 2
  %vm4003 = vcmp.lt.s32.totalorder %v3982, 3
  %vm4004 = vcmp.lt.s32.totalorder %v3982, 4
  %v4005 = vsel %vm4001, %v3985, %v3988
  %v4006 = vsel %vm4004, %v3994, 2102212464
  %v4007 = vsel %vm4003, %v3991, %v4006
  %v4008 = vsel %vm4002, %v4005, %v4007
  %v4009 = vsel %vm4001, %v3988, %v3991
  %v4010 = vsel %vm4004, %v3997, 920167782
  %v4011 = vsel %vm4003, %v3994, %v4010
  %v4012 = vsel %vm4002, %v4009, %v4011
  %v4013 = vsel %vm4001, %v3991, %v3994
  %v4014 = vsel %vm4004, %v4000, 1326507024
  %v4015 = vsel %vm4003, %v3997, %v4014
  %v4016 = vsel %vm4002, %v4013, %v4015
  %v4017 = vshll.u32 %v3977, 8
  %v4018 = vmul.u32.u64.compose %v4017, %v4016
  %v4019 = vextract.low.u32 %v4018
  %v4020 = vextract.high.u32 %v4018
  %v4021 = vmul.u32.u64.compose %v4017, %v4012
  %v4022 = vextract.low.u32 %v4021
  %v4023 = vextract.high.u32 %v4021
  %v4024 = vmul.u32 %v4017, %v4008
  %v4025 = vadd.s32 %v4020, %v4022
  %vm4026 = vc.u32 %v4020, %v4022
  %v4027 = vadd.s32 %v4023, 1
  %v4028 = vsel %vm4026, %v4027, %v4023
  %v4029 = vadd.s32 %v4024, %v4028
  %v4030 = vadd.s32 %v4029, 536870912
  %v4031 = vshrl.u32 %v4030, 30
  %v4032 = vshll.u32 %v4031, 30
  %v4033 = vsub.s32 %v4029, %v4032
  %vm4034 = vcmp.lt.s32.totalorder %v4033, 0
  %v4035 = vsub.s32 0, %v4033
  %v4036 = vsel %vm4034, %v4035, %v4033
  %v4037 = vclz %v4036
  %v4038 = vsub.s32 %v4037, 2
  %vm4039 = vcmp.gt.s32.totalorder 0, %v4038
  %v4040 = vsel %vm4039, 0, %v4038
  %v4041 = vsub.s32 32, %v4040
  %v4042 = vshll.u32 %v4033, %v4040
  %v4043 = vshrl.u32 %v4025, %v4041
  %v4044 = vor.u32 %v4042, %v4043
  %v4045 = vsub.s32 4294967266, %v4040
  %v4046 = vadd.s32 %v4045, 127
  %v4047 = vshll.u32 %v4046, 23
  %v4048 = vor.u32 4788187, %v4047
  %v4049 = vand.u32 2147483647, %v4048
  %v4051 = vcvt.s32.f32 %v4044
  %v4052 = vmul.f32 %v4051, %v4049
  %v4053 = vxor.u32 %v4052, 2147483648
  %v4054 = vsel %vm3971, %v4053, %v4052
  %v4055 = vsub.s32 4, %v4031
  %v4056 = vsel %vm3971, %v4055, %v4031
  %v4057 = vsel %vm3970, %v147, %v4054
  %v4058 = vsel %vm3970, 0, %v4056
  %v4059 = vcosq.f32.pop %v4057
  %v4060 = vsinq.f32.pop %v4057
  %vm4061 = vweird.f32 %v147
  %v4062 = vand.u32 %v4058, 3
  %vm4063 = vcmp.lt.s32.totalorder %v4062, 2
  %vm4064 = vcmp.eq.s32.totalorder %v4062, 0
  %v4065 = vxor.u32 %v4060, 2147483648
  %v4066 = vsel %vm4064, %v4059, %v4065
  %vm4067 = vcmp.eq.s32.totalorder %v4062, 2
  %v4068 = vxor.u32 %v4059, 2147483648
  %v4069 = vsel %vm4067, %v4068, %v4060
  %v4070 = vsel %vm4063, %v4066, %v4069
  %v4071 = vsel %vm4061, nan, %v4070
  %v4072 = vand.u32 2147483647, %v148
  %vm4073 = vcmp.le.f32.partialorder %v4072, 0.7853982
  %vm4074 = vcmp.lt.s32.totalorder %v148, 0
  %v4075 = vand.u32 %v148, 2139095040
  %v4076 = vshrl.u32 %v4075, 23
  %v4077 = vsub.s32 %v4076, 127
  %v4078 = vand.u32 2147483647, %v148
  %v4079 = vand.u32 %v4078, 8388607
  %v4080 = vor.u32 %v4079, 8388608
  %v4081 = vsub.s32 0, %v4080
  %v4082 = vadd.s32 %v4077, 1
  %vm4083 = vcmp.gt.s32.totalorder %v4082, 0
  %v4084 = vsel %vm4083, %v4082, 0
  %v4085 = vshrl.u32 %v4084, 5
  %v4086 = vand.u32 %v4084, 31
  %v4087 = vsub.s32 32, %v4086
  %v4088 = vshrl.u32 683565275, %v4087
  %v4089 = vshll.u32 683565275, %v4086
  %v4090 = vshrl.u32 2475754826, %v4087
  %v4091 = vor.u32 %v4089, %v4090
  %v4092 = vshll.u32 2475754826, %v4086
  %v4093 = vshrl.u32 2131351028, %v4087
  %v4094 = vor.u32 %v4092, %v4093
  %v4095 = vshll.u32 2131351028, %v4086
  %v4096 = vshrl.u32 2102212464, %v4087
  %v4097 = vor.u32 %v4095, %v4096
  %v4098 = vshll.u32 2102212464, %v4086
  %v4099 = vshrl.u32 920167782, %v4087
  %v4100 = vor.u32 %v4098, %v4099
  %v4101 = vshll.u32 920167782, %v4086
  %v4102 = vshrl.u32 1326507024, %v4087
  %v4103 = vor.u32 %v4101, %v4102
  %vm4104 = vcmp.lt.s32.totalorder %v4085, 1
  %vm4105 = vcmp.lt.s32.totalorder %v4085, 2
  %vm4106 = vcmp.lt.s32.totalorder %v4085, 3
  %vm4107 = vcmp.lt.s32.totalorder %v4085, 4
  %v4108 = vsel %vm4104, %v4088, %v4091
  %v4109 = vsel %vm4107, %v4097, 2102212464
  %v4110 = vsel %vm4106, %v4094, %v4109
  %v4111 = vsel %vm4105, %v4108, %v4110
  %v4112 = vsel %vm4104, %v4091, %v4094
  %v4113 = vsel %vm4107, %v4100, 920167782
  %v4114 = vsel %vm4106, %v4097, %v4113
  %v4115 = vsel %vm4105, %v4112, %v4114
  %v4116 = vsel %vm4104, %v4094, %v4097
  %v4117 = vsel %vm4107, %v4103, 1326507024
  %v4118 = vsel %vm4106, %v4100, %v4117
  %v4119 = vsel %vm4105, %v4116, %v4118
  %v4120 = vshll.u32 %v4080, 8
  %v4121 = vmul.u32.u64.compose %v4120, %v4119
  %v4122 = vextract.low.u32 %v4121
  %v4123 = vextract.high.u32 %v4121
  %v4124 = vmul.u32.u64.compose %v4120, %v4115
  %v4125 = vextract.low.u32 %v4124
  %v4126 = vextract.high.u32 %v4124
  %v4127 = vmul.u32 %v4120, %v4111
  %v4128 = vadd.s32 %v4123, %v4125
  %vm4129 = vc.u32 %v4123, %v4125
  %v4130 = vadd.s32 %v4126, 1
  %v4131 = vsel %vm4129, %v4130, %v4126
  %v4132 = vadd.s32 %v4127, %v4131
  %v4133 = vadd.s32 %v4132, 536870912
  %v4134 = vshrl.u32 %v4133, 30
  %v4135 = vshll.u32 %v4134, 30
  %v4136 = vsub.s32 %v4132, %v4135
  %vm4137 = vcmp.lt.s32.totalorder %v4136, 0
  %v4138 = vsub.s32 0, %v4136
  %v4139 = vsel %vm4137, %v4138, %v4136
  %v4140 = vclz %v4139
  %v4141 = vsub.s32 %v4140, 2
  %vm4142 = vcmp.gt.s32.totalorder 0, %v4141
  %v4143 = vsel %vm4142, 0, %v4141
  %v4144 = vsub.s32 32, %v4143
  %v4145 = vshll.u32 %v4136, %v4143
  %v4146 = vshrl.u32 %v4128, %v4144
  %v4147 = vor.u32 %v4145, %v4146
  %v4148 = vsub.s32 4294967266, %v4143
  %v4149 = vadd.s32 %v4148, 127
  %v4150 = vshll.u32 %v4149, 23
  %v4151 = vor.u32 4788187, %v4150
  %v4152 = vand.u32 2147483647, %v4151
  %v4154 = vcvt.s32.f32 %v4147
  %v4155 = vmul.f32 %v4154, %v4152
  %v4156 = vxor.u32 %v4155, 2147483648
  %v4157 = vsel %vm4074, %v4156, %v4155
  %v4158 = vsub.s32 4, %v4134
  %v4159 = vsel %vm4074, %v4158, %v4134
  %v4160 = vsel %vm4073, %v148, %v4157
  %v4161 = vsel %vm4073, 0, %v4159
  %v4162 = vcosq.f32.pop %v4160
  %v4163 = vsinq.f32.pop %v4160
  %vm4164 = vweird.f32 %v148
  %v4165 = vand.u32 %v4161, 3
  %vm4166 = vcmp.lt.s32.totalorder %v4165, 2
  %vm4167 = vcmp.eq.s32.totalorder %v4165, 0
  %v4168 = vxor.u32 %v4163, 2147483648
  %v4169 = vsel %vm4167, %v4162, %v4168
  %vm4170 = vcmp.eq.s32.totalorder %v4165, 2
  %v4171 = vxor.u32 %v4162, 2147483648
  %v4172 = vsel %vm4170, %v4171, %v4163
  %v4173 = vsel %vm4166, %v4169, %v4172
  %v4174 = vsel %vm4164, nan, %v4173
  %v4175 = vand.u32 2147483647, %v149
  %vm4176 = vcmp.le.f32.partialorder %v4175, 0.7853982
  %vm4177 = vcmp.lt.s32.totalorder %v149, 0
  %v4178 = vand.u32 %v149, 2139095040
  %v4179 = vshrl.u32 %v4178, 23
  %v4180 = vsub.s32 %v4179, 127
  %v4181 = vand.u32 2147483647, %v149
  %v4182 = vand.u32 %v4181, 8388607
  %v4183 = vor.u32 %v4182, 8388608
  %v4184 = vsub.s32 0, %v4183
  %v4185 = vadd.s32 %v4180, 1
  %vm4186 = vcmp.gt.s32.totalorder %v4185, 0
  %v4187 = vsel %vm4186, %v4185, 0
  %v4188 = vshrl.u32 %v4187, 5
  %v4189 = vand.u32 %v4187, 31
  %v4190 = vsub.s32 32, %v4189
  %v4191 = vshrl.u32 683565275, %v4190
  %v4192 = vshll.u32 683565275, %v4189
  %v4193 = vshrl.u32 2475754826, %v4190
  %v4194 = vor.u32 %v4192, %v4193
  %v4195 = vshll.u32 2475754826, %v4189
  %v4196 = vshrl.u32 2131351028, %v4190
  %v4197 = vor.u32 %v4195, %v4196
  %v4198 = vshll.u32 2131351028, %v4189
  %v4199 = vshrl.u32 2102212464, %v4190
  %v4200 = vor.u32 %v4198, %v4199
  %v4201 = vshll.u32 2102212464, %v4189
  %v4202 = vshrl.u32 920167782, %v4190
  %v4203 = vor.u32 %v4201, %v4202
  %v4204 = vshll.u32 920167782, %v4189
  %v4205 = vshrl.u32 1326507024, %v4190
  %v4206 = vor.u32 %v4204, %v4205
  %vm4207 = vcmp.lt.s32.totalorder %v4188, 1
  %vm4208 = vcmp.lt.s32.totalorder %v4188, 2
  %vm4209 = vcmp.lt.s32.totalorder %v4188, 3
  %vm4210 = vcmp.lt.s32.totalorder %v4188, 4
  %v4211 = vsel %vm4207, %v4191, %v4194
  %v4212 = vsel %vm4210, %v4200, 2102212464
  %v4213 = vsel %vm4209, %v4197, %v4212
  %v4214 = vsel %vm4208, %v4211, %v4213
  %v4215 = vsel %vm4207, %v4194, %v4197
  %v4216 = vsel %vm4210, %v4203, 920167782
  %v4217 = vsel %vm4209, %v4200, %v4216
  %v4218 = vsel %vm4208, %v4215, %v4217
  %v4219 = vsel %vm4207, %v4197, %v4200
  %v4220 = vsel %vm4210, %v4206, 1326507024
  %v4221 = vsel %vm4209, %v4203, %v4220
  %v4222 = vsel %vm4208, %v4219, %v4221
  %v4223 = vshll.u32 %v4183, 8
  %v4224 = vmul.u32.u64.compose %v4223, %v4222
  %v4225 = vextract.low.u32 %v4224
  %v4226 = vextract.high.u32 %v4224
  %v4227 = vmul.u32.u64.compose %v4223, %v4218
  %v4228 = vextract.low.u32 %v4227
  %v4229 = vextract.high.u32 %v4227
  %v4230 = vmul.u32 %v4223, %v4214
  %v4231 = vadd.s32 %v4226, %v4228
  %vm4232 = vc.u32 %v4226, %v4228
  %v4233 = vadd.s32 %v4229, 1
  %v4234 = vsel %vm4232, %v4233, %v4229
  %v4235 = vadd.s32 %v4230, %v4234
  %v4236 = vadd.s32 %v4235, 536870912
  %v4237 = vshrl.u32 %v4236, 30
  %v4238 = vshll.u32 %v4237, 30
  %v4239 = vsub.s32 %v4235, %v4238
  %vm4240 = vcmp.lt.s32.totalorder %v4239, 0
  %v4241 = vsub.s32 0, %v4239
  %v4242 = vsel %vm4240, %v4241, %v4239
  %v4243 = vclz %v4242
  %v4244 = vsub.s32 %v4243, 2
  %vm4245 = vcmp.gt.s32.totalorder 0, %v4244
  %v4246 = vsel %vm4245, 0, %v4244
  %v4247 = vsub.s32 32, %v4246
  %v4248 = vshll.u32 %v4239, %v4246
  %v4249 = vshrl.u32 %v4231, %v4247
  %v4250 = vor.u32 %v4248, %v4249
  %v4251 = vsub.s32 4294967266, %v4246
  %v4252 = vadd.s32 %v4251, 127
  %v4253 = vshll.u32 %v4252, 23
  %v4254 = vor.u32 4788187, %v4253
  %v4255 = vand.u32 2147483647, %v4254
  %v4257 = vcvt.s32.f32 %v4250
  %v4258 = vmul.f32 %v4257, %v4255
  %v4259 = vxor.u32 %v4258, 2147483648
  %v4260 = vsel %vm4177, %v4259, %v4258
  %v4261 = vsub.s32 4, %v4237
  %v4262 = vsel %vm4177, %v4261, %v4237
  %v4263 = vsel %vm4176, %v149, %v4260
  %v4264 = vsel %vm4176, 0, %v4262
  %v4265 = vcosq.f32.pop %v4263
  %v4266 = vsinq.f32.pop %v4263
  %vm4267 = vweird.f32 %v149
  %v4268 = vand.u32 %v4264, 3
  %vm4269 = vcmp.lt.s32.totalorder %v4268, 2
  %vm4270 = vcmp.eq.s32.totalorder %v4268, 0
  %v4271 = vxor.u32 %v4266, 2147483648
  %v4272 = vsel %vm4270, %v4265, %v4271
  %vm4273 = vcmp.eq.s32.totalorder %v4268, 2
  %v4274 = vxor.u32 %v4265, 2147483648
  %v4275 = vsel %vm4273, %v4274, %v4266
  %v4276 = vsel %vm4269, %v4272, %v4275
  %v4277 = vsel %vm4267, nan, %v4276
  %v4278 = vand.u32 2147483647, %v150
  %vm4279 = vcmp.le.f32.partialorder %v4278, 0.7853982
  %vm4280 = vcmp.lt.s32.totalorder %v150, 0
  %v4281 = vand.u32 %v150, 2139095040
  %v4282 = vshrl.u32 %v4281, 23
  %v4283 = vsub.s32 %v4282, 127
  %v4284 = vand.u32 2147483647, %v150
  %v4285 = vand.u32 %v4284, 8388607
  %v4286 = vor.u32 %v4285, 8388608
  %v4287 = vsub.s32 0, %v4286
  %v4288 = vadd.s32 %v4283, 1
  %vm4289 = vcmp.gt.s32.totalorder %v4288, 0
  %v4290 = vsel %vm4289, %v4288, 0
  %v4291 = vshrl.u32 %v4290, 5
  %v4292 = vand.u32 %v4290, 31
  %v4293 = vsub.s32 32, %v4292
  %v4294 = vshrl.u32 683565275, %v4293
  %v4295 = vshll.u32 683565275, %v4292
  %v4296 = vshrl.u32 2475754826, %v4293
  %v4297 = vor.u32 %v4295, %v4296
  %v4298 = vshll.u32 2475754826, %v4292
  %v4299 = vshrl.u32 2131351028, %v4293
  %v4300 = vor.u32 %v4298, %v4299
  %v4301 = vshll.u32 2131351028, %v4292
  %v4302 = vshrl.u32 2102212464, %v4293
  %v4303 = vor.u32 %v4301, %v4302
  %v4304 = vshll.u32 2102212464, %v4292
  %v4305 = vshrl.u32 920167782, %v4293
  %v4306 = vor.u32 %v4304, %v4305
  %v4307 = vshll.u32 920167782, %v4292
  %v4308 = vshrl.u32 1326507024, %v4293
  %v4309 = vor.u32 %v4307, %v4308
  %vm4310 = vcmp.lt.s32.totalorder %v4291, 1
  %vm4311 = vcmp.lt.s32.totalorder %v4291, 2
  %vm4312 = vcmp.lt.s32.totalorder %v4291, 3
  %vm4313 = vcmp.lt.s32.totalorder %v4291, 4
  %v4314 = vsel %vm4310, %v4294, %v4297
  %v4315 = vsel %vm4313, %v4303, 2102212464
  %v4316 = vsel %vm4312, %v4300, %v4315
  %v4317 = vsel %vm4311, %v4314, %v4316
  %v4318 = vsel %vm4310, %v4297, %v4300
  %v4319 = vsel %vm4313, %v4306, 920167782
  %v4320 = vsel %vm4312, %v4303, %v4319
  %v4321 = vsel %vm4311, %v4318, %v4320
  %v4322 = vsel %vm4310, %v4300, %v4303
  %v4323 = vsel %vm4313, %v4309, 1326507024
  %v4324 = vsel %vm4312, %v4306, %v4323
  %v4325 = vsel %vm4311, %v4322, %v4324
  %v4326 = vshll.u32 %v4286, 8
  %v4327 = vmul.u32.u64.compose %v4326, %v4325
  %v4328 = vextract.low.u32 %v4327
  %v4329 = vextract.high.u32 %v4327
  %v4330 = vmul.u32.u64.compose %v4326, %v4321
  %v4331 = vextract.low.u32 %v4330
  %v4332 = vextract.high.u32 %v4330
  %v4333 = vmul.u32 %v4326, %v4317
  %v4334 = vadd.s32 %v4329, %v4331
  %vm4335 = vc.u32 %v4329, %v4331
  %v4336 = vadd.s32 %v4332, 1
  %v4337 = vsel %vm4335, %v4336, %v4332
  %v4338 = vadd.s32 %v4333, %v4337
  %v4339 = vadd.s32 %v4338, 536870912
  %v4340 = vshrl.u32 %v4339, 30
  %v4341 = vshll.u32 %v4340, 30
  %v4342 = vsub.s32 %v4338, %v4341
  %vm4343 = vcmp.lt.s32.totalorder %v4342, 0
  %v4344 = vsub.s32 0, %v4342
  %v4345 = vsel %vm4343, %v4344, %v4342
  %v4346 = vclz %v4345
  %v4347 = vsub.s32 %v4346, 2
  %vm4348 = vcmp.gt.s32.totalorder 0, %v4347
  %v4349 = vsel %vm4348, 0, %v4347
  %v4350 = vsub.s32 32, %v4349
  %v4351 = vshll.u32 %v4342, %v4349
  %v4352 = vshrl.u32 %v4334, %v4350
  %v4353 = vor.u32 %v4351, %v4352
  %v4354 = vsub.s32 4294967266, %v4349
  %v4355 = vadd.s32 %v4354, 127
  %v4356 = vshll.u32 %v4355, 23
  %v4357 = vor.u32 4788187, %v4356
  %v4358 = vand.u32 2147483647, %v4357
  %v4360 = vcvt.s32.f32 %v4353
  %v4361 = vmul.f32 %v4360, %v4358
  %v4362 = vxor.u32 %v4361, 2147483648
  %v4363 = vsel %vm4280, %v4362, %v4361
  %v4364 = vsub.s32 4, %v4340
  %v4365 = vsel %vm4280, %v4364, %v4340
  %v4366 = vsel %vm4279, %v150, %v4363
  %v4367 = vsel %vm4279, 0, %v4365
  %v4368 = vcosq.f32.pop %v4366
  %v4369 = vsinq.f32.pop %v4366
  %vm4370 = vweird.f32 %v150
  %v4371 = vand.u32 %v4367, 3
  %vm4372 = vcmp.lt.s32.totalorder %v4371, 2
  %vm4373 = vcmp.eq.s32.totalorder %v4371, 0
  %v4374 = vxor.u32 %v4369, 2147483648
  %v4375 = vsel %vm4373, %v4368, %v4374
  %vm4376 = vcmp.eq.s32.totalorder %v4371, 2
  %v4377 = vxor.u32 %v4368, 2147483648
  %v4378 = vsel %vm4376, %v4377, %v4369
  %v4379 = vsel %vm4372, %v4375, %v4378
  %v4380 = vsel %vm4370, nan, %v4379
  %v4381 = vand.u32 2147483647, %v151
  %vm4382 = vcmp.le.f32.partialorder %v4381, 0.7853982
  %vm4383 = vcmp.lt.s32.totalorder %v151, 0
  %v4384 = vand.u32 %v151, 2139095040
  %v4385 = vshrl.u32 %v4384, 23
  %v4386 = vsub.s32 %v4385, 127
  %v4387 = vand.u32 2147483647, %v151
  %v4388 = vand.u32 %v4387, 8388607
  %v4389 = vor.u32 %v4388, 8388608
  %v4390 = vsub.s32 0, %v4389
  %v4391 = vadd.s32 %v4386, 1
  %vm4392 = vcmp.gt.s32.totalorder %v4391, 0
  %v4393 = vsel %vm4392, %v4391, 0
  %v4394 = vshrl.u32 %v4393, 5
  %v4395 = vand.u32 %v4393, 31
  %v4396 = vsub.s32 32, %v4395
  %v4397 = vshrl.u32 683565275, %v4396
  %v4398 = vshll.u32 683565275, %v4395
  %v4399 = vshrl.u32 2475754826, %v4396
  %v4400 = vor.u32 %v4398, %v4399
  %v4401 = vshll.u32 2475754826, %v4395
  %v4402 = vshrl.u32 2131351028, %v4396
  %v4403 = vor.u32 %v4401, %v4402
  %v4404 = vshll.u32 2131351028, %v4395
  %v4405 = vshrl.u32 2102212464, %v4396
  %v4406 = vor.u32 %v4404, %v4405
  %v4407 = vshll.u32 2102212464, %v4395
  %v4408 = vshrl.u32 920167782, %v4396
  %v4409 = vor.u32 %v4407, %v4408
  %v4410 = vshll.u32 920167782, %v4395
  %v4411 = vshrl.u32 1326507024, %v4396
  %v4412 = vor.u32 %v4410, %v4411
  %vm4413 = vcmp.lt.s32.totalorder %v4394, 1
  %vm4414 = vcmp.lt.s32.totalorder %v4394, 2
  %vm4415 = vcmp.lt.s32.totalorder %v4394, 3
  %vm4416 = vcmp.lt.s32.totalorder %v4394, 4
  %v4417 = vsel %vm4413, %v4397, %v4400
  %v4418 = vsel %vm4416, %v4406, 2102212464
  %v4419 = vsel %vm4415, %v4403, %v4418
  %v4420 = vsel %vm4414, %v4417, %v4419
  %v4421 = vsel %vm4413, %v4400, %v4403
  %v4422 = vsel %vm4416, %v4409, 920167782
  %v4423 = vsel %vm4415, %v4406, %v4422
  %v4424 = vsel %vm4414, %v4421, %v4423
  %v4425 = vsel %vm4413, %v4403, %v4406
  %v4426 = vsel %vm4416, %v4412, 1326507024
  %v4427 = vsel %vm4415, %v4409, %v4426
  %v4428 = vsel %vm4414, %v4425, %v4427
  %v4429 = vshll.u32 %v4389, 8
  %v4430 = vmul.u32.u64.compose %v4429, %v4428
  %v4431 = vextract.low.u32 %v4430
  %v4432 = vextract.high.u32 %v4430
  %v4433 = vmul.u32.u64.compose %v4429, %v4424
  %v4434 = vextract.low.u32 %v4433
  %v4435 = vextract.high.u32 %v4433
  %v4436 = vmul.u32 %v4429, %v4420
  %v4437 = vadd.s32 %v4432, %v4434
  %vm4438 = vc.u32 %v4432, %v4434
  %v4439 = vadd.s32 %v4435, 1
  %v4440 = vsel %vm4438, %v4439, %v4435
  %v4441 = vadd.s32 %v4436, %v4440
  %v4442 = vadd.s32 %v4441, 536870912
  %v4443 = vshrl.u32 %v4442, 30
  %v4444 = vshll.u32 %v4443, 30
  %v4445 = vsub.s32 %v4441, %v4444
  %vm4446 = vcmp.lt.s32.totalorder %v4445, 0
  %v4447 = vsub.s32 0, %v4445
  %v4448 = vsel %vm4446, %v4447, %v4445
  %v4449 = vclz %v4448
  %v4450 = vsub.s32 %v4449, 2
  %vm4451 = vcmp.gt.s32.totalorder 0, %v4450
  %v4452 = vsel %vm4451, 0, %v4450
  %v4453 = vsub.s32 32, %v4452
  %v4454 = vshll.u32 %v4445, %v4452
  %v4455 = vshrl.u32 %v4437, %v4453
  %v4456 = vor.u32 %v4454, %v4455
  %v4457 = vsub.s32 4294967266, %v4452
  %v4458 = vadd.s32 %v4457, 127
  %v4459 = vshll.u32 %v4458, 23
  %v4460 = vor.u32 4788187, %v4459
  %v4461 = vand.u32 2147483647, %v4460
  %v4463 = vcvt.s32.f32 %v4456
  %v4464 = vmul.f32 %v4463, %v4461
  %v4465 = vxor.u32 %v4464, 2147483648
  %v4466 = vsel %vm4383, %v4465, %v4464
  %v4467 = vsub.s32 4, %v4443
  %v4468 = vsel %vm4383, %v4467, %v4443
  %v4469 = vsel %vm4382, %v151, %v4466
  %v4470 = vsel %vm4382, 0, %v4468
  %v4471 = vcosq.f32.pop %v4469
  %v4472 = vsinq.f32.pop %v4469
  %vm4473 = vweird.f32 %v151
  %v4474 = vand.u32 %v4470, 3
  %vm4475 = vcmp.lt.s32.totalorder %v4474, 2
  %vm4476 = vcmp.eq.s32.totalorder %v4474, 0
  %v4477 = vxor.u32 %v4472, 2147483648
  %v4478 = vsel %vm4476, %v4471, %v4477
  %vm4479 = vcmp.eq.s32.totalorder %v4474, 2
  %v4480 = vxor.u32 %v4471, 2147483648
  %v4481 = vsel %vm4479, %v4480, %v4472
  %v4482 = vsel %vm4475, %v4478, %v4481
  %v4483 = vsel %vm4473, nan, %v4482
  %v4484 = vand.u32 2147483647, %v152
  %vm4485 = vcmp.le.f32.partialorder %v4484, 0.7853982
  %vm4486 = vcmp.lt.s32.totalorder %v152, 0
  %v4487 = vand.u32 %v152, 2139095040
  %v4488 = vshrl.u32 %v4487, 23
  %v4489 = vsub.s32 %v4488, 127
  %v4490 = vand.u32 2147483647, %v152
  %v4491 = vand.u32 %v4490, 8388607
  %v4492 = vor.u32 %v4491, 8388608
  %v4493 = vsub.s32 0, %v4492
  %v4494 = vadd.s32 %v4489, 1
  %vm4495 = vcmp.gt.s32.totalorder %v4494, 0
  %v4496 = vsel %vm4495, %v4494, 0
  %v4497 = vshrl.u32 %v4496, 5
  %v4498 = vand.u32 %v4496, 31
  %v4499 = vsub.s32 32, %v4498
  %v4500 = vshrl.u32 683565275, %v4499
  %v4501 = vshll.u32 683565275, %v4498
  %v4502 = vshrl.u32 2475754826, %v4499
  %v4503 = vor.u32 %v4501, %v4502
  %v4504 = vshll.u32 2475754826, %v4498
  %v4505 = vshrl.u32 2131351028, %v4499
  %v4506 = vor.u32 %v4504, %v4505
  %v4507 = vshll.u32 2131351028, %v4498
  %v4508 = vshrl.u32 2102212464, %v4499
  %v4509 = vor.u32 %v4507, %v4508
  %v4510 = vshll.u32 2102212464, %v4498
  %v4511 = vshrl.u32 920167782, %v4499
  %v4512 = vor.u32 %v4510, %v4511
  %v4513 = vshll.u32 920167782, %v4498
  %v4514 = vshrl.u32 1326507024, %v4499
  %v4515 = vor.u32 %v4513, %v4514
  %vm4516 = vcmp.lt.s32.totalorder %v4497, 1
  %vm4517 = vcmp.lt.s32.totalorder %v4497, 2
  %vm4518 = vcmp.lt.s32.totalorder %v4497, 3
  %vm4519 = vcmp.lt.s32.totalorder %v4497, 4
  %v4520 = vsel %vm4516, %v4500, %v4503
  %v4521 = vsel %vm4519, %v4509, 2102212464
  %v4522 = vsel %vm4518, %v4506, %v4521
  %v4523 = vsel %vm4517, %v4520, %v4522
  %v4524 = vsel %vm4516, %v4503, %v4506
  %v4525 = vsel %vm4519, %v4512, 920167782
  %v4526 = vsel %vm4518, %v4509, %v4525
  %v4527 = vsel %vm4517, %v4524, %v4526
  %v4528 = vsel %vm4516, %v4506, %v4509
  %v4529 = vsel %vm4519, %v4515, 1326507024
  %v4530 = vsel %vm4518, %v4512, %v4529
  %v4531 = vsel %vm4517, %v4528, %v4530
  %v4532 = vshll.u32 %v4492, 8
  %v4533 = vmul.u32.u64.compose %v4532, %v4531
  %v4534 = vextract.low.u32 %v4533
  %v4535 = vextract.high.u32 %v4533
  %v4536 = vmul.u32.u64.compose %v4532, %v4527
  %v4537 = vextract.low.u32 %v4536
  %v4538 = vextract.high.u32 %v4536
  %v4539 = vmul.u32 %v4532, %v4523
  %v4540 = vadd.s32 %v4535, %v4537
  %vm4541 = vc.u32 %v4535, %v4537
  %v4542 = vadd.s32 %v4538, 1
  %v4543 = vsel %vm4541, %v4542, %v4538
  %v4544 = vadd.s32 %v4539, %v4543
  %v4545 = vadd.s32 %v4544, 536870912
  %v4546 = vshrl.u32 %v4545, 30
  %v4547 = vshll.u32 %v4546, 30
  %v4548 = vsub.s32 %v4544, %v4547
  %vm4549 = vcmp.lt.s32.totalorder %v4548, 0
  %v4550 = vsub.s32 0, %v4548
  %v4551 = vsel %vm4549, %v4550, %v4548
  %v4552 = vclz %v4551
  %v4553 = vsub.s32 %v4552, 2
  %vm4554 = vcmp.gt.s32.totalorder 0, %v4553
  %v4555 = vsel %vm4554, 0, %v4553
  %v4556 = vsub.s32 32, %v4555
  %v4557 = vshll.u32 %v4548, %v4555
  %v4558 = vshrl.u32 %v4540, %v4556
  %v4559 = vor.u32 %v4557, %v4558
  %v4560 = vsub.s32 4294967266, %v4555
  %v4561 = vadd.s32 %v4560, 127
  %v4562 = vshll.u32 %v4561, 23
  %v4563 = vor.u32 4788187, %v4562
  %v4564 = vand.u32 2147483647, %v4563
  %v4566 = vcvt.s32.f32 %v4559
  %v4567 = vmul.f32 %v4566, %v4564
  %v4568 = vxor.u32 %v4567, 2147483648
  %v4569 = vsel %vm4486, %v4568, %v4567
  %v4570 = vsub.s32 4, %v4546
  %v4571 = vsel %vm4486, %v4570, %v4546
  %v4572 = vsel %vm4485, %v152, %v4569
  %v4573 = vsel %vm4485, 0, %v4571
  %v4574 = vcosq.f32.pop %v4572
  %v4575 = vsinq.f32.pop %v4572
  %vm4576 = vweird.f32 %v152
  %v4577 = vand.u32 %v4573, 3
  %vm4578 = vcmp.lt.s32.totalorder %v4577, 2
  %vm4579 = vcmp.eq.s32.totalorder %v4577, 0
  %v4580 = vxor.u32 %v4575, 2147483648
  %v4581 = vsel %vm4579, %v4574, %v4580
  %vm4582 = vcmp.eq.s32.totalorder %v4577, 2
  %v4583 = vxor.u32 %v4574, 2147483648
  %v4584 = vsel %vm4582, %v4583, %v4575
  %v4585 = vsel %vm4578, %v4581, %v4584
  %v4586 = vsel %vm4576, nan, %v4585
  %v4587 = vand.u32 2147483647, %v153
  %vm4588 = vcmp.le.f32.partialorder %v4587, 0.7853982
  %vm4589 = vcmp.lt.s32.totalorder %v153, 0
  %v4590 = vand.u32 %v153, 2139095040
  %v4591 = vshrl.u32 %v4590, 23
  %v4592 = vsub.s32 %v4591, 127
  %v4593 = vand.u32 2147483647, %v153
  %v4594 = vand.u32 %v4593, 8388607
  %v4595 = vor.u32 %v4594, 8388608
  %v4596 = vsub.s32 0, %v4595
  %v4597 = vadd.s32 %v4592, 1
  %vm4598 = vcmp.gt.s32.totalorder %v4597, 0
  %v4599 = vsel %vm4598, %v4597, 0
  %v4600 = vshrl.u32 %v4599, 5
  %v4601 = vand.u32 %v4599, 31
  %v4602 = vsub.s32 32, %v4601
  %v4603 = vshrl.u32 683565275, %v4602
  %v4604 = vshll.u32 683565275, %v4601
  %v4605 = vshrl.u32 2475754826, %v4602
  %v4606 = vor.u32 %v4604, %v4605
  %v4607 = vshll.u32 2475754826, %v4601
  %v4608 = vshrl.u32 2131351028, %v4602
  %v4609 = vor.u32 %v4607, %v4608
  %v4610 = vshll.u32 2131351028, %v4601
  %v4611 = vshrl.u32 2102212464, %v4602
  %v4612 = vor.u32 %v4610, %v4611
  %v4613 = vshll.u32 2102212464, %v4601
  %v4614 = vshrl.u32 920167782, %v4602
  %v4615 = vor.u32 %v4613, %v4614
  %v4616 = vshll.u32 920167782, %v4601
  %v4617 = vshrl.u32 1326507024, %v4602
  %v4618 = vor.u32 %v4616, %v4617
  %vm4619 = vcmp.lt.s32.totalorder %v4600, 1
  %vm4620 = vcmp.lt.s32.totalorder %v4600, 2
  %vm4621 = vcmp.lt.s32.totalorder %v4600, 3
  %vm4622 = vcmp.lt.s32.totalorder %v4600, 4
  %v4623 = vsel %vm4619, %v4603, %v4606
  %v4624 = vsel %vm4622, %v4612, 2102212464
  %v4625 = vsel %vm4621, %v4609, %v4624
  %v4626 = vsel %vm4620, %v4623, %v4625
  %v4627 = vsel %vm4619, %v4606, %v4609
  %v4628 = vsel %vm4622, %v4615, 920167782
  %v4629 = vsel %vm4621, %v4612, %v4628
  %v4630 = vsel %vm4620, %v4627, %v4629
  %v4631 = vsel %vm4619, %v4609, %v4612
  %v4632 = vsel %vm4622, %v4618, 1326507024
  %v4633 = vsel %vm4621, %v4615, %v4632
  %v4634 = vsel %vm4620, %v4631, %v4633
  %v4635 = vshll.u32 %v4595, 8
  %v4636 = vmul.u32.u64.compose %v4635, %v4634
  %v4637 = vextract.low.u32 %v4636
  %v4638 = vextract.high.u32 %v4636
  %v4639 = vmul.u32.u64.compose %v4635, %v4630
  %v4640 = vextract.low.u32 %v4639
  %v4641 = vextract.high.u32 %v4639
  %v4642 = vmul.u32 %v4635, %v4626
  %v4643 = vadd.s32 %v4638, %v4640
  %vm4644 = vc.u32 %v4638, %v4640
  %v4645 = vadd.s32 %v4641, 1
  %v4646 = vsel %vm4644, %v4645, %v4641
  %v4647 = vadd.s32 %v4642, %v4646
  %v4648 = vadd.s32 %v4647, 536870912
  %v4649 = vshrl.u32 %v4648, 30
  %v4650 = vshll.u32 %v4649, 30
  %v4651 = vsub.s32 %v4647, %v4650
  %vm4652 = vcmp.lt.s32.totalorder %v4651, 0
  %v4653 = vsub.s32 0, %v4651
  %v4654 = vsel %vm4652, %v4653, %v4651
  %v4655 = vclz %v4654
  %v4656 = vsub.s32 %v4655, 2
  %vm4657 = vcmp.gt.s32.totalorder 0, %v4656
  %v4658 = vsel %vm4657, 0, %v4656
  %v4659 = vsub.s32 32, %v4658
  %v4660 = vshll.u32 %v4651, %v4658
  %v4661 = vshrl.u32 %v4643, %v4659
  %v4662 = vor.u32 %v4660, %v4661
  %v4663 = vsub.s32 4294967266, %v4658
  %v4664 = vadd.s32 %v4663, 127
  %v4665 = vshll.u32 %v4664, 23
  %v4666 = vor.u32 4788187, %v4665
  %v4667 = vand.u32 2147483647, %v4666
  %v4669 = vcvt.s32.f32 %v4662
  %v4670 = vmul.f32 %v4669, %v4667
  %v4671 = vxor.u32 %v4670, 2147483648
  %v4672 = vsel %vm4589, %v4671, %v4670
  %v4673 = vsub.s32 4, %v4649
  %v4674 = vsel %vm4589, %v4673, %v4649
  %v4675 = vsel %vm4588, %v153, %v4672
  %v4676 = vsel %vm4588, 0, %v4674
  %v4677 = vcosq.f32.pop %v4675
  %v4678 = vsinq.f32.pop %v4675
  %vm4679 = vweird.f32 %v153
  %v4680 = vand.u32 %v4676, 3
  %vm4681 = vcmp.lt.s32.totalorder %v4680, 2
  %vm4682 = vcmp.eq.s32.totalorder %v4680, 0
  %v4683 = vxor.u32 %v4678, 2147483648
  %v4684 = vsel %vm4682, %v4677, %v4683
  %vm4685 = vcmp.eq.s32.totalorder %v4680, 2
  %v4686 = vxor.u32 %v4677, 2147483648
  %v4687 = vsel %vm4685, %v4686, %v4678
  %v4688 = vsel %vm4681, %v4684, %v4687
  %v4689 = vsel %vm4679, nan, %v4688
  %v4690 = vand.u32 2147483647, %v154
  %vm4691 = vcmp.le.f32.partialorder %v4690, 0.7853982
  %vm4692 = vcmp.lt.s32.totalorder %v154, 0
  %v4693 = vand.u32 %v154, 2139095040
  %v4694 = vshrl.u32 %v4693, 23
  %v4695 = vsub.s32 %v4694, 127
  %v4696 = vand.u32 2147483647, %v154
  %v4697 = vand.u32 %v4696, 8388607
  %v4698 = vor.u32 %v4697, 8388608
  %v4699 = vsub.s32 0, %v4698
  %v4700 = vadd.s32 %v4695, 1
  %vm4701 = vcmp.gt.s32.totalorder %v4700, 0
  %v4702 = vsel %vm4701, %v4700, 0
  %v4703 = vshrl.u32 %v4702, 5
  %v4704 = vand.u32 %v4702, 31
  %v4705 = vsub.s32 32, %v4704
  %v4706 = vshrl.u32 683565275, %v4705
  %v4707 = vshll.u32 683565275, %v4704
  %v4708 = vshrl.u32 2475754826, %v4705
  %v4709 = vor.u32 %v4707, %v4708
  %v4710 = vshll.u32 2475754826, %v4704
  %v4711 = vshrl.u32 2131351028, %v4705
  %v4712 = vor.u32 %v4710, %v4711
  %v4713 = vshll.u32 2131351028, %v4704
  %v4714 = vshrl.u32 2102212464, %v4705
  %v4715 = vor.u32 %v4713, %v4714
  %v4716 = vshll.u32 2102212464, %v4704
  %v4717 = vshrl.u32 920167782, %v4705
  %v4718 = vor.u32 %v4716, %v4717
  %v4719 = vshll.u32 920167782, %v4704
  %v4720 = vshrl.u32 1326507024, %v4705
  %v4721 = vor.u32 %v4719, %v4720
  %vm4722 = vcmp.lt.s32.totalorder %v4703, 1
  %vm4723 = vcmp.lt.s32.totalorder %v4703, 2
  %vm4724 = vcmp.lt.s32.totalorder %v4703, 3
  %vm4725 = vcmp.lt.s32.totalorder %v4703, 4
  %v4726 = vsel %vm4722, %v4706, %v4709
  %v4727 = vsel %vm4725, %v4715, 2102212464
  %v4728 = vsel %vm4724, %v4712, %v4727
  %v4729 = vsel %vm4723, %v4726, %v4728
  %v4730 = vsel %vm4722, %v4709, %v4712
  %v4731 = vsel %vm4725, %v4718, 920167782
  %v4732 = vsel %vm4724, %v4715, %v4731
  %v4733 = vsel %vm4723, %v4730, %v4732
  %v4734 = vsel %vm4722, %v4712, %v4715
  %v4735 = vsel %vm4725, %v4721, 1326507024
  %v4736 = vsel %vm4724, %v4718, %v4735
  %v4737 = vsel %vm4723, %v4734, %v4736
  %v4738 = vshll.u32 %v4698, 8
  %v4739 = vmul.u32.u64.compose %v4738, %v4737
  %v4740 = vextract.low.u32 %v4739
  %v4741 = vextract.high.u32 %v4739
  %v4742 = vmul.u32.u64.compose %v4738, %v4733
  %v4743 = vextract.low.u32 %v4742
  %v4744 = vextract.high.u32 %v4742
  %v4745 = vmul.u32 %v4738, %v4729
  %v4746 = vadd.s32 %v4741, %v4743
  %vm4747 = vc.u32 %v4741, %v4743
  %v4748 = vadd.s32 %v4744, 1
  %v4749 = vsel %vm4747, %v4748, %v4744
  %v4750 = vadd.s32 %v4745, %v4749
  %v4751 = vadd.s32 %v4750, 536870912
  %v4752 = vshrl.u32 %v4751, 30
  %v4753 = vshll.u32 %v4752, 30
  %v4754 = vsub.s32 %v4750, %v4753
  %vm4755 = vcmp.lt.s32.totalorder %v4754, 0
  %v4756 = vsub.s32 0, %v4754
  %v4757 = vsel %vm4755, %v4756, %v4754
  %v4758 = vclz %v4757
  %v4759 = vsub.s32 %v4758, 2
  %vm4760 = vcmp.gt.s32.totalorder 0, %v4759
  %v4761 = vsel %vm4760, 0, %v4759
  %v4762 = vsub.s32 32, %v4761
  %v4763 = vshll.u32 %v4754, %v4761
  %v4764 = vshrl.u32 %v4746, %v4762
  %v4765 = vor.u32 %v4763, %v4764
  %v4766 = vsub.s32 4294967266, %v4761
  %v4767 = vadd.s32 %v4766, 127
  %v4768 = vshll.u32 %v4767, 23
  %v4769 = vor.u32 4788187, %v4768
  %v4770 = vand.u32 2147483647, %v4769
  %v4772 = vcvt.s32.f32 %v4765
  %v4773 = vmul.f32 %v4772, %v4770
  %v4774 = vxor.u32 %v4773, 2147483648
  %v4775 = vsel %vm4692, %v4774, %v4773
  %v4776 = vsub.s32 4, %v4752
  %v4777 = vsel %vm4692, %v4776, %v4752
  %v4778 = vsel %vm4691, %v154, %v4775
  %v4779 = vsel %vm4691, 0, %v4777
  %v4780 = vcosq.f32.pop %v4778
  %v4781 = vsinq.f32.pop %v4778
  %vm4782 = vweird.f32 %v154
  %v4783 = vand.u32 %v4779, 3
  %vm4784 = vcmp.lt.s32.totalorder %v4783, 2
  %vm4785 = vcmp.eq.s32.totalorder %v4783, 0
  %v4786 = vxor.u32 %v4781, 2147483648
  %v4787 = vsel %vm4785, %v4780, %v4786
  %vm4788 = vcmp.eq.s32.totalorder %v4783, 2
  %v4789 = vxor.u32 %v4780, 2147483648
  %v4790 = vsel %vm4788, %v4789, %v4781
  %v4791 = vsel %vm4784, %v4787, %v4790
  %v4792 = vsel %vm4782, nan, %v4791
  %v4793 = vand.u32 2147483647, %v155
  %vm4794 = vcmp.le.f32.partialorder %v4793, 0.7853982
  %vm4795 = vcmp.lt.s32.totalorder %v155, 0
  %v4796 = vand.u32 %v155, 2139095040
  %v4797 = vshrl.u32 %v4796, 23
  %v4798 = vsub.s32 %v4797, 127
  %v4799 = vand.u32 2147483647, %v155
  %v4800 = vand.u32 %v4799, 8388607
  %v4801 = vor.u32 %v4800, 8388608
  %v4802 = vsub.s32 0, %v4801
  %v4803 = vadd.s32 %v4798, 1
  %vm4804 = vcmp.gt.s32.totalorder %v4803, 0
  %v4805 = vsel %vm4804, %v4803, 0
  %v4806 = vshrl.u32 %v4805, 5
  %v4807 = vand.u32 %v4805, 31
  %v4808 = vsub.s32 32, %v4807
  %v4809 = vshrl.u32 683565275, %v4808
  %v4810 = vshll.u32 683565275, %v4807
  %v4811 = vshrl.u32 2475754826, %v4808
  %v4812 = vor.u32 %v4810, %v4811
  %v4813 = vshll.u32 2475754826, %v4807
  %v4814 = vshrl.u32 2131351028, %v4808
  %v4815 = vor.u32 %v4813, %v4814
  %v4816 = vshll.u32 2131351028, %v4807
  %v4817 = vshrl.u32 2102212464, %v4808
  %v4818 = vor.u32 %v4816, %v4817
  %v4819 = vshll.u32 2102212464, %v4807
  %v4820 = vshrl.u32 920167782, %v4808
  %v4821 = vor.u32 %v4819, %v4820
  %v4822 = vshll.u32 920167782, %v4807
  %v4823 = vshrl.u32 1326507024, %v4808
  %v4824 = vor.u32 %v4822, %v4823
  %vm4825 = vcmp.lt.s32.totalorder %v4806, 1
  %vm4826 = vcmp.lt.s32.totalorder %v4806, 2
  %vm4827 = vcmp.lt.s32.totalorder %v4806, 3
  %vm4828 = vcmp.lt.s32.totalorder %v4806, 4
  %v4829 = vsel %vm4825, %v4809, %v4812
  %v4830 = vsel %vm4828, %v4818, 2102212464
  %v4831 = vsel %vm4827, %v4815, %v4830
  %v4832 = vsel %vm4826, %v4829, %v4831
  %v4833 = vsel %vm4825, %v4812, %v4815
  %v4834 = vsel %vm4828, %v4821, 920167782
  %v4835 = vsel %vm4827, %v4818, %v4834
  %v4836 = vsel %vm4826, %v4833, %v4835
  %v4837 = vsel %vm4825, %v4815, %v4818
  %v4838 = vsel %vm4828, %v4824, 1326507024
  %v4839 = vsel %vm4827, %v4821, %v4838
  %v4840 = vsel %vm4826, %v4837, %v4839
  %v4841 = vshll.u32 %v4801, 8
  %v4842 = vmul.u32.u64.compose %v4841, %v4840
  %v4843 = vextract.low.u32 %v4842
  %v4844 = vextract.high.u32 %v4842
  %v4845 = vmul.u32.u64.compose %v4841, %v4836
  %v4846 = vextract.low.u32 %v4845
  %v4847 = vextract.high.u32 %v4845
  %v4848 = vmul.u32 %v4841, %v4832
  %v4849 = vadd.s32 %v4844, %v4846
  %vm4850 = vc.u32 %v4844, %v4846
  %v4851 = vadd.s32 %v4847, 1
  %v4852 = vsel %vm4850, %v4851, %v4847
  %v4853 = vadd.s32 %v4848, %v4852
  %v4854 = vadd.s32 %v4853, 536870912
  %v4855 = vshrl.u32 %v4854, 30
  %v4856 = vshll.u32 %v4855, 30
  %v4857 = vsub.s32 %v4853, %v4856
  %vm4858 = vcmp.lt.s32.totalorder %v4857, 0
  %v4859 = vsub.s32 0, %v4857
  %v4860 = vsel %vm4858, %v4859, %v4857
  %v4861 = vclz %v4860
  %v4862 = vsub.s32 %v4861, 2
  %vm4863 = vcmp.gt.s32.totalorder 0, %v4862
  %v4864 = vsel %vm4863, 0, %v4862
  %v4865 = vsub.s32 32, %v4864
  %v4866 = vshll.u32 %v4857, %v4864
  %v4867 = vshrl.u32 %v4849, %v4865
  %v4868 = vor.u32 %v4866, %v4867
  %v4869 = vsub.s32 4294967266, %v4864
  %v4870 = vadd.s32 %v4869, 127
  %v4871 = vshll.u32 %v4870, 23
  %v4872 = vor.u32 4788187, %v4871
  %v4873 = vand.u32 2147483647, %v4872
  %v4875 = vcvt.s32.f32 %v4868
  %v4876 = vmul.f32 %v4875, %v4873
  %v4877 = vxor.u32 %v4876, 2147483648
  %v4878 = vsel %vm4795, %v4877, %v4876
  %v4879 = vsub.s32 4, %v4855
  %v4880 = vsel %vm4795, %v4879, %v4855
  %v4881 = vsel %vm4794, %v155, %v4878
  %v4882 = vsel %vm4794, 0, %v4880
  %v4883 = vcosq.f32.pop %v4881
  %v4884 = vsinq.f32.pop %v4881
  %vm4885 = vweird.f32 %v155
  %v4886 = vand.u32 %v4882, 3
  %vm4887 = vcmp.lt.s32.totalorder %v4886, 2
  %vm4888 = vcmp.eq.s32.totalorder %v4886, 0
  %v4889 = vxor.u32 %v4884, 2147483648
  %v4890 = vsel %vm4888, %v4883, %v4889
  %vm4891 = vcmp.eq.s32.totalorder %v4886, 2
  %v4892 = vxor.u32 %v4883, 2147483648
  %v4893 = vsel %vm4891, %v4892, %v4884
  %v4894 = vsel %vm4887, %v4890, %v4893
  %v4895 = vsel %vm4885, nan, %v4894
  %v4896 = vand.u32 2147483647, %v156
  %vm4897 = vcmp.le.f32.partialorder %v4896, 0.7853982
  %vm4898 = vcmp.lt.s32.totalorder %v156, 0
  %v4899 = vand.u32 %v156, 2139095040
  %v4900 = vshrl.u32 %v4899, 23
  %v4901 = vsub.s32 %v4900, 127
  %v4902 = vand.u32 2147483647, %v156
  %v4903 = vand.u32 %v4902, 8388607
  %v4904 = vor.u32 %v4903, 8388608
  %v4905 = vsub.s32 0, %v4904
  %v4906 = vadd.s32 %v4901, 1
  %vm4907 = vcmp.gt.s32.totalorder %v4906, 0
  %v4908 = vsel %vm4907, %v4906, 0
  %v4909 = vshrl.u32 %v4908, 5
  %v4910 = vand.u32 %v4908, 31
  %v4911 = vsub.s32 32, %v4910
  %v4912 = vshrl.u32 683565275, %v4911
  %v4913 = vshll.u32 683565275, %v4910
  %v4914 = vshrl.u32 2475754826, %v4911
  %v4915 = vor.u32 %v4913, %v4914
  %v4916 = vshll.u32 2475754826, %v4910
  %v4917 = vshrl.u32 2131351028, %v4911
  %v4918 = vor.u32 %v4916, %v4917
  %v4919 = vshll.u32 2131351028, %v4910
  %v4920 = vshrl.u32 2102212464, %v4911
  %v4921 = vor.u32 %v4919, %v4920
  %v4922 = vshll.u32 2102212464, %v4910
  %v4923 = vshrl.u32 920167782, %v4911
  %v4924 = vor.u32 %v4922, %v4923
  %v4925 = vshll.u32 920167782, %v4910
  %v4926 = vshrl.u32 1326507024, %v4911
  %v4927 = vor.u32 %v4925, %v4926
  %vm4928 = vcmp.lt.s32.totalorder %v4909, 1
  %vm4929 = vcmp.lt.s32.totalorder %v4909, 2
  %vm4930 = vcmp.lt.s32.totalorder %v4909, 3
  %vm4931 = vcmp.lt.s32.totalorder %v4909, 4
  %v4932 = vsel %vm4928, %v4912, %v4915
  %v4933 = vsel %vm4931, %v4921, 2102212464
  %v4934 = vsel %vm4930, %v4918, %v4933
  %v4935 = vsel %vm4929, %v4932, %v4934
  %v4936 = vsel %vm4928, %v4915, %v4918
  %v4937 = vsel %vm4931, %v4924, 920167782
  %v4938 = vsel %vm4930, %v4921, %v4937
  %v4939 = vsel %vm4929, %v4936, %v4938
  %v4940 = vsel %vm4928, %v4918, %v4921
  %v4941 = vsel %vm4931, %v4927, 1326507024
  %v4942 = vsel %vm4930, %v4924, %v4941
  %v4943 = vsel %vm4929, %v4940, %v4942
  %v4944 = vshll.u32 %v4904, 8
  %v4945 = vmul.u32.u64.compose %v4944, %v4943
  %v4946 = vextract.low.u32 %v4945
  %v4947 = vextract.high.u32 %v4945
  %v4948 = vmul.u32.u64.compose %v4944, %v4939
  %v4949 = vextract.low.u32 %v4948
  %v4950 = vextract.high.u32 %v4948
  %v4951 = vmul.u32 %v4944, %v4935
  %v4952 = vadd.s32 %v4947, %v4949
  %vm4953 = vc.u32 %v4947, %v4949
  %v4954 = vadd.s32 %v4950, 1
  %v4955 = vsel %vm4953, %v4954, %v4950
  %v4956 = vadd.s32 %v4951, %v4955
  %v4957 = vadd.s32 %v4956, 536870912
  %v4958 = vshrl.u32 %v4957, 30
  %v4959 = vshll.u32 %v4958, 30
  %v4960 = vsub.s32 %v4956, %v4959
  %vm4961 = vcmp.lt.s32.totalorder %v4960, 0
  %v4962 = vsub.s32 0, %v4960
  %v4963 = vsel %vm4961, %v4962, %v4960
  %v4964 = vclz %v4963
  %v4965 = vsub.s32 %v4964, 2
  %vm4966 = vcmp.gt.s32.totalorder 0, %v4965
  %v4967 = vsel %vm4966, 0, %v4965
  %v4968 = vsub.s32 32, %v4967
  %v4969 = vshll.u32 %v4960, %v4967
  %v4970 = vshrl.u32 %v4952, %v4968
  %v4971 = vor.u32 %v4969, %v4970
  %v4972 = vsub.s32 4294967266, %v4967
  %v4973 = vadd.s32 %v4972, 127
  %v4974 = vshll.u32 %v4973, 23
  %v4975 = vor.u32 4788187, %v4974
  %v4976 = vand.u32 2147483647, %v4975
  %v4978 = vcvt.s32.f32 %v4971
  %v4979 = vmul.f32 %v4978, %v4976
  %v4980 = vxor.u32 %v4979, 2147483648
  %v4981 = vsel %vm4898, %v4980, %v4979
  %v4982 = vsub.s32 4, %v4958
  %v4983 = vsel %vm4898, %v4982, %v4958
  %v4984 = vsel %vm4897, %v156, %v4981
  %v4985 = vsel %vm4897, 0, %v4983
  %v4986 = vcosq.f32.pop %v4984
  %v4987 = vsinq.f32.pop %v4984
  %vm4988 = vweird.f32 %v156
  %v4989 = vand.u32 %v4985, 3
  %vm4990 = vcmp.lt.s32.totalorder %v4989, 2
  %vm4991 = vcmp.eq.s32.totalorder %v4989, 0
  %v4992 = vxor.u32 %v4987, 2147483648
  %v4993 = vsel %vm4991, %v4986, %v4992
  %vm4994 = vcmp.eq.s32.totalorder %v4989, 2
  %v4995 = vxor.u32 %v4986, 2147483648
  %v4996 = vsel %vm4994, %v4995, %v4987
  %v4997 = vsel %vm4990, %v4993, %v4996
  %v4998 = vsel %vm4988, nan, %v4997
  %v4999 = vand.u32 2147483647, %v157
  %vm5000 = vcmp.le.f32.partialorder %v4999, 0.7853982
  %vm5001 = vcmp.lt.s32.totalorder %v157, 0
  %v5002 = vand.u32 %v157, 2139095040
  %v5003 = vshrl.u32 %v5002, 23
  %v5004 = vsub.s32 %v5003, 127
  %v5005 = vand.u32 2147483647, %v157
  %v5006 = vand.u32 %v5005, 8388607
  %v5007 = vor.u32 %v5006, 8388608
  %v5008 = vsub.s32 0, %v5007
  %v5009 = vadd.s32 %v5004, 1
  %vm5010 = vcmp.gt.s32.totalorder %v5009, 0
  %v5011 = vsel %vm5010, %v5009, 0
  %v5012 = vshrl.u32 %v5011, 5
  %v5013 = vand.u32 %v5011, 31
  %v5014 = vsub.s32 32, %v5013
  %v5015 = vshrl.u32 683565275, %v5014
  %v5016 = vshll.u32 683565275, %v5013
  %v5017 = vshrl.u32 2475754826, %v5014
  %v5018 = vor.u32 %v5016, %v5017
  %v5019 = vshll.u32 2475754826, %v5013
  %v5020 = vshrl.u32 2131351028, %v5014
  %v5021 = vor.u32 %v5019, %v5020
  %v5022 = vshll.u32 2131351028, %v5013
  %v5023 = vshrl.u32 2102212464, %v5014
  %v5024 = vor.u32 %v5022, %v5023
  %v5025 = vshll.u32 2102212464, %v5013
  %v5026 = vshrl.u32 920167782, %v5014
  %v5027 = vor.u32 %v5025, %v5026
  %v5028 = vshll.u32 920167782, %v5013
  %v5029 = vshrl.u32 1326507024, %v5014
  %v5030 = vor.u32 %v5028, %v5029
  %vm5031 = vcmp.lt.s32.totalorder %v5012, 1
  %vm5032 = vcmp.lt.s32.totalorder %v5012, 2
  %vm5033 = vcmp.lt.s32.totalorder %v5012, 3
  %vm5034 = vcmp.lt.s32.totalorder %v5012, 4
  %v5035 = vsel %vm5031, %v5015, %v5018
  %v5036 = vsel %vm5034, %v5024, 2102212464
  %v5037 = vsel %vm5033, %v5021, %v5036
  %v5038 = vsel %vm5032, %v5035, %v5037
  %v5039 = vsel %vm5031, %v5018, %v5021
  %v5040 = vsel %vm5034, %v5027, 920167782
  %v5041 = vsel %vm5033, %v5024, %v5040
  %v5042 = vsel %vm5032, %v5039, %v5041
  %v5043 = vsel %vm5031, %v5021, %v5024
  %v5044 = vsel %vm5034, %v5030, 1326507024
  %v5045 = vsel %vm5033, %v5027, %v5044
  %v5046 = vsel %vm5032, %v5043, %v5045
  %v5047 = vshll.u32 %v5007, 8
  %v5048 = vmul.u32.u64.compose %v5047, %v5046
  %v5049 = vextract.low.u32 %v5048
  %v5050 = vextract.high.u32 %v5048
  %v5051 = vmul.u32.u64.compose %v5047, %v5042
  %v5052 = vextract.low.u32 %v5051
  %v5053 = vextract.high.u32 %v5051
  %v5054 = vmul.u32 %v5047, %v5038
  %v5055 = vadd.s32 %v5050, %v5052
  %vm5056 = vc.u32 %v5050, %v5052
  %v5057 = vadd.s32 %v5053, 1
  %v5058 = vsel %vm5056, %v5057, %v5053
  %v5059 = vadd.s32 %v5054, %v5058
  %v5060 = vadd.s32 %v5059, 536870912
  %v5061 = vshrl.u32 %v5060, 30
  %v5062 = vshll.u32 %v5061, 30
  %v5063 = vsub.s32 %v5059, %v5062
  %vm5064 = vcmp.lt.s32.totalorder %v5063, 0
  %v5065 = vsub.s32 0, %v5063
  %v5066 = vsel %vm5064, %v5065, %v5063
  %v5067 = vclz %v5066
  %v5068 = vsub.s32 %v5067, 2
  %vm5069 = vcmp.gt.s32.totalorder 0, %v5068
  %v5070 = vsel %vm5069, 0, %v5068
  %v5071 = vsub.s32 32, %v5070
  %v5072 = vshll.u32 %v5063, %v5070
  %v5073 = vshrl.u32 %v5055, %v5071
  %v5074 = vor.u32 %v5072, %v5073
  %v5075 = vsub.s32 4294967266, %v5070
  %v5076 = vadd.s32 %v5075, 127
  %v5077 = vshll.u32 %v5076, 23
  %v5078 = vor.u32 4788187, %v5077
  %v5079 = vand.u32 2147483647, %v5078
  %v5081 = vcvt.s32.f32 %v5074
  %v5082 = vmul.f32 %v5081, %v5079
  %v5083 = vxor.u32 %v5082, 2147483648
  %v5084 = vsel %vm5001, %v5083, %v5082
  %v5085 = vsub.s32 4, %v5061
  %v5086 = vsel %vm5001, %v5085, %v5061
  %v5087 = vsel %vm5000, %v157, %v5084
  %v5088 = vsel %vm5000, 0, %v5086
  %v5089 = vcosq.f32.pop %v5087
  %v5090 = vsinq.f32.pop %v5087
  %vm5091 = vweird.f32 %v157
  %v5092 = vand.u32 %v5088, 3
  %vm5093 = vcmp.lt.s32.totalorder %v5092, 2
  %vm5094 = vcmp.eq.s32.totalorder %v5092, 0
  %v5095 = vxor.u32 %v5090, 2147483648
  %v5096 = vsel %vm5094, %v5089, %v5095
  %vm5097 = vcmp.eq.s32.totalorder %v5092, 2
  %v5098 = vxor.u32 %v5089, 2147483648
  %v5099 = vsel %vm5097, %v5098, %v5090
  %v5100 = vsel %vm5093, %v5096, %v5099
  %v5101 = vsel %vm5091, nan, %v5100
  %v5102 = vadd.f32 %v260, 1.0
  %v5103 = vadd.f32 %v363, 1.0
  %v5104 = vadd.f32 %v466, 1.0
  %v5105 = vadd.f32 %v569, 1.0
  %v5106 = vadd.f32 %v672, 1.0
  %v5107 = vadd.f32 %v775, 1.0
  %v5108 = vadd.f32 %v878, 1.0
  %v5109 = vadd.f32 %v981, 1.0
  %v5110 = vadd.f32 %v1084, 1.0
  %v5111 = vadd.f32 %v1187, 1.0
  %v5112 = vadd.f32 %v1290, 1.0
  %v5113 = vadd.f32 %v1393, 1.0
  %v5114 = vadd.f32 %v1496, 1.0
  %v5115 = vadd.f32 %v1599, 1.0
  %v5116 = vadd.f32 %v1702, 1.0
  %v5117 = vadd.f32 %v1805, 1.0
  %v5118 = vadd.f32 %v1908, 1.0
  %v5119 = vadd.f32 %v2011, 1.0
  %v5120 = vadd.f32 %v2114, 1.0
  %v5121 = vadd.f32 %v2217, 1.0
  %v5122 = vadd.f32 %v2320, 1.0
  %v5123 = vadd.f32 %v2423, 1.0
  %v5124 = vadd.f32 %v2526, 1.0
  %v5125 = vadd.f32 %v2629, 1.0
  %v5126 = vadd.f32 %v2732, 1.0
  %v5127 = vadd.f32 %v2835, 1.0
  %v5128 = vadd.f32 %v2938, 1.0
  %v5129 = vadd.f32 %v3041, 1.0
  %v5130 = vadd.f32 %v3144, 1.0
  %v5131 = vadd.f32 %v3247, 1.0
  %v5132 = vadd.f32 %v3350, 1.0
  %v5133 = vadd.f32 %v3453, 1.0
  %v5134 = vadd.f32 %v3556, 1.0
  %v5135 = vadd.f32 %v3659, 1.0
  %v5136 = vadd.f32 %v3762, 1.0
  %v5137 = vadd.f32 %v3865, 1.0
  %v5138 = vadd.f32 %v3968, 1.0
  %v5139 = vadd.f32 %v4071, 1.0
  %v5140 = vadd.f32 %v4174, 1.0
  %v5141 = vadd.f32 %v4277, 1.0
  %v5142 = vadd.f32 %v4380, 1.0
  %v5143 = vadd.f32 %v4483, 1.0
  %v5144 = vadd.f32 %v4586, 1.0
  %v5145 = vadd.f32 %v4689, 1.0
  %v5146 = vadd.f32 %v4792, 1.0
  %v5147 = vadd.f32 %v4895, 1.0
  %v5148 = vadd.f32 %v4998, 1.0
  %v5149 = vadd.f32 %v5101, 1.0
  %v5150 = vmul.f32 %v5102, 0.5
  %v5151 = vmul.f32 %v5103, 0.5
  %v5152 = vmul.f32 %v5104, 0.5
  %v5153 = vmul.f32 %v5105, 0.5
  %v5154 = vmul.f32 %v5106, 0.5
  %v5155 = vmul.f32 %v5107, 0.5
  %v5156 = vmul.f32 %v5108, 0.5
  %v5157 = vmul.f32 %v5109, 0.5
  %v5158 = vmul.f32 %v5110, 0.5
  %v5159 = vmul.f32 %v5111, 0.5
  %v5160 = vmul.f32 %v5112, 0.5
  %v5161 = vmul.f32 %v5113, 0.5
  %v5162 = vmul.f32 %v5114, 0.5
  %v5163 = vmul.f32 %v5115, 0.5
  %v5164 = vmul.f32 %v5116, 0.5
  %v5165 = vmul.f32 %v5117, 0.5
  %v5166 = vmul.f32 %v5118, 0.5
  %v5167 = vmul.f32 %v5119, 0.5
  %v5168 = vmul.f32 %v5120, 0.5
  %v5169 = vmul.f32 %v5121, 0.5
  %v5170 = vmul.f32 %v5122, 0.5
  %v5171 = vmul.f32 %v5123, 0.5
  %v5172 = vmul.f32 %v5124, 0.5
  %v5173 = vmul.f32 %v5125, 0.5
  %v5174 = vmul.f32 %v5126, 0.5
  %v5175 = vmul.f32 %v5127, 0.5
  %v5176 = vmul.f32 %v5128, 0.5
  %v5177 = vmul.f32 %v5129, 0.5
  %v5178 = vmul.f32 %v5130, 0.5
  %v5179 = vmul.f32 %v5131, 0.5
  %v5180 = vmul.f32 %v5132, 0.5
  %v5181 = vmul.f32 %v5133, 0.5
  %v5182 = vmul.f32 %v5134, 0.5
  %v5183 = vmul.f32 %v5135, 0.5
  %v5184 = vmul.f32 %v5136, 0.5
  %v5185 = vmul.f32 %v5137, 0.5
  %v5186 = vmul.f32 %v5138, 0.5
  %v5187 = vmul.f32 %v5139, 0.5
  %v5188 = vmul.f32 %v5140, 0.5
  %v5189 = vmul.f32 %v5141, 0.5
  %v5190 = vmul.f32 %v5142, 0.5
  %v5191 = vmul.f32 %v5143, 0.5
  %v5192 = vmul.f32 %v5144, 0.5
  %v5193 = vmul.f32 %v5145, 0.5
  %v5194 = vmul.f32 %v5146, 0.5
  %v5195 = vmul.f32 %v5147, 0.5
  %v5196 = vmul.f32 %v5148, 0.5
  %v5197 = vmul.f32 %v5149, 0.5
  %v5198 = vsel %vm62, %v5150, 0.0
  %v5199 = vsel %vm63, %v5151, 0.0
  %v5200 = vsel %vm64, %v5152, 0.0
  %v5201 = vsel %vm65, %v5153, 0.0
  %v5202 = vsel %vm66, %v5154, 0.0
  %v5203 = vsel %vm67, %v5155, 0.0
  %v5204 = vsel %vm68, %v5156, 0.0
  %v5205 = vsel %vm69, %v5157, 0.0
  %v5206 = vsel %vm70, %v5158, 0.0
  %v5207 = vsel %vm71, %v5159, 0.0
  %v5208 = vsel %vm72, %v5160, 0.0
  %v5209 = vsel %vm73, %v5161, 0.0
  %v5210 = vsel %vm74, %v5162, 0.0
  %v5211 = vsel %vm75, %v5163, 0.0
  %v5212 = vsel %vm76, %v5164, 0.0
  %v5213 = vsel %vm77, %v5165, 0.0
  %v5214 = vsel %vm78, %v5166, 0.0
  %v5215 = vsel %vm79, %v5167, 0.0
  %v5216 = vsel %vm80, %v5168, 0.0
  %v5217 = vsel %vm81, %v5169, 0.0
  %v5218 = vsel %vm82, %v5170, 0.0
  %v5219 = vsel %vm83, %v5171, 0.0
  %v5220 = vsel %vm84, %v5172, 0.0
  %v5221 = vsel %vm85, %v5173, 0.0
  %v5222 = vsel %vm86, %v5174, 0.0
  %v5223 = vsel %vm87, %v5175, 0.0
  %v5224 = vsel %vm88, %v5176, 0.0
  %v5225 = vsel %vm89, %v5177, 0.0
  %v5226 = vsel %vm90, %v5178, 0.0
  %v5227 = vsel %vm91, %v5179, 0.0
  %v5228 = vsel %vm92, %v5180, 0.0
  %v5229 = vsel %vm93, %v5181, 0.0
  %v5230 = vsel %vm94, %v5182, 0.0
  %v5231 = vsel %vm95, %v5183, 0.0
  %v5232 = vsel %vm96, %v5184, 0.0
  %v5233 = vsel %vm97, %v5185, 0.0
  %v5234 = vsel %vm98, %v5186, 0.0
  %v5235 = vsel %vm99, %v5187, 0.0
  %v5236 = vsel %vm100, %v5188, 0.0
  %v5237 = vsel %vm101, %v5189, 0.0
  %v5238 = vsel %vm102, %v5190, 0.0
  %v5239 = vsel %vm103, %v5191, 0.0
  %v5240 = vsel %vm104, %v5192, 0.0
  %v5241 = vsel %vm105, %v5193, 0.0
  %v5242 = vsel %vm106, %v5194, 0.0
  %v5243 = vsel %vm107, %v5195, 0.0
  %v5244 = vsel %vm108, %v5196, 0.0
  %v5245 = vsel %vm109, %v5197, 0.0
  %v5246 = vsub.f32 0.0, %v14
  %v5247 = vsub.f32 0.0, %v15
  %v5248 = vsub.f32 0.0, %v16
  %v5249 = vsub.f32 0.0, %v17
  %v5250 = vsub.f32 0.0, %v18
  %v5251 = vsub.f32 0.0, %v19
  %v5252 = vsub.f32 0.0, %v20
  %v5253 = vsub.f32 0.0, %v21
  %v5254 = vsub.f32 0.0, %v22
  %v5255 = vsub.f32 0.0, %v23
  %v5256 = vsub.f32 0.0, %v24
  %v5257 = vsub.f32 0.0, %v25
  %v5258 = vsub.f32 0.0, %v26
  %v5259 = vsub.f32 0.0, %v27
  %v5260 = vsub.f32 0.0, %v28
  %v5261 = vsub.f32 0.0, %v29
  %v5262 = vsub.f32 0.0, %v30
  %v5263 = vsub.f32 0.0, %v31
  %v5264 = vsub.f32 0.0, %v32
  %v5265 = vsub.f32 0.0, %v33
  %v5266 = vsub.f32 0.0, %v34
  %v5267 = vsub.f32 0.0, %v35
  %v5268 = vsub.f32 0.0, %v36
  %v5269 = vsub.f32 0.0, %v37
  %v5270 = vsub.f32 0.0, %v38
  %v5271 = vsub.f32 0.0, %v39
  %v5272 = vsub.f32 0.0, %v40
  %v5273 = vsub.f32 0.0, %v41
  %v5274 = vsub.f32 0.0, %v42
  %v5275 = vsub.f32 0.0, %v43
  %v5276 = vsub.f32 0.0, %v44
  %v5277 = vsub.f32 0.0, %v45
  %v5278 = vsub.f32 0.0, %v46
  %v5279 = vsub.f32 0.0, %v47
  %v5280 = vsub.f32 0.0, %v48
  %v5281 = vsub.f32 0.0, %v49
  %v5282 = vsub.f32 0.0, %v50
  %v5283 = vsub.f32 0.0, %v51
  %v5284 = vsub.f32 0.0, %v52
  %v5285 = vsub.f32 0.0, %v53
  %v5286 = vsub.f32 0.0, %v54
  %v5287 = vsub.f32 0.0, %v55
  %v5288 = vsub.f32 0.0, %v56
  %v5289 = vsub.f32 0.0, %v57
  %v5290 = vsub.f32 0.0, %v58
  %v5291 = vsub.f32 0.0, %v59
  %v5292 = vsub.f32 0.0, %v60
  %v5293 = vsub.f32 0.0, %v61
  %v5294 = vmul.f32 %v5246, 1.442695
  %v5295 = vpow.pop %v5294
  %v5296 = vmul.f32 %v5247, 1.442695
  %v5297 = vpow.pop %v5296
  %v5298 = vmul.f32 %v5248, 1.442695
  %v5299 = vpow.pop %v5298
  %v5300 = vmul.f32 %v5249, 1.442695
  %v5301 = vpow.pop %v5300
  %v5302 = vmul.f32 %v5250, 1.442695
  %v5303 = vpow.pop %v5302
  %v5304 = vmul.f32 %v5251, 1.442695
  %v5305 = vpow.pop %v5304
  %v5306 = vmul.f32 %v5252, 1.442695
  %v5307 = vpow.pop %v5306
  %v5308 = vmul.f32 %v5253, 1.442695
  %v5309 = vpow.pop %v5308
  %v5310 = vmul.f32 %v5254, 1.442695
  %v5311 = vpow.pop %v5310
  %v5312 = vmul.f32 %v5255, 1.442695
  %v5313 = vpow.pop %v5312
  %v5314 = vmul.f32 %v5256, 1.442695
  %v5315 = vpow.pop %v5314
  %v5316 = vmul.f32 %v5257, 1.442695
  %v5317 = vpow.pop %v5316
  %v5318 = vmul.f32 %v5258, 1.442695
  %v5319 = vpow.pop %v5318
  %v5320 = vmul.f32 %v5259, 1.442695
  %v5321 = vpow.pop %v5320
  %v5322 = vmul.f32 %v5260, 1.442695
  %v5323 = vpow.pop %v5322
  %v5324 = vmul.f32 %v5261, 1.442695
  %v5325 = vpow.pop %v5324
  %v5326 = vmul.f32 %v5262, 1.442695
  %v5327 = vpow.pop %v5326
  %v5328 = vmul.f32 %v5263, 1.442695
  %v5329 = vpow.pop %v5328
  %v5330 = vmul.f32 %v5264, 1.442695
  %v5331 = vpow.pop %v5330
  %v5332 = vmul.f32 %v5265, 1.442695
  %v5333 = vpow.pop %v5332
  %v5334 = vmul.f32 %v5266, 1.442695
  %v5335 = vpow.pop %v5334
  %v5336 = vmul.f32 %v5267, 1.442695
  %v5337 = vpow.pop %v5336
  %v5338 = vmul.f32 %v5268, 1.442695
  %v5339 = vpow.pop %v5338
  %v5340 = vmul.f32 %v5269, 1.442695
  %v5341 = vpow.pop %v5340
  %v5342 = vmul.f32 %v5270, 1.442695
  %v5343 = vpow.pop %v5342
  %v5344 = vmul.f32 %v5271, 1.442695
  %v5345 = vpow.pop %v5344
  %v5346 = vmul.f32 %v5272, 1.442695
  %v5347 = vpow.pop %v5346
  %v5348 = vmul.f32 %v5273, 1.442695
  %v5349 = vpow.pop %v5348
  %v5350 = vmul.f32 %v5274, 1.442695
  %v5351 = vpow.pop %v5350
  %v5352 = vmul.f32 %v5275, 1.442695
  %v5353 = vpow.pop %v5352
  %v5354 = vmul.f32 %v5276, 1.442695
  %v5355 = vpow.pop %v5354
  %v5356 = vmul.f32 %v5277, 1.442695
  %v5357 = vpow.pop %v5356
  %v5358 = vmul.f32 %v5278, 1.442695
  %v5359 = vpow.pop %v5358
  %v5360 = vmul.f32 %v5279, 1.442695
  %v5361 = vpow.pop %v5360
  %v5362 = vmul.f32 %v5280, 1.442695
  %v5363 = vpow.pop %v5362
  %v5364 = vmul.f32 %v5281, 1.442695
  %v5365 = vpow.pop %v5364
  %v5366 = vmul.f32 %v5282, 1.442695
  %v5367 = vpow.pop %v5366
  %v5368 = vmul.f32 %v5283, 1.442695
  %v5369 = vpow.pop %v5368
  %v5370 = vmul.f32 %v5284, 1.442695
  %v5371 = vpow.pop %v5370
  %v5372 = vmul.f32 %v5285, 1.442695
  %v5373 = vpow.pop %v5372
  %v5374 = vmul.f32 %v5286, 1.442695
  %v5375 = vpow.pop %v5374
  %v5376 = vmul.f32 %v5287, 1.442695
  %v5377 = vpow.pop %v5376
  %v5378 = vmul.f32 %v5288, 1.442695
  %v5379 = vpow.pop %v5378
  %v5380 = vmul.f32 %v5289, 1.442695
  %v5381 = vpow.pop %v5380
  %v5382 = vmul.f32 %v5290, 1.442695
  %v5383 = vpow.pop %v5382
  %v5384 = vmul.f32 %v5291, 1.442695
  %v5385 = vpow.pop %v5384
  %v5386 = vmul.f32 %v5292, 1.442695
  %v5387 = vpow.pop %v5386
  %v5388 = vmul.f32 %v5293, 1.442695
  %v5389 = vpow.pop %v5388
  %v5390 = vld [vmem:[%s1] sm:$0x1]
  %v5391 = vld [vmem:[%s2] sm:$0x1]
  %5393 = vset.pattern.permute.xlu0 0
  %5394 = vperm.xlu0 %5393, %v5295
  %v5395 = vpop.permute.xlu0 %5394
  %5398 = vset.pattern.permute.xlu0 0
  %5399 = vperm.xlu0 %5398, %v5297
  %v5400 = vpop.permute.xlu0 %5399
  %5403 = vset.pattern.permute.xlu0 0
  %5404 = vperm.xlu0 %5403, %v5299
  %v5405 = vpop.permute.xlu0 %5404
  %5408 = vset.pattern.permute.xlu0 0
  %5409 = vperm.xlu0 %5408, %v5301
  %v5410 = vpop.permute.xlu0 %5409
  %5413 = vset.pattern.permute.xlu0 0
  %5414 = vperm.xlu0 %5413, %v5303
  %v5415 = vpop.permute.xlu0 %5414
  %5418 = vset.pattern.permute.xlu0 0
  %5419 = vperm.xlu0 %5418, %v5305
  %v5420 = vpop.permute.xlu0 %5419
  %5423 = vset.pattern.permute.xlu0 0
  %5424 = vperm.xlu0 %5423, %v5307
  %v5425 = vpop.permute.xlu0 %5424
  %5428 = vset.pattern.permute.xlu0 0
  %5429 = vperm.xlu0 %5428, %v5309
  %v5430 = vpop.permute.xlu0 %5429
  %5433 = vset.pattern.permute.xlu0 0
  %5434 = vperm.xlu0 %5433, %v5311
  %v5435 = vpop.permute.xlu0 %5434
  %5438 = vset.pattern.permute.xlu0 0
  %5439 = vperm.xlu0 %5438, %v5313
  %v5440 = vpop.permute.xlu0 %5439
  %5443 = vset.pattern.permute.xlu0 0
  %5444 = vperm.xlu0 %5443, %v5315
  %v5445 = vpop.permute.xlu0 %5444
  %5448 = vset.pattern.permute.xlu0 0
  %5449 = vperm.xlu0 %5448, %v5317
  %v5450 = vpop.permute.xlu0 %5449
  %5453 = vset.pattern.permute.xlu0 0
  %5454 = vperm.xlu0 %5453, %v5319
  %v5455 = vpop.permute.xlu0 %5454
  %5458 = vset.pattern.permute.xlu0 0
  %5459 = vperm.xlu0 %5458, %v5321
  %v5460 = vpop.permute.xlu0 %5459
  %5463 = vset.pattern.permute.xlu0 0
  %5464 = vperm.xlu0 %5463, %v5323
  %v5465 = vpop.permute.xlu0 %5464
  %5468 = vset.pattern.permute.xlu0 0
  %5469 = vperm.xlu0 %5468, %v5325
  %v5470 = vpop.permute.xlu0 %5469
  %5473 = vset.pattern.permute.xlu0 0
  %5474 = vperm.xlu0 %5473, %v5327
  %v5475 = vpop.permute.xlu0 %5474
  %5478 = vset.pattern.permute.xlu0 0
  %5479 = vperm.xlu0 %5478, %v5329
  %v5480 = vpop.permute.xlu0 %5479
  %5483 = vset.pattern.permute.xlu0 0
  %5484 = vperm.xlu0 %5483, %v5331
  %v5485 = vpop.permute.xlu0 %5484
  %5488 = vset.pattern.permute.xlu0 0
  %5489 = vperm.xlu0 %5488, %v5333
  %v5490 = vpop.permute.xlu0 %5489
  %5493 = vset.pattern.permute.xlu0 0
  %5494 = vperm.xlu0 %5493, %v5335
  %v5495 = vpop.permute.xlu0 %5494
  %5498 = vset.pattern.permute.xlu0 0
  %5499 = vperm.xlu0 %5498, %v5337
  %v5500 = vpop.permute.xlu0 %5499
  %5503 = vset.pattern.permute.xlu0 0
  %5504 = vperm.xlu0 %5503, %v5339
  %v5505 = vpop.permute.xlu0 %5504
  %5508 = vset.pattern.permute.xlu0 0
  %5509 = vperm.xlu0 %5508, %v5341
  %v5510 = vpop.permute.xlu0 %5509
  %5513 = vset.pattern.permute.xlu0 0
  %5514 = vperm.xlu0 %5513, %v5343
  %v5515 = vpop.permute.xlu0 %5514
  %5518 = vset.pattern.permute.xlu0 0
  %5519 = vperm.xlu0 %5518, %v5345
  %v5520 = vpop.permute.xlu0 %5519
  %5523 = vset.pattern.permute.xlu0 0
  %5524 = vperm.xlu0 %5523, %v5347
  %v5525 = vpop.permute.xlu0 %5524
  %5528 = vset.pattern.permute.xlu0 0
  %5529 = vperm.xlu0 %5528, %v5349
  %v5530 = vpop.permute.xlu0 %5529
  %5533 = vset.pattern.permute.xlu0 0
  %5534 = vperm.xlu0 %5533, %v5351
  %v5535 = vpop.permute.xlu0 %5534
  %5538 = vset.pattern.permute.xlu0 0
  %5539 = vperm.xlu0 %5538, %v5353
  %v5540 = vpop.permute.xlu0 %5539
  %5543 = vset.pattern.permute.xlu0 0
  %5544 = vperm.xlu0 %5543, %v5355
  %v5545 = vpop.permute.xlu0 %5544
  %5548 = vset.pattern.permute.xlu0 0
  %5549 = vperm.xlu0 %5548, %v5357
  %v5550 = vpop.permute.xlu0 %5549
  %5553 = vset.pattern.permute.xlu0 0
  %5554 = vperm.xlu0 %5553, %v5359
  %v5555 = vpop.permute.xlu0 %5554
  %5558 = vset.pattern.permute.xlu0 0
  %5559 = vperm.xlu0 %5558, %v5361
  %v5560 = vpop.permute.xlu0 %5559
  %5563 = vset.pattern.permute.xlu0 0
  %5564 = vperm.xlu0 %5563, %v5363
  %v5565 = vpop.permute.xlu0 %5564
  %5568 = vset.pattern.permute.xlu0 0
  %5569 = vperm.xlu0 %5568, %v5365
  %v5570 = vpop.permute.xlu0 %5569
  %5573 = vset.pattern.permute.xlu0 0
  %5574 = vperm.xlu0 %5573, %v5367
  %v5575 = vpop.permute.xlu0 %5574
  %5578 = vset.pattern.permute.xlu0 0
  %5579 = vperm.xlu0 %5578, %v5369
  %v5580 = vpop.permute.xlu0 %5579
  %5583 = vset.pattern.permute.xlu0 0
  %5584 = vperm.xlu0 %5583, %v5371
  %v5585 = vpop.permute.xlu0 %5584
  %5588 = vset.pattern.permute.xlu0 0
  %5589 = vperm.xlu0 %5588, %v5373
  %v5590 = vpop.permute.xlu0 %5589
  %5593 = vset.pattern.permute.xlu0 0
  %5594 = vperm.xlu0 %5593, %v5375
  %v5595 = vpop.permute.xlu0 %5594
  %5598 = vset.pattern.permute.xlu0 0
  %5599 = vperm.xlu0 %5598, %v5377
  %v5600 = vpop.permute.xlu0 %5599
  %5603 = vset.pattern.permute.xlu0 0
  %5604 = vperm.xlu0 %5603, %v5379
  %v5605 = vpop.permute.xlu0 %5604
  %5608 = vset.pattern.permute.xlu0 0
  %5609 = vperm.xlu0 %5608, %v5381
  %v5610 = vpop.permute.xlu0 %5609
  %5613 = vset.pattern.permute.xlu0 0
  %5614 = vperm.xlu0 %5613, %v5383
  %v5615 = vpop.permute.xlu0 %5614
  %5618 = vset.pattern.permute.xlu0 0
  %5619 = vperm.xlu0 %5618, %v5385
  %v5620 = vpop.permute.xlu0 %5619
  %5623 = vset.pattern.permute.xlu0 0
  %5624 = vperm.xlu0 %5623, %v5387
  %v5625 = vpop.permute.xlu0 %5624
  %5628 = vset.pattern.permute.xlu0 0
  %5629 = vperm.xlu0 %5628, %v5389
  %v5630 = vpop.permute.xlu0 %5629
  %v5633 = vlaneseq
  %v5634 = vshrl.u32 %v5633, 7
  %v5635 = vsub.s32 0, %v5634
  %v5636 = vrot.slane %v5390, %v5635
  %v5638 = vsub.f32 %v5395, %v5636
  %v5639 = vsub.f32 %v5400, %v5636
  %v5640 = vsub.f32 %v5405, %v5636
  %v5641 = vsub.f32 %v5410, %v5636
  %v5642 = vsub.f32 %v5415, %v5636
  %v5643 = vsub.f32 %v5420, %v5636
  %v5644 = vsub.f32 %v5425, %v5636
  %v5645 = vsub.f32 %v5430, %v5636
  %v5646 = vsub.f32 %v5435, %v5636
  %v5647 = vsub.f32 %v5440, %v5636
  %v5648 = vsub.f32 %v5445, %v5636
  %v5649 = vsub.f32 %v5450, %v5636
  %v5650 = vsub.f32 %v5455, %v5636
  %v5651 = vsub.f32 %v5460, %v5636
  %v5652 = vsub.f32 %v5465, %v5636
  %v5653 = vsub.f32 %v5470, %v5636
  %v5654 = vsub.f32 %v5475, %v5636
  %v5655 = vsub.f32 %v5480, %v5636
  %v5656 = vsub.f32 %v5485, %v5636
  %v5657 = vsub.f32 %v5490, %v5636
  %v5658 = vsub.f32 %v5495, %v5636
  %v5659 = vsub.f32 %v5500, %v5636
  %v5660 = vsub.f32 %v5505, %v5636
  %v5661 = vsub.f32 %v5510, %v5636
  %v5662 = vsub.f32 %v5515, %v5636
  %v5663 = vsub.f32 %v5520, %v5636
  %v5664 = vsub.f32 %v5525, %v5636
  %v5665 = vsub.f32 %v5530, %v5636
  %v5666 = vsub.f32 %v5535, %v5636
  %v5667 = vsub.f32 %v5540, %v5636
  %v5668 = vsub.f32 %v5545, %v5636
  %v5669 = vsub.f32 %v5550, %v5636
  %v5670 = vsub.f32 %v5555, %v5636
  %v5671 = vsub.f32 %v5560, %v5636
  %v5672 = vsub.f32 %v5565, %v5636
  %v5673 = vsub.f32 %v5570, %v5636
  %v5674 = vsub.f32 %v5575, %v5636
  %v5675 = vsub.f32 %v5580, %v5636
  %v5676 = vsub.f32 %v5585, %v5636
  %v5677 = vsub.f32 %v5590, %v5636
  %v5678 = vsub.f32 %v5595, %v5636
  %v5679 = vsub.f32 %v5600, %v5636
  %v5680 = vsub.f32 %v5605, %v5636
  %v5681 = vsub.f32 %v5610, %v5636
  %v5682 = vsub.f32 %v5615, %v5636
  %v5683 = vsub.f32 %v5620, %v5636
  %v5684 = vsub.f32 %v5625, %v5636
  %v5685 = vsub.f32 %v5630, %v5636
  %v5686 = vsub.f32 0.0, %v5391
  %v5688 = vlaneseq
  %v5689 = vshrl.u32 %v5688, 7
  %v5690 = vsub.s32 0, %v5689
  %v5691 = vrot.slane %v5686, %v5690
  %v5693 = vmul.f32 %v5691, %v5638
  %v5694 = vmul.f32 %v5691, %v5639
  %v5695 = vmul.f32 %v5691, %v5640
  %v5696 = vmul.f32 %v5691, %v5641
  %v5697 = vmul.f32 %v5691, %v5642
  %v5698 = vmul.f32 %v5691, %v5643
  %v5699 = vmul.f32 %v5691, %v5644
  %v5700 = vmul.f32 %v5691, %v5645
  %v5701 = vmul.f32 %v5691, %v5646
  %v5702 = vmul.f32 %v5691, %v5647
  %v5703 = vmul.f32 %v5691, %v5648
  %v5704 = vmul.f32 %v5691, %v5649
  %v5705 = vmul.f32 %v5691, %v5650
  %v5706 = vmul.f32 %v5691, %v5651
  %v5707 = vmul.f32 %v5691, %v5652
  %v5708 = vmul.f32 %v5691, %v5653
  %v5709 = vmul.f32 %v5691, %v5654
  %v5710 = vmul.f32 %v5691, %v5655
  %v5711 = vmul.f32 %v5691, %v5656
  %v5712 = vmul.f32 %v5691, %v5657
  %v5713 = vmul.f32 %v5691, %v5658
  %v5714 = vmul.f32 %v5691, %v5659
  %v5715 = vmul.f32 %v5691, %v5660
  %v5716 = vmul.f32 %v5691, %v5661
  %v5717 = vmul.f32 %v5691, %v5662
  %v5718 = vmul.f32 %v5691, %v5663
  %v5719 = vmul.f32 %v5691, %v5664
  %v5720 = vmul.f32 %v5691, %v5665
  %v5721 = vmul.f32 %v5691, %v5666
  %v5722 = vmul.f32 %v5691, %v5667
  %v5723 = vmul.f32 %v5691, %v5668
  %v5724 = vmul.f32 %v5691, %v5669
  %v5725 = vmul.f32 %v5691, %v5670
  %v5726 = vmul.f32 %v5691, %v5671
  %v5727 = vmul.f32 %v5691, %v5672
  %v5728 = vmul.f32 %v5691, %v5673
  %v5729 = vmul.f32 %v5691, %v5674
  %v5730 = vmul.f32 %v5691, %v5675
  %v5731 = vmul.f32 %v5691, %v5676
  %v5732 = vmul.f32 %v5691, %v5677
  %v5733 = vmul.f32 %v5691, %v5678
  %v5734 = vmul.f32 %v5691, %v5679
  %v5735 = vmul.f32 %v5691, %v5680
  %v5736 = vmul.f32 %v5691, %v5681
  %v5737 = vmul.f32 %v5691, %v5682
  %v5738 = vmul.f32 %v5691, %v5683
  %v5739 = vmul.f32 %v5691, %v5684
  %v5740 = vmul.f32 %v5691, %v5685
  %v5741 = vmul.f32 %v5693, %v5638
  %v5742 = vmul.f32 %v5694, %v5639
  %v5743 = vmul.f32 %v5695, %v5640
  %v5744 = vmul.f32 %v5696, %v5641
  %v5745 = vmul.f32 %v5697, %v5642
  %v5746 = vmul.f32 %v5698, %v5643
  %v5747 = vmul.f32 %v5699, %v5644
  %v5748 = vmul.f32 %v5700, %v5645
  %v5749 = vmul.f32 %v5701, %v5646
  %v5750 = vmul.f32 %v5702, %v5647
  %v5751 = vmul.f32 %v5703, %v5648
  %v5752 = vmul.f32 %v5704, %v5649
  %v5753 = vmul.f32 %v5705, %v5650
  %v5754 = vmul.f32 %v5706, %v5651
  %v5755 = vmul.f32 %v5707, %v5652
  %v5756 = vmul.f32 %v5708, %v5653
  %v5757 = vmul.f32 %v5709, %v5654
  %v5758 = vmul.f32 %v5710, %v5655
  %v5759 = vmul.f32 %v5711, %v5656
  %v5760 = vmul.f32 %v5712, %v5657
  %v5761 = vmul.f32 %v5713, %v5658
  %v5762 = vmul.f32 %v5714, %v5659
  %v5763 = vmul.f32 %v5715, %v5660
  %v5764 = vmul.f32 %v5716, %v5661
  %v5765 = vmul.f32 %v5717, %v5662
  %v5766 = vmul.f32 %v5718, %v5663
  %v5767 = vmul.f32 %v5719, %v5664
  %v5768 = vmul.f32 %v5720, %v5665
  %v5769 = vmul.f32 %v5721, %v5666
  %v5770 = vmul.f32 %v5722, %v5667
  %v5771 = vmul.f32 %v5723, %v5668
  %v5772 = vmul.f32 %v5724, %v5669
  %v5773 = vmul.f32 %v5725, %v5670
  %v5774 = vmul.f32 %v5726, %v5671
  %v5775 = vmul.f32 %v5727, %v5672
  %v5776 = vmul.f32 %v5728, %v5673
  %v5777 = vmul.f32 %v5729, %v5674
  %v5778 = vmul.f32 %v5730, %v5675
  %v5779 = vmul.f32 %v5731, %v5676
  %v5780 = vmul.f32 %v5732, %v5677
  %v5781 = vmul.f32 %v5733, %v5678
  %v5782 = vmul.f32 %v5734, %v5679
  %v5783 = vmul.f32 %v5735, %v5680
  %v5784 = vmul.f32 %v5736, %v5681
  %v5785 = vmul.f32 %v5737, %v5682
  %v5786 = vmul.f32 %v5738, %v5683
  %v5787 = vmul.f32 %v5739, %v5684
  %v5788 = vmul.f32 %v5740, %v5685
  %v5789 = vmul.f32 %v5741, 1.442695
  %v5790 = vpow.pop %v5789
  %v5791 = vmul.f32 %v5742, 1.442695
  %v5792 = vpow.pop %v5791
  %v5793 = vmul.f32 %v5743, 1.442695
  %v5794 = vpow.pop %v5793
  %v5795 = vmul.f32 %v5744, 1.442695
  %v5796 = vpow.pop %v5795
  %v5797 = vmul.f32 %v5745, 1.442695
  %v5798 = vpow.pop %v5797
  %v5799 = vmul.f32 %v5746, 1.442695
  %v5800 = vpow.pop %v5799
  %v5801 = vmul.f32 %v5747, 1.442695
  %v5802 = vpow.pop %v5801
  %v5803 = vmul.f32 %v5748, 1.442695
  %v5804 = vpow.pop %v5803
  %v5805 = vmul.f32 %v5749, 1.442695
  %v5806 = vpow.pop %v5805
  %v5807 = vmul.f32 %v5750, 1.442695
  %v5808 = vpow.pop %v5807
  %v5809 = vmul.f32 %v5751, 1.442695
  %v5810 = vpow.pop %v5809
  %v5811 = vmul.f32 %v5752, 1.442695
  %v5812 = vpow.pop %v5811
  %v5813 = vmul.f32 %v5753, 1.442695
  %v5814 = vpow.pop %v5813
  %v5815 = vmul.f32 %v5754, 1.442695
  %v5816 = vpow.pop %v5815
  %v5817 = vmul.f32 %v5755, 1.442695
  %v5818 = vpow.pop %v5817
  %v5819 = vmul.f32 %v5756, 1.442695
  %v5820 = vpow.pop %v5819
  %v5821 = vmul.f32 %v5757, 1.442695
  %v5822 = vpow.pop %v5821
  %v5823 = vmul.f32 %v5758, 1.442695
  %v5824 = vpow.pop %v5823
  %v5825 = vmul.f32 %v5759, 1.442695
  %v5826 = vpow.pop %v5825
  %v5827 = vmul.f32 %v5760, 1.442695
  %v5828 = vpow.pop %v5827
  %v5829 = vmul.f32 %v5761, 1.442695
  %v5830 = vpow.pop %v5829
  %v5831 = vmul.f32 %v5762, 1.442695
  %v5832 = vpow.pop %v5831
  %v5833 = vmul.f32 %v5763, 1.442695
  %v5834 = vpow.pop %v5833
  %v5835 = vmul.f32 %v5764, 1.442695
  %v5836 = vpow.pop %v5835
  %v5837 = vmul.f32 %v5765, 1.442695
  %v5838 = vpow.pop %v5837
  %v5839 = vmul.f32 %v5766, 1.442695
  %v5840 = vpow.pop %v5839
  %v5841 = vmul.f32 %v5767, 1.442695
  %v5842 = vpow.pop %v5841
  %v5843 = vmul.f32 %v5768, 1.442695
  %v5844 = vpow.pop %v5843
  %v5845 = vmul.f32 %v5769, 1.442695
  %v5846 = vpow.pop %v5845
  %v5847 = vmul.f32 %v5770, 1.442695
  %v5848 = vpow.pop %v5847
  %v5849 = vmul.f32 %v5771, 1.442695
  %v5850 = vpow.pop %v5849
  %v5851 = vmul.f32 %v5772, 1.442695
  %v5852 = vpow.pop %v5851
  %v5853 = vmul.f32 %v5773, 1.442695
  %v5854 = vpow.pop %v5853
  %v5855 = vmul.f32 %v5774, 1.442695
  %v5856 = vpow.pop %v5855
  %v5857 = vmul.f32 %v5775, 1.442695
  %v5858 = vpow.pop %v5857
  %v5859 = vmul.f32 %v5776, 1.442695
  %v5860 = vpow.pop %v5859
  %v5861 = vmul.f32 %v5777, 1.442695
  %v5862 = vpow.pop %v5861
  %v5863 = vmul.f32 %v5778, 1.442695
  %v5864 = vpow.pop %v5863
  %v5865 = vmul.f32 %v5779, 1.442695
  %v5866 = vpow.pop %v5865
  %v5867 = vmul.f32 %v5780, 1.442695
  %v5868 = vpow.pop %v5867
  %v5869 = vmul.f32 %v5781, 1.442695
  %v5870 = vpow.pop %v5869
  %v5871 = vmul.f32 %v5782, 1.442695
  %v5872 = vpow.pop %v5871
  %v5873 = vmul.f32 %v5783, 1.442695
  %v5874 = vpow.pop %v5873
  %v5875 = vmul.f32 %v5784, 1.442695
  %v5876 = vpow.pop %v5875
  %v5877 = vmul.f32 %v5785, 1.442695
  %v5878 = vpow.pop %v5877
  %v5879 = vmul.f32 %v5786, 1.442695
  %v5880 = vpow.pop %v5879
  %v5881 = vmul.f32 %v5787, 1.442695
  %v5882 = vpow.pop %v5881
  %v5883 = vmul.f32 %v5788, 1.442695
  %v5884 = vpow.pop %v5883
  %5886 = vset.pattern.permute.xlu0 0
  %5887 = vperm.xlu0 %5886, %v5198
  %v5888 = vpop.permute.xlu0 %5887
  %5891 = vset.pattern.permute.xlu0 0
  %5892 = vperm.xlu0 %5891, %v5199
  %v5893 = vpop.permute.xlu0 %5892
  %5896 = vset.pattern.permute.xlu0 0
  %5897 = vperm.xlu0 %5896, %v5200
  %v5898 = vpop.permute.xlu0 %5897
  %5901 = vset.pattern.permute.xlu0 0
  %5902 = vperm.xlu0 %5901, %v5201
  %v5903 = vpop.permute.xlu0 %5902
  %5906 = vset.pattern.permute.xlu0 0
  %5907 = vperm.xlu0 %5906, %v5202
  %v5908 = vpop.permute.xlu0 %5907
  %5911 = vset.pattern.permute.xlu0 0
  %5912 = vperm.xlu0 %5911, %v5203
  %v5913 = vpop.permute.xlu0 %5912
  %5916 = vset.pattern.permute.xlu0 0
  %5917 = vperm.xlu0 %5916, %v5204
  %v5918 = vpop.permute.xlu0 %5917
  %5921 = vset.pattern.permute.xlu0 0
  %5922 = vperm.xlu0 %5921, %v5205
  %v5923 = vpop.permute.xlu0 %5922
  %5926 = vset.pattern.permute.xlu0 0
  %5927 = vperm.xlu0 %5926, %v5206
  %v5928 = vpop.permute.xlu0 %5927
  %5931 = vset.pattern.permute.xlu0 0
  %5932 = vperm.xlu0 %5931, %v5207
  %v5933 = vpop.permute.xlu0 %5932
  %5936 = vset.pattern.permute.xlu0 0
  %5937 = vperm.xlu0 %5936, %v5208
  %v5938 = vpop.permute.xlu0 %5937
  %5941 = vset.pattern.permute.xlu0 0
  %5942 = vperm.xlu0 %5941, %v5209
  %v5943 = vpop.permute.xlu0 %5942
  %5946 = vset.pattern.permute.xlu0 0
  %5947 = vperm.xlu0 %5946, %v5210
  %v5948 = vpop.permute.xlu0 %5947
  %5951 = vset.pattern.permute.xlu0 0
  %5952 = vperm.xlu0 %5951, %v5211
  %v5953 = vpop.permute.xlu0 %5952
  %5956 = vset.pattern.permute.xlu0 0
  %5957 = vperm.xlu0 %5956, %v5212
  %v5958 = vpop.permute.xlu0 %5957
  %5961 = vset.pattern.permute.xlu0 0
  %5962 = vperm.xlu0 %5961, %v5213
  %v5963 = vpop.permute.xlu0 %5962
  %5966 = vset.pattern.permute.xlu0 0
  %5967 = vperm.xlu0 %5966, %v5214
  %v5968 = vpop.permute.xlu0 %5967
  %5971 = vset.pattern.permute.xlu0 0
  %5972 = vperm.xlu0 %5971, %v5215
  %v5973 = vpop.permute.xlu0 %5972
  %5976 = vset.pattern.permute.xlu0 0
  %5977 = vperm.xlu0 %5976, %v5216
  %v5978 = vpop.permute.xlu0 %5977
  %5981 = vset.pattern.permute.xlu0 0
  %5982 = vperm.xlu0 %5981, %v5217
  %v5983 = vpop.permute.xlu0 %5982
  %5986 = vset.pattern.permute.xlu0 0
  %5987 = vperm.xlu0 %5986, %v5218
  %v5988 = vpop.permute.xlu0 %5987
  %5991 = vset.pattern.permute.xlu0 0
  %5992 = vperm.xlu0 %5991, %v5219
  %v5993 = vpop.permute.xlu0 %5992
  %5996 = vset.pattern.permute.xlu0 0
  %5997 = vperm.xlu0 %5996, %v5220
  %v5998 = vpop.permute.xlu0 %5997
  %6001 = vset.pattern.permute.xlu0 0
  %6002 = vperm.xlu0 %6001, %v5221
  %v6003 = vpop.permute.xlu0 %6002
  %6006 = vset.pattern.permute.xlu0 0
  %6007 = vperm.xlu0 %6006, %v5222
  %v6008 = vpop.permute.xlu0 %6007
  %6011 = vset.pattern.permute.xlu0 0
  %6012 = vperm.xlu0 %6011, %v5223
  %v6013 = vpop.permute.xlu0 %6012
  %6016 = vset.pattern.permute.xlu0 0
  %6017 = vperm.xlu0 %6016, %v5224
  %v6018 = vpop.permute.xlu0 %6017
  %6021 = vset.pattern.permute.xlu0 0
  %6022 = vperm.xlu0 %6021, %v5225
  %v6023 = vpop.permute.xlu0 %6022
  %6026 = vset.pattern.permute.xlu0 0
  %6027 = vperm.xlu0 %6026, %v5226
  %v6028 = vpop.permute.xlu0 %6027
  %6031 = vset.pattern.permute.xlu0 0
  %6032 = vperm.xlu0 %6031, %v5227
  %v6033 = vpop.permute.xlu0 %6032
  %6036 = vset.pattern.permute.xlu0 0
  %6037 = vperm.xlu0 %6036, %v5228
  %v6038 = vpop.permute.xlu0 %6037
  %6041 = vset.pattern.permute.xlu0 0
  %6042 = vperm.xlu0 %6041, %v5229
  %v6043 = vpop.permute.xlu0 %6042
  %6046 = vset.pattern.permute.xlu0 0
  %6047 = vperm.xlu0 %6046, %v5230
  %v6048 = vpop.permute.xlu0 %6047
  %6051 = vset.pattern.permute.xlu0 0
  %6052 = vperm.xlu0 %6051, %v5231
  %v6053 = vpop.permute.xlu0 %6052
  %6056 = vset.pattern.permute.xlu0 0
  %6057 = vperm.xlu0 %6056, %v5232
  %v6058 = vpop.permute.xlu0 %6057
  %6061 = vset.pattern.permute.xlu0 0
  %6062 = vperm.xlu0 %6061, %v5233
  %v6063 = vpop.permute.xlu0 %6062
  %6066 = vset.pattern.permute.xlu0 0
  %6067 = vperm.xlu0 %6066, %v5234
  %v6068 = vpop.permute.xlu0 %6067
  %6071 = vset.pattern.permute.xlu0 0
  %6072 = vperm.xlu0 %6071, %v5235
  %v6073 = vpop.permute.xlu0 %6072
  %6076 = vset.pattern.permute.xlu0 0
  %6077 = vperm.xlu0 %6076, %v5236
  %v6078 = vpop.permute.xlu0 %6077
  %6081 = vset.pattern.permute.xlu0 0
  %6082 = vperm.xlu0 %6081, %v5237
  %v6083 = vpop.permute.xlu0 %6082
  %6086 = vset.pattern.permute.xlu0 0
  %6087 = vperm.xlu0 %6086, %v5238
  %v6088 = vpop.permute.xlu0 %6087
  %6091 = vset.pattern.permute.xlu0 0
  %6092 = vperm.xlu0 %6091, %v5239
  %v6093 = vpop.permute.xlu0 %6092
  %6096 = vset.pattern.permute.xlu0 0
  %6097 = vperm.xlu0 %6096, %v5240
  %v6098 = vpop.permute.xlu0 %6097
  %6101 = vset.pattern.permute.xlu0 0
  %6102 = vperm.xlu0 %6101, %v5241
  %v6103 = vpop.permute.xlu0 %6102
  %6106 = vset.pattern.permute.xlu0 0
  %6107 = vperm.xlu0 %6106, %v5242
  %v6108 = vpop.permute.xlu0 %6107
  %6111 = vset.pattern.permute.xlu0 0
  %6112 = vperm.xlu0 %6111, %v5243
  %v6113 = vpop.permute.xlu0 %6112
  %6116 = vset.pattern.permute.xlu0 0
  %6117 = vperm.xlu0 %6116, %v5244
  %v6118 = vpop.permute.xlu0 %6117
  %6121 = vset.pattern.permute.xlu0 0
  %6122 = vperm.xlu0 %6121, %v5245
  %v6123 = vpop.permute.xlu0 %6122
  %v6125 = vmul.f32 %v5888, %v5790
  %v6126 = vmul.f32 %v5893, %v5792
  %v6127 = vmul.f32 %v5898, %v5794
  %v6128 = vmul.f32 %v5903, %v5796
  %v6129 = vmul.f32 %v5908, %v5798
  %v6130 = vmul.f32 %v5913, %v5800
  %v6131 = vmul.f32 %v5918, %v5802
  %v6132 = vmul.f32 %v5923, %v5804
  %v6133 = vmul.f32 %v5928, %v5806
  %v6134 = vmul.f32 %v5933, %v5808
  %v6135 = vmul.f32 %v5938, %v5810
  %v6136 = vmul.f32 %v5943, %v5812
  %v6137 = vmul.f32 %v5948, %v5814
  %v6138 = vmul.f32 %v5953, %v5816
  %v6139 = vmul.f32 %v5958, %v5818
  %v6140 = vmul.f32 %v5963, %v5820
  %v6141 = vmul.f32 %v5968, %v5822
  %v6142 = vmul.f32 %v5973, %v5824
  %v6143 = vmul.f32 %v5978, %v5826
  %v6144 = vmul.f32 %v5983, %v5828
  %v6145 = vmul.f32 %v5988, %v5830
  %v6146 = vmul.f32 %v5993, %v5832
  %v6147 = vmul.f32 %v5998, %v5834
  %v6148 = vmul.f32 %v6003, %v5836
  %v6149 = vmul.f32 %v6008, %v5838
  %v6150 = vmul.f32 %v6013, %v5840
  %v6151 = vmul.f32 %v6018, %v5842
  %v6152 = vmul.f32 %v6023, %v5844
  %v6153 = vmul.f32 %v6028, %v5846
  %v6154 = vmul.f32 %v6033, %v5848
  %v6155 = vmul.f32 %v6038, %v5850
  %v6156 = vmul.f32 %v6043, %v5852
  %v6157 = vmul.f32 %v6048, %v5854
  %v6158 = vmul.f32 %v6053, %v5856
  %v6159 = vmul.f32 %v6058, %v5858
  %v6160 = vmul.f32 %v6063, %v5860
  %v6161 = vmul.f32 %v6068, %v5862
  %v6162 = vmul.f32 %v6073, %v5864
  %v6163 = vmul.f32 %v6078, %v5866
  %v6164 = vmul.f32 %v6083, %v5868
  %v6165 = vmul.f32 %v6088, %v5870
  %v6166 = vmul.f32 %v6093, %v5872
  %v6167 = vmul.f32 %v6098, %v5874
  %v6168 = vmul.f32 %v6103, %v5876
  %v6169 = vmul.f32 %v6108, %v5878
  %v6170 = vmul.f32 %v6113, %v5880
  %v6171 = vmul.f32 %v6118, %v5882
  %v6172 = vmul.f32 %v6123, %v5884
  %vm6173 = vcmask 408576
  %6174 = vst.msk [vmem:[%s3] sm:$0xff] %vm6173, %v6125
  %6175 = vst.msk [vmem:[%s3 + $0x8] sm:$0xff] %vm6173, %v6126
  %6176 = vst.msk [vmem:[%s3 + $0x10] sm:$0xff] %vm6173, %v6127
  %6177 = vst.msk [vmem:[%s3 + $0x18] sm:$0xff] %vm6173, %v6128
  %6178 = vst.msk [vmem:[%s3 + $0x20] sm:$0xff] %vm6173, %v6129
  %6179 = vst.msk [vmem:[%s3 + $0x28] sm:$0xff] %vm6173, %v6130
  %6180 = vst.msk [vmem:[%s3 + $0x30] sm:$0xff] %vm6173, %v6131
  %6181 = vst.msk [vmem:[%s3 + $0x38] sm:$0xff] %vm6173, %v6132
  %6182 = vst.msk [vmem:[%s3 + $0x40] sm:$0xff] %vm6173, %v6133
  %6183 = vst.msk [vmem:[%s3 + $0x48] sm:$0xff] %vm6173, %v6134
  %6184 = vst.msk [vmem:[%s3 + $0x50] sm:$0xff] %vm6173, %v6135
  %6185 = vst.msk [vmem:[%s3 + $0x58] sm:$0xff] %vm6173, %v6136
  %6186 = vst.msk [vmem:[%s3 + $0x60] sm:$0xff] %vm6173, %v6137
  %6187 = vst.msk [vmem:[%s3 + $0x68] sm:$0xff] %vm6173, %v6138
  %6188 = vst.msk [vmem:[%s3 + $0x70] sm:$0xff] %vm6173, %v6139
  %6189 = vst.msk [vmem:[%s3 + $0x78] sm:$0xff] %vm6173, %v6140
  %6190 = vst.msk [vmem:[%s3 + $0x80] sm:$0xff] %vm6173, %v6141
  %6191 = vst.msk [vmem:[%s3 + $0x88] sm:$0xff] %vm6173, %v6142
  %6192 = vst.msk [vmem:[%s3 + $0x90] sm:$0xff] %vm6173, %v6143
  %6193 = vst.msk [vmem:[%s3 + $0x98] sm:$0xff] %vm6173, %v6144
  %6194 = vst.msk [vmem:[%s3 + $0xa0] sm:$0xff] %vm6173, %v6145
  %6195 = vst.msk [vmem:[%s3 + $0xa8] sm:$0xff] %vm6173, %v6146
  %6196 = vst.msk [vmem:[%s3 + $0xb0] sm:$0xff] %vm6173, %v6147
  %6197 = vst.msk [vmem:[%s3 + $0xb8] sm:$0xff] %vm6173, %v6148
  %6198 = vst.msk [vmem:[%s3 + $0xc0] sm:$0xff] %vm6173, %v6149
  %6199 = vst.msk [vmem:[%s3 + $0xc8] sm:$0xff] %vm6173, %v6150
  %6200 = vst.msk [vmem:[%s3 + $0xd0] sm:$0xff] %vm6173, %v6151
  %6201 = vst.msk [vmem:[%s3 + $0xd8] sm:$0xff] %vm6173, %v6152
  %6202 = vst.msk [vmem:[%s3 + $0xe0] sm:$0xff] %vm6173, %v6153
  %6203 = vst.msk [vmem:[%s3 + $0xe8] sm:$0xff] %vm6173, %v6154
  %6204 = vst.msk [vmem:[%s3 + $0xf0] sm:$0xff] %vm6173, %v6155
  %6205 = vst.msk [vmem:[%s3 + $0xf8] sm:$0xff] %vm6173, %v6156
  %6206 = vst.msk [vmem:[%s3 + $0x100] sm:$0xff] %vm6173, %v6157
  %6207 = vst.msk [vmem:[%s3 + $0x108] sm:$0xff] %vm6173, %v6158
  %6208 = vst.msk [vmem:[%s3 + $0x110] sm:$0xff] %vm6173, %v6159
  %6209 = vst.msk [vmem:[%s3 + $0x118] sm:$0xff] %vm6173, %v6160
  %6210 = vst.msk [vmem:[%s3 + $0x120] sm:$0xff] %vm6173, %v6161
  %6211 = vst.msk [vmem:[%s3 + $0x128] sm:$0xff] %vm6173, %v6162
  %6212 = vst.msk [vmem:[%s3 + $0x130] sm:$0xff] %vm6173, %v6163
  %6213 = vst.msk [vmem:[%s3 + $0x138] sm:$0xff] %vm6173, %v6164
  %6214 = vst.msk [vmem:[%s3 + $0x140] sm:$0xff] %vm6173, %v6165
  %6215 = vst.msk [vmem:[%s3 + $0x148] sm:$0xff] %vm6173, %v6166
  %6216 = vst.msk [vmem:[%s3 + $0x150] sm:$0xff] %vm6173, %v6167
  %6217 = vst.msk [vmem:[%s3 + $0x158] sm:$0xff] %vm6173, %v6168
  %6218 = vst.msk [vmem:[%s3 + $0x160] sm:$0xff] %vm6173, %v6169
  %6219 = vst.msk [vmem:[%s3 + $0x168] sm:$0xff] %vm6173, %v6170
  %6220 = vst.msk [vmem:[%s3 + $0x170] sm:$0xff] %vm6173, %v6171
  %6221 = vst.msk [vmem:[%s3 + $0x178] sm:$0xff] %vm6173, %v6172
  // Predicated region
  $region14: #{tpu_custom_call.1} parent=0 // pred_check
    _
  $region15: #{tpu_custom_call.1} parent=0 // pred_check_branch
    %6223 = sbr.rel (0) target = $region17
  $region16: #{tpu_custom_call.1} parent=0 // pred_region
    _
  $region17: #{tpu_custom_call.1} parent=0 // pred_fallthru
    _
  // Predicated region
  $region18: #{tpu_custom_call.1} parent=0 // pred_check
    _
  $region19: #{tpu_custom_call.1} parent=0 // pred_check_branch
    %6225 = sbr.rel (0) target = $region21
  $region20: #{tpu_custom_call.1} parent=0 // pred_region
    _
  $region21: #{tpu_custom_call.1} parent=0 // pred_fallthru
    _

</llo_original>
